<compile_context>
chip_gen: v7x
topology: tpu7x:2x2x1
jax: 0.10.0
libtpu: 0.0.40
codegen_flags: <defaults>
</compile_context>

<pallas_src>
import functools

import jax
import jax.numpy as jnp
from jax import lax
from jax.experimental import pallas as pl
from jax.experimental.pallas import tpu as pltpu


# ----------------------------------------------------------------------------
# Wrapper-side weight preprocessing (pure JAX; depends on weights/shapes only)
# ----------------------------------------------------------------------------
def _conv_kmat(w_hwio, W):
    """(K,K,Cin,Cout) HWIO conv weight -> (K*W*Cin, W*Cout) K-stacked matrix.

    Row index = ky*(W*Cin) + w_in*Cin + ci ; col index = w_out*Cout + co ;
    value = w[ky, w_in - w_out + K//2, ci, co] (zero outside the kernel ==
    SAME zero padding in w).  Used with an LHS that stacks the ky = 0..K-1
    shifted row-windows along the lane axis.
    """
    K, _, Cin, Cout = w_hwio.shape
    P = K // 2
    win = jnp.arange(W)[:, None]                         # w_in
    wout = jnp.arange(W)[None, :]                        # w_out
    kx = win - wout + P                                  # (W_in, W_out)
    valid = (kx >= 0) & (kx < K)
    kxc = jnp.clip(kx, 0, K - 1)
    g = w_hwio[:, kxc, :, :]                             # (K, Win, Wout, Cin, Cout)
    g = jnp.where(valid[None, :, :, None, None], g, 0.0)
    g = jnp.transpose(g, (0, 1, 3, 2, 4))                # (K, Win, Cin, Wout, Cout)
    return g.reshape(K * W * Cin, W * Cout)


def _sab_kmat(w_sab, W, C):
    """SAB 5x5 conv (inputs = [channel-max ; channel-mean]) -> (10*L, L).

    First 5*L rows consume the K-stacked activation slab windows (mean path,
    the /C implements the channel mean); last 5*L rows consume the K-stacked
    channel-max slab windows (every ci lane of a pixel holds the same max, so
    /C makes the sum over ci equal one copy).  Output value is broadcast over
    the co lanes of each output pixel, ready for the per-lane gate.
    """
    K = w_sab.shape[0]
    P = K // 2
    L = W * C
    win = jnp.arange(W)[:, None]
    wout = jnp.arange(W)[None, :]
    kx = win - wout + P
    valid = (kx >= 0) & (kx < K)
    kxc = jnp.clip(kx, 0, K - 1)

    def spatial(wk):                                     # (K,K) -> (K, Win, Wout)
        return jnp.where(valid[None], wk[:, kxc], 0.0)

    def expand(g):                                       # rows (ky,w_in,ci), cols (w_out,co)
        e = jnp.broadcast_to(g[:, :, None, :, None], (K, W, C, W, C))
        return e.reshape(K * L, L)

    g_max = spatial(w_sab[:, :, 0, 0]) / C               # ChannelPool: ch0 = max
    g_mean = spatial(w_sab[:, :, 1, 0]) / C              #              ch1 = mean
    return jnp.concatenate([expand(g_mean), expand(g_max)], axis=0)   # (10L, L)


def _rot_mats(W, C):
    """(n_rot, L, L) within-pixel cyclic channel-rotation permutation matrices.

    m <- max(m, m @ Q_s) for s = 1,2,4,... gives, in log2(C) steps, the
    channel max of each pixel broadcast across that pixel's C lanes, while
    staying fully lane-dense (rotation wraps within the same pixel).
    """
    L = W * C
    lane = jnp.arange(L)
    pix = lane // C
    ch = lane % C
    shifts = []
    s = 1
    while s < C:
        shifts.append(s)
        s <<= 1
    if not shifts:
        shifts = [0]                                     # C == 1: identity
    mats = []
    for s in shifts:
        dst = pix * C + (ch + s) % C
        mats.append((dst[:, None] == lane[None, :]).astype(jnp.float32))
    return jnp.stack(mats)


# ----------------------------------------------------------------------------
# Fused RAB kernel (NB images per grid step, activations resident in VMEM)
# ----------------------------------------------------------------------------
def _rab_kernel(x_ref, cm_ref, cb_ref, sab_ref, q_ref, mask_ref, o_ref,
                *, NB, H, W, C, S, mm_dtype):
    f32 = jnp.float32
    L = W * C
    R = NB * S                    # stacked padded slab rows
    PAD = (S - H) // 2            # = 2 (covers the 5x5 SAB halo)
    Rout = R - 2 * PAD

    mask = mask_ref[...]          # (R, L): 1 on image rows, 0 on halo rows
    zpad = jnp.zeros((PAD, L), f32)

    # Build the zero-halo stacked activation slab: [pad2, img0, pad2, pad2, img1, pad2, ...]
    pieces = []
    for i in range(NB):
        pieces += [zpad, x_ref[i].astype(f32), zpad]
    p0 = jnp.concatenate(pieces, axis=0)                              # (R, L)

    def stack_windows(p, k):
        # padded slab (R, L) -> (Rout, k*L); chunk d holds rows p_center + d - k//2.
        off = PAD - k // 2
        return jnp.concatenate(
            [p[d + off: Rout + d + off, :] for d in range(k)], axis=1)

    def conv3x3(p, layer):
        # SAME 3x3 conv + bias as ONE matmul with K = 3*L, re-embedded into
        # the padded layout with halo rows forced back to zero.
        lhs = stack_windows(p, 3).astype(mm_dtype)                    # (Rout, 3L)
        y = jnp.dot(lhs, cm_ref[layer], preferred_element_type=f32)   # (Rout, L)
        y = y + cb_ref[layer]                                         # (1, L) bias
        return jnp.concatenate([zpad, y, zpad], axis=0) * mask        # (R, L)

    def res_block(p):                                                 # p + res(p)
        h = jnp.maximum(conv3x3(p, 0), 0.0)                           # conv1 + ReLU
        return p + conv3x3(h, 1)                                      # + conv2

    x1 = res_block(p0)
    x2 = res_block(x1)
    x3 = res_block(x2)
    x3_1 = x1 + x3                                                    # glue add
    x4 = res_block(x3_1)
    x4_1 = p0 + x4                                                    # glue add

    # ---- SAB --------------------------------------------------------------
    # Channel max per pixel, broadcast over that pixel's C lanes:
    # log2(C) within-pixel cyclic-rotation permutation matmuls + max.
    # (Zero halo rows stay zero: permuting zeros and max(0,0) keep them 0.)
    mx = x4_1
    for k in range(q_ref.shape[0]):
        rot = jnp.dot(mx.astype(mm_dtype), q_ref[k], preferred_element_type=f32)
        mx = jnp.maximum(mx, rot)

    # 5x5 spatial conv over [max ; mean] pooled maps as ONE matmul (K = 10*L):
    # mean path reads the activation slab directly, max path reads mx.
    lhs = jnp.concatenate(
        [stack_windows(x4_1, 5), stack_windows(mx, 5)], axis=1).astype(mm_dtype)
    s = jnp.dot(lhs, sab_ref[...], preferred_element_type=f32)        # (Rout, L)

    # SAB.spatial is Basic(2,1,5): conv -> ReLU, then SAB applies sigmoid.
    scale = jax.nn.sigmoid(jnp.maximum(s, 0.0))

    x_o = p0[PAD:R - PAD, :]                                          # aligned with s
    x41_o = x4_1[PAD:R - PAD, :]
    out = x_o + x41_o * scale                                         # x + x5

    for i in range(NB):
        o_ref[i, :, :] = out[i * S: i * S + H, :].astype(o_ref.dtype)


# ----------------------------------------------------------------------------
# RAB forward (single pallas_call)
# ----------------------------------------------------------------------------
def rab_forward_pallas(x, w1, b1, w2, b2, w_sab, *,
                       matmul_dtype=jnp.float32, images_per_step=None):
    """x: (N,H,W,C) NHWC; w1/w2: (3,3,C,C) HWIO; b1/b2: (C,); w_sab: (5,5,2,1)."""
    N, H, W, C = x.shape
    L = W * C
    PAD = 2                       # halo rows per image side (covers 3x3 and 5x5)
    S = H + 2 * PAD

    # Images per grid step: largest divisor of N keeping the matmul M <= 256.
    if images_per_step is None:
        NB = 1
        for d in range(1, N + 1):
            if N % d == 0 and d * S <= 256:
                NB = d
    else:
        NB = images_per_step
    assert N % NB == 0
    G = N // NB
    R = NB * S
    Rout = R - 2 * PAD

    # Folded weight matrices (cast to the MXU input dtype); biases stay f32.
    cm = jnp.stack([_conv_kmat(w1, W), _conv_kmat(w2, W)]).astype(matmul_dtype)   # (2,3L,L)
    cb = jnp.stack([jnp.tile(b1, W), jnp.tile(b2, W)])[:, None, :].astype(jnp.float32)  # (2,1,L)
    sab = _sab_kmat(w_sab, W, C).astype(matmul_dtype)                             # (10L, L)
    qm = _rot_mats(W, C).astype(matmul_dtype)                                     # (n_rot,L,L)

    # Halo-row mask for the stacked padded slab.
    r = jnp.arange(R) % S
    maskcol = ((r >= PAD) & (r < PAD + H)).astype(jnp.float32)
    mask = jnp.tile(maskcol[:, None], (1, L))                                     # (R, L)

    x_slab = x.reshape(N, H, L)   # row-major identical layout: free plumbing

    n_rot = qm.shape[0]
    flops_per_step = (8 * 2 * Rout * (3 * L) * L          # 8 res-block convs
                      + n_rot * 2 * R * L * L             # channel-max rotations
                      + 2 * Rout * (10 * L) * L)          # SAB 5x5 conv
    cost = pl.CostEstimate(
        flops=int(G * flops_per_step),
        transcendentals=int(G * Rout * L),
        bytes_accessed=int(2 * x_slab.size * x_slab.dtype.itemsize
                           + cm.size * cm.dtype.itemsize + cb.size * 4
                           + sab.size * sab.dtype.itemsize
                           + qm.size * qm.dtype.itemsize + mask.size * 4),
    )

    kern = functools.partial(_rab_kernel, NB=NB, H=H, W=W, C=C, S=S,
                             mm_dtype=matmul_dtype)

    # TODO(synk): for N == 1 on v7x, add a second "parallel" grid axis that
    # splits H into halo-overlapping tiles so both TensorCores are used.
    out_slab = pl.pallas_call(
        kern,
        out_shape=jax.ShapeDtypeStruct((N, H, L), x.dtype),
        grid=(G,),
        in_specs=[
            pl.BlockSpec((NB, H, L), lambda n: (n, 0, 0)),       # input slab
            pl.BlockSpec((2, 3 * L, L), lambda n: (0, 0, 0)),    # conv K-matrices
            pl.BlockSpec((2, 1, L), lambda n: (0, 0, 0)),        # conv biases
            pl.BlockSpec((10 * L, L), lambda n: (0, 0)),         # SAB fold matrix
            pl.BlockSpec((n_rot, L, L), lambda n: (0, 0, 0)),    # channel rotations
            pl.BlockSpec((R, L), lambda n: (0, 0)),              # halo-row mask
        ],
        out_specs=pl.BlockSpec((NB, H, L), lambda n: (n, 0, 0)),
        compiler_params=pltpu.CompilerParams(
            dimension_semantics=("parallel",)),
        cost_estimate=cost,
    )(x_slab, cm, cb, sab, qm, mask)
    return out_slab.reshape(N, H, W, C)


# ----------------------------------------------------------------------------
# Pure-JAX reference (mirrors the PyTorch module, NHWC, full f32 precision)
# ----------------------------------------------------------------------------
def _conv_ref(x, w, b=None):
    y = lax.conv_general_dilated(
        x, w, (1, 1), "SAME", dimension_numbers=("NHWC", "HWIO", "NHWC"),
        precision=lax.Precision.HIGHEST)
    if b is not None:
        y = y + b[None, None, None, :]
    return y


def rab_forward_ref(x, w1, b1, w2, b2, w_sab):
    def res(inp):
        h = jnp.maximum(_conv_ref(inp, w1, b1), 0.0)
        return _conv_ref(h, w2, b2)

    x1 = x + res(x)
    x2 = x1 + res(x1)
    x3 = x2 + res(x2)
    x3_1 = x1 + x3
    x4 = x3_1 + res(x3_1)
    x4_1 = x + x4
    pooled = jnp.concatenate(
        [jnp.max(x4_1, axis=-1, keepdims=True),
         jnp.mean(x4_1, axis=-1, keepdims=True)], axis=-1)
    s = jnp.maximum(_conv_ref(pooled, w_sab), 0.0)       # Basic = conv -> ReLU
    scale = jax.nn.sigmoid(s)
    x5 = x4_1 * scale
    return x + x5


# ----------------------------------------------------------------------------
if __name__ == "__main__":
    N, C, H, W = 2, 8, 16, 16    # RAB needs in==out channels; W*C = 128 (lane-dense)

    key = jax.random.PRNGKey(0)
    k_x, k_w1, k_b1, k_w2, k_b2, k_ws = jax.random.split(key, 6)

    w1 = 0.05 * jax.random.normal(k_w1, (3, 3, C, C), jnp.float32)
    b1 = 0.05 * jax.random.normal(k_b1, (C,), jnp.float32)
    w2 = 0.05 * jax.random.normal(k_w2, (3, 3, C, C), jnp.float32)
    b2 = 0.05 * jax.random.normal(k_b2, (C,), jnp.float32)
    w_sab = 0.10 * jax.random.normal(k_ws, (5, 5, 2, 1), jnp.float32)  # SAB, no bias

    # module input is NCHW; the kernel runs on NHWC slabs
    x_nchw = jax.random.normal(k_x, (N, C, H, W), jnp.float32)
    x = jnp.transpose(x_nchw, (0, 2, 3, 1))  # NHWC

    ref = rab_forward_ref(x, w1, b1, w2, b2, w_sab)

    # f32 MXU-input path (reference-precision check)
    run32 = jax.jit(functools.partial(rab_forward_pallas, matmul_dtype=jnp.float32))
    out32 = jax.block_until_ready(run32(x, w1, b1, w2, b2, w_sab))
    assert out32.shape == (N, H, W, C)
    err32 = float(jnp.max(jnp.abs(out32 - ref)))
    assert jnp.allclose(out32, ref, rtol=3e-2, atol=3e-2), err32

    # bf16 MXU-input path (perf path on v5e/v6e/v7x; bf16-level tolerance)
    run16 = jax.jit(functools.partial(rab_forward_pallas, matmul_dtype=jnp.bfloat16))
    out16 = jax.block_until_ready(run16(x, w1, b1, w2, b2, w_sab))
    err16 = float(jnp.max(jnp.abs(out16 - ref)))
    assert jnp.allclose(out16, ref, rtol=1e-1, atol=1e-1), err16

    print("KERNEL_OK")
</pallas_src>

<mosaic_0001>
module attributes {stable_mosaic.version = 11 : i64} {
  func.func @_rab_kernel(%arg0: i32, %arg1: memref<2x16x128xf32, #tpu.memory_space<vmem>>, %arg2: memref<2x384x128xf32, #tpu.memory_space<vmem>>, %arg3: memref<2x1x128xf32, #tpu.memory_space<vmem>>, %arg4: memref<1280x128xf32, #tpu.memory_space<vmem>>, %arg5: memref<3x128x128xf32, #tpu.memory_space<vmem>>, %arg6: memref<40x128xf32, #tpu.memory_space<vmem>>, %arg7: memref<2x16x128xf32, #tpu.memory_space<vmem>>) attributes {dimension_semantics = [#tpu.dimension_semantics<parallel>], iteration_bounds = array<i64: 1>, scalar_prefetch = 0 : i64, scratch_operands = 0 : i64, tpu.core_type = #tpu.core_type<tc>, window_params = [{transform_indices = @transform_0, window_bounds = array<i64: 2, 16, 128>}, {pipeline_mode = #tpu.pipeline_mode<synchronous>, transform_indices = @transform_1, window_bounds = array<i64: 2, 384, 128>}, {pipeline_mode = #tpu.pipeline_mode<synchronous>, transform_indices = @transform_2, window_bounds = array<i64: 2, 1, 128>}, {pipeline_mode = #tpu.pipeline_mode<synchronous>, transform_indices = @transform_3, window_bounds = array<i64: 1280, 128>}, {pipeline_mode = #tpu.pipeline_mode<synchronous>, transform_indices = @transform_4, window_bounds = array<i64: 3, 128, 128>}, {pipeline_mode = #tpu.pipeline_mode<synchronous>, transform_indices = @transform_5, window_bounds = array<i64: 40, 128>}, {transform_indices = @transform_6, window_bounds = array<i64: 2, 16, 128>}]} {
    %c0 = arith.constant 0 : index
    %c0_0 = arith.constant 0 : index
    %0 = vector.load %arg6[%c0, %c0_0] : memref<40x128xf32, #tpu.memory_space<vmem>>, vector<40x128xf32>
    %cst = arith.constant 0.000000e+00 : f32
    %1 = vector.broadcast %cst : f32 to vector<2x128xf32>
    %c0_1 = arith.constant 0 : index
    %c0_2 = arith.constant 0 : index
    %c0_3 = arith.constant 0 : index
    %2 = vector.load %arg1[%c0_1, %c0_2, %c0_3] : memref<2x16x128xf32, #tpu.memory_space<vmem>>, vector<1x16x128xf32>
    %3 = vector.shape_cast %2 : vector<1x16x128xf32> to vector<16x128xf32>
    %c1 = arith.constant 1 : index
    %c0_4 = arith.constant 0 : index
    %c0_5 = arith.constant 0 : index
    %4 = vector.load %arg1[%c1, %c0_4, %c0_5] : memref<2x16x128xf32, #tpu.memory_space<vmem>>, vector<1x16x128xf32>
    %5 = vector.shape_cast %4 : vector<1x16x128xf32> to vector<16x128xf32>
    %6 = tpu.concatenate %1, %3, %1, %1, %5, %1 in 0 : vector<2x128xf32>, vector<16x128xf32>, vector<2x128xf32>, vector<2x128xf32>, vector<16x128xf32>, vector<2x128xf32> -> vector<40x128xf32>
    %7 = vector.extract_strided_slice %6 {offsets = [1, 0], sizes = [36, 128], strides = [1, 1]} : vector<40x128xf32> to vector<36x128xf32>
    %8 = vector.extract_strided_slice %6 {offsets = [2, 0], sizes = [36, 128], strides = [1, 1]} : vector<40x128xf32> to vector<36x128xf32>
    %9 = vector.extract_strided_slice %6 {offsets = [3, 0], sizes = [36, 128], strides = [1, 1]} : vector<40x128xf32> to vector<36x128xf32>
    %10 = tpu.concatenate %7, %8, %9 in 1 : vector<36x128xf32>, vector<36x128xf32>, vector<36x128xf32> -> vector<36x384xf32>
    %c0_6 = arith.constant 0 : index
    %c0_7 = arith.constant 0 : index
    %c0_8 = arith.constant 0 : index
    %11 = vector.load %arg2[%c0_6, %c0_7, %c0_8] : memref<2x384x128xf32, #tpu.memory_space<vmem>>, vector<1x384x128xf32>
    %12 = vector.shape_cast %11 : vector<1x384x128xf32> to vector<384x128xf32>
    %cst_9 = arith.constant dense<0.000000e+00> : vector<36x128xf32>
    %13 = tpu.matmul %10, %12, %cst_9 {dimension_numbers = #tpu.dot_dimension_numbers<[1], [0], [0], [1], [0, 0, 1, 1], [], []>} : vector<36x384xf32>, vector<384x128xf32>, vector<36x128xf32> -> vector<36x128xf32>
    %c0_10 = arith.constant 0 : index
    %c0_11 = arith.constant 0 : index
    %c0_12 = arith.constant 0 : index
    %14 = vector.load %arg3[%c0_10, %c0_11, %c0_12] : memref<2x1x128xf32, #tpu.memory_space<vmem>>, vector<1x1x128xf32>
    %15 = vector.shape_cast %14 : vector<1x1x128xf32> to vector<1x128xf32>
    %16 = vector.broadcast %15 : vector<1x128xf32> to vector<36x128xf32>
    %17 = arith.addf %13, %16 : vector<36x128xf32>
    %18 = tpu.concatenate %1, %17, %1 in 0 : vector<2x128xf32>, vector<36x128xf32>, vector<2x128xf32> -> vector<40x128xf32>
    %19 = arith.mulf %18, %0 : vector<40x128xf32>
    %cst_13 = arith.constant 0.000000e+00 : f32
    %20 = vector.broadcast %cst_13 : f32 to vector<40x128xf32>
    %21 = arith.maximumf %19, %20 : vector<40x128xf32>
    %22 = vector.extract_strided_slice %21 {offsets = [1, 0], sizes = [36, 128], strides = [1, 1]} : vector<40x128xf32> to vector<36x128xf32>
    %23 = vector.extract_strided_slice %21 {offsets = [2, 0], sizes = [36, 128], strides = [1, 1]} : vector<40x128xf32> to vector<36x128xf32>
    %24 = vector.extract_strided_slice %21 {offsets = [3, 0], sizes = [36, 128], strides = [1, 1]} : vector<40x128xf32> to vector<36x128xf32>
    %25 = tpu.concatenate %22, %23, %24 in 1 : vector<36x128xf32>, vector<36x128xf32>, vector<36x128xf32> -> vector<36x384xf32>
    %c1_14 = arith.constant 1 : index
    %c0_15 = arith.constant 0 : index
    %c0_16 = arith.constant 0 : index
    %26 = vector.load %arg2[%c1_14, %c0_15, %c0_16] : memref<2x384x128xf32, #tpu.memory_space<vmem>>, vector<1x384x128xf32>
    %27 = vector.shape_cast %26 : vector<1x384x128xf32> to vector<384x128xf32>
    %cst_17 = arith.constant dense<0.000000e+00> : vector<36x128xf32>
    %28 = tpu.matmul %25, %27, %cst_17 {dimension_numbers = #tpu.dot_dimension_numbers<[1], [0], [0], [1], [0, 0, 1, 1], [], []>} : vector<36x384xf32>, vector<384x128xf32>, vector<36x128xf32> -> vector<36x128xf32>
    %c1_18 = arith.constant 1 : index
    %c0_19 = arith.constant 0 : index
    %c0_20 = arith.constant 0 : index
    %29 = vector.load %arg3[%c1_18, %c0_19, %c0_20] : memref<2x1x128xf32, #tpu.memory_space<vmem>>, vector<1x1x128xf32>
    %30 = vector.shape_cast %29 : vector<1x1x128xf32> to vector<1x128xf32>
    %31 = vector.broadcast %30 : vector<1x128xf32> to vector<36x128xf32>
    %32 = arith.addf %28, %31 : vector<36x128xf32>
    %33 = tpu.concatenate %1, %32, %1 in 0 : vector<2x128xf32>, vector<36x128xf32>, vector<2x128xf32> -> vector<40x128xf32>
    %34 = arith.mulf %33, %0 : vector<40x128xf32>
    %35 = arith.addf %6, %34 : vector<40x128xf32>
    %36 = vector.extract_strided_slice %35 {offsets = [1, 0], sizes = [36, 128], strides = [1, 1]} : vector<40x128xf32> to vector<36x128xf32>
    %37 = vector.extract_strided_slice %35 {offsets = [2, 0], sizes = [36, 128], strides = [1, 1]} : vector<40x128xf32> to vector<36x128xf32>
    %38 = vector.extract_strided_slice %35 {offsets = [3, 0], sizes = [36, 128], strides = [1, 1]} : vector<40x128xf32> to vector<36x128xf32>
    %39 = tpu.concatenate %36, %37, %38 in 1 : vector<36x128xf32>, vector<36x128xf32>, vector<36x128xf32> -> vector<36x384xf32>
    %c0_21 = arith.constant 0 : index
    %c0_22 = arith.constant 0 : index
    %c0_23 = arith.constant 0 : index
    %40 = vector.load %arg2[%c0_21, %c0_22, %c0_23] : memref<2x384x128xf32, #tpu.memory_space<vmem>>, vector<1x384x128xf32>
    %41 = vector.shape_cast %40 : vector<1x384x128xf32> to vector<384x128xf32>
    %cst_24 = arith.constant dense<0.000000e+00> : vector<36x128xf32>
    %42 = tpu.matmul %39, %41, %cst_24 {dimension_numbers = #tpu.dot_dimension_numbers<[1], [0], [0], [1], [0, 0, 1, 1], [], []>} : vector<36x384xf32>, vector<384x128xf32>, vector<36x128xf32> -> vector<36x128xf32>
    %c0_25 = arith.constant 0 : index
    %c0_26 = arith.constant 0 : index
    %c0_27 = arith.constant 0 : index
    %43 = vector.load %arg3[%c0_25, %c0_26, %c0_27] : memref<2x1x128xf32, #tpu.memory_space<vmem>>, vector<1x1x128xf32>
    %44 = vector.shape_cast %43 : vector<1x1x128xf32> to vector<1x128xf32>
    %45 = vector.broadcast %44 : vector<1x128xf32> to vector<36x128xf32>
    %46 = arith.addf %42, %45 : vector<36x128xf32>
    %47 = tpu.concatenate %1, %46, %1 in 0 : vector<2x128xf32>, vector<36x128xf32>, vector<2x128xf32> -> vector<40x128xf32>
    %48 = arith.mulf %47, %0 : vector<40x128xf32>
    %cst_28 = arith.constant 0.000000e+00 : f32
    %49 = vector.broadcast %cst_28 : f32 to vector<40x128xf32>
    %50 = arith.maximumf %48, %49 : vector<40x128xf32>
    %51 = vector.extract_strided_slice %50 {offsets = [1, 0], sizes = [36, 128], strides = [1, 1]} : vector<40x128xf32> to vector<36x128xf32>
    %52 = vector.extract_strided_slice %50 {offsets = [2, 0], sizes = [36, 128], strides = [1, 1]} : vector<40x128xf32> to vector<36x128xf32>
    %53 = vector.extract_strided_slice %50 {offsets = [3, 0], sizes = [36, 128], strides = [1, 1]} : vector<40x128xf32> to vector<36x128xf32>
    %54 = tpu.concatenate %51, %52, %53 in 1 : vector<36x128xf32>, vector<36x128xf32>, vector<36x128xf32> -> vector<36x384xf32>
    %c1_29 = arith.constant 1 : index
    %c0_30 = arith.constant 0 : index
    %c0_31 = arith.constant 0 : index
    %55 = vector.load %arg2[%c1_29, %c0_30, %c0_31] : memref<2x384x128xf32, #tpu.memory_space<vmem>>, vector<1x384x128xf32>
    %56 = vector.shape_cast %55 : vector<1x384x128xf32> to vector<384x128xf32>
    %cst_32 = arith.constant dense<0.000000e+00> : vector<36x128xf32>
    %57 = tpu.matmul %54, %56, %cst_32 {dimension_numbers = #tpu.dot_dimension_numbers<[1], [0], [0], [1], [0, 0, 1, 1], [], []>} : vector<36x384xf32>, vector<384x128xf32>, vector<36x128xf32> -> vector<36x128xf32>
    %c1_33 = arith.constant 1 : index
    %c0_34 = arith.constant 0 : index
    %c0_35 = arith.constant 0 : index
    %58 = vector.load %arg3[%c1_33, %c0_34, %c0_35] : memref<2x1x128xf32, #tpu.memory_space<vmem>>, vector<1x1x128xf32>
    %59 = vector.shape_cast %58 : vector<1x1x128xf32> to vector<1x128xf32>
    %60 = vector.broadcast %59 : vector<1x128xf32> to vector<36x128xf32>
    %61 = arith.addf %57, %60 : vector<36x128xf32>
    %62 = tpu.concatenate %1, %61, %1 in 0 : vector<2x128xf32>, vector<36x128xf32>, vector<2x128xf32> -> vector<40x128xf32>
    %63 = arith.mulf %62, %0 : vector<40x128xf32>
    %64 = arith.addf %35, %63 : vector<40x128xf32>
    %65 = vector.extract_strided_slice %64 {offsets = [1, 0], sizes = [36, 128], strides = [1, 1]} : vector<40x128xf32> to vector<36x128xf32>
    %66 = vector.extract_strided_slice %64 {offsets = [2, 0], sizes = [36, 128], strides = [1, 1]} : vector<40x128xf32> to vector<36x128xf32>
    %67 = vector.extract_strided_slice %64 {offsets = [3, 0], sizes = [36, 128], strides = [1, 1]} : vector<40x128xf32> to vector<36x128xf32>
    %68 = tpu.concatenate %65, %66, %67 in 1 : vector<36x128xf32>, vector<36x128xf32>, vector<36x128xf32> -> vector<36x384xf32>
    %c0_36 = arith.constant 0 : index
    %c0_37 = arith.constant 0 : index
    %c0_38 = arith.constant 0 : index
    %69 = vector.load %arg2[%c0_36, %c0_37, %c0_38] : memref<2x384x128xf32, #tpu.memory_space<vmem>>, vector<1x384x128xf32>
    %70 = vector.shape_cast %69 : vector<1x384x128xf32> to vector<384x128xf32>
    %cst_39 = arith.constant dense<0.000000e+00> : vector<36x128xf32>
    %71 = tpu.matmul %68, %70, %cst_39 {dimension_numbers = #tpu.dot_dimension_numbers<[1], [0], [0], [1], [0, 0, 1, 1], [], []>} : vector<36x384xf32>, vector<384x128xf32>, vector<36x128xf32> -> vector<36x128xf32>
    %c0_40 = arith.constant 0 : index
    %c0_41 = arith.constant 0 : index
    %c0_42 = arith.constant 0 : index
    %72 = vector.load %arg3[%c0_40, %c0_41, %c0_42] : memref<2x1x128xf32, #tpu.memory_space<vmem>>, vector<1x1x128xf32>
    %73 = vector.shape_cast %72 : vector<1x1x128xf32> to vector<1x128xf32>
    %74 = vector.broadcast %73 : vector<1x128xf32> to vector<36x128xf32>
    %75 = arith.addf %71, %74 : vector<36x128xf32>
    %76 = tpu.concatenate %1, %75, %1 in 0 : vector<2x128xf32>, vector<36x128xf32>, vector<2x128xf32> -> vector<40x128xf32>
    %77 = arith.mulf %76, %0 : vector<40x128xf32>
    %cst_43 = arith.constant 0.000000e+00 : f32
    %78 = vector.broadcast %cst_43 : f32 to vector<40x128xf32>
    %79 = arith.maximumf %77, %78 : vector<40x128xf32>
    %80 = vector.extract_strided_slice %79 {offsets = [1, 0], sizes = [36, 128], strides = [1, 1]} : vector<40x128xf32> to vector<36x128xf32>
    %81 = vector.extract_strided_slice %79 {offsets = [2, 0], sizes = [36, 128], strides = [1, 1]} : vector<40x128xf32> to vector<36x128xf32>
    %82 = vector.extract_strided_slice %79 {offsets = [3, 0], sizes = [36, 128], strides = [1, 1]} : vector<40x128xf32> to vector<36x128xf32>
    %83 = tpu.concatenate %80, %81, %82 in 1 : vector<36x128xf32>, vector<36x128xf32>, vector<36x128xf32> -> vector<36x384xf32>
    %c1_44 = arith.constant 1 : index
    %c0_45 = arith.constant 0 : index
    %c0_46 = arith.constant 0 : index
    %84 = vector.load %arg2[%c1_44, %c0_45, %c0_46] : memref<2x384x128xf32, #tpu.memory_space<vmem>>, vector<1x384x128xf32>
    %85 = vector.shape_cast %84 : vector<1x384x128xf32> to vector<384x128xf32>
    %cst_47 = arith.constant dense<0.000000e+00> : vector<36x128xf32>
    %86 = tpu.matmul %83, %85, %cst_47 {dimension_numbers = #tpu.dot_dimension_numbers<[1], [0], [0], [1], [0, 0, 1, 1], [], []>} : vector<36x384xf32>, vector<384x128xf32>, vector<36x128xf32> -> vector<36x128xf32>
    %c1_48 = arith.constant 1 : index
    %c0_49 = arith.constant 0 : index
    %c0_50 = arith.constant 0 : index
    %87 = vector.load %arg3[%c1_48, %c0_49, %c0_50] : memref<2x1x128xf32, #tpu.memory_space<vmem>>, vector<1x1x128xf32>
    %88 = vector.shape_cast %87 : vector<1x1x128xf32> to vector<1x128xf32>
    %89 = vector.broadcast %88 : vector<1x128xf32> to vector<36x128xf32>
    %90 = arith.addf %86, %89 : vector<36x128xf32>
    %91 = tpu.concatenate %1, %90, %1 in 0 : vector<2x128xf32>, vector<36x128xf32>, vector<2x128xf32> -> vector<40x128xf32>
    %92 = arith.mulf %91, %0 : vector<40x128xf32>
    %93 = arith.addf %64, %92 : vector<40x128xf32>
    %94 = arith.addf %35, %93 : vector<40x128xf32>
    %95 = vector.extract_strided_slice %94 {offsets = [1, 0], sizes = [36, 128], strides = [1, 1]} : vector<40x128xf32> to vector<36x128xf32>
    %96 = vector.extract_strided_slice %94 {offsets = [2, 0], sizes = [36, 128], strides = [1, 1]} : vector<40x128xf32> to vector<36x128xf32>
    %97 = vector.extract_strided_slice %94 {offsets = [3, 0], sizes = [36, 128], strides = [1, 1]} : vector<40x128xf32> to vector<36x128xf32>
    %98 = tpu.concatenate %95, %96, %97 in 1 : vector<36x128xf32>, vector<36x128xf32>, vector<36x128xf32> -> vector<36x384xf32>
    %c0_51 = arith.constant 0 : index
    %c0_52 = arith.constant 0 : index
    %c0_53 = arith.constant 0 : index
    %99 = vector.load %arg2[%c0_51, %c0_52, %c0_53] : memref<2x384x128xf32, #tpu.memory_space<vmem>>, vector<1x384x128xf32>
    %100 = vector.shape_cast %99 : vector<1x384x128xf32> to vector<384x128xf32>
    %cst_54 = arith.constant dense<0.000000e+00> : vector<36x128xf32>
    %101 = tpu.matmul %98, %100, %cst_54 {dimension_numbers = #tpu.dot_dimension_numbers<[1], [0], [0], [1], [0, 0, 1, 1], [], []>} : vector<36x384xf32>, vector<384x128xf32>, vector<36x128xf32> -> vector<36x128xf32>
    %c0_55 = arith.constant 0 : index
    %c0_56 = arith.constant 0 : index
    %c0_57 = arith.constant 0 : index
    %102 = vector.load %arg3[%c0_55, %c0_56, %c0_57] : memref<2x1x128xf32, #tpu.memory_space<vmem>>, vector<1x1x128xf32>
    %103 = vector.shape_cast %102 : vector<1x1x128xf32> to vector<1x128xf32>
    %104 = vector.broadcast %103 : vector<1x128xf32> to vector<36x128xf32>
    %105 = arith.addf %101, %104 : vector<36x128xf32>
    %106 = tpu.concatenate %1, %105, %1 in 0 : vector<2x128xf32>, vector<36x128xf32>, vector<2x128xf32> -> vector<40x128xf32>
    %107 = arith.mulf %106, %0 : vector<40x128xf32>
    %cst_58 = arith.constant 0.000000e+00 : f32
    %108 = vector.broadcast %cst_58 : f32 to vector<40x128xf32>
    %109 = arith.maximumf %107, %108 : vector<40x128xf32>
    %110 = vector.extract_strided_slice %109 {offsets = [1, 0], sizes = [36, 128], strides = [1, 1]} : vector<40x128xf32> to vector<36x128xf32>
    %111 = vector.extract_strided_slice %109 {offsets = [2, 0], sizes = [36, 128], strides = [1, 1]} : vector<40x128xf32> to vector<36x128xf32>
    %112 = vector.extract_strided_slice %109 {offsets = [3, 0], sizes = [36, 128], strides = [1, 1]} : vector<40x128xf32> to vector<36x128xf32>
    %113 = tpu.concatenate %110, %111, %112 in 1 : vector<36x128xf32>, vector<36x128xf32>, vector<36x128xf32> -> vector<36x384xf32>
    %c1_59 = arith.constant 1 : index
    %c0_60 = arith.constant 0 : index
    %c0_61 = arith.constant 0 : index
    %114 = vector.load %arg2[%c1_59, %c0_60, %c0_61] : memref<2x384x128xf32, #tpu.memory_space<vmem>>, vector<1x384x128xf32>
    %115 = vector.shape_cast %114 : vector<1x384x128xf32> to vector<384x128xf32>
    %cst_62 = arith.constant dense<0.000000e+00> : vector<36x128xf32>
    %116 = tpu.matmul %113, %115, %cst_62 {dimension_numbers = #tpu.dot_dimension_numbers<[1], [0], [0], [1], [0, 0, 1, 1], [], []>} : vector<36x384xf32>, vector<384x128xf32>, vector<36x128xf32> -> vector<36x128xf32>
    %c1_63 = arith.constant 1 : index
    %c0_64 = arith.constant 0 : index
    %c0_65 = arith.constant 0 : index
    %117 = vector.load %arg3[%c1_63, %c0_64, %c0_65] : memref<2x1x128xf32, #tpu.memory_space<vmem>>, vector<1x1x128xf32>
    %118 = vector.shape_cast %117 : vector<1x1x128xf32> to vector<1x128xf32>
    %119 = vector.broadcast %118 : vector<1x128xf32> to vector<36x128xf32>
    %120 = arith.addf %116, %119 : vector<36x128xf32>
    %121 = tpu.concatenate %1, %120, %1 in 0 : vector<2x128xf32>, vector<36x128xf32>, vector<2x128xf32> -> vector<40x128xf32>
    %122 = arith.mulf %121, %0 : vector<40x128xf32>
    %123 = arith.addf %94, %122 : vector<40x128xf32>
    %124 = arith.addf %6, %123 : vector<40x128xf32>
    %c0_66 = arith.constant 0 : index
    %c0_67 = arith.constant 0 : index
    %c0_68 = arith.constant 0 : index
    %125 = vector.load %arg5[%c0_66, %c0_67, %c0_68] : memref<3x128x128xf32, #tpu.memory_space<vmem>>, vector<1x128x128xf32>
    %126 = vector.shape_cast %125 : vector<1x128x128xf32> to vector<128x128xf32>
    %cst_69 = arith.constant dense<0.000000e+00> : vector<40x128xf32>
    %127 = tpu.matmul %124, %126, %cst_69 {dimension_numbers = #tpu.dot_dimension_numbers<[1], [0], [0], [1], [0, 0, 1, 1], [], []>} : vector<40x128xf32>, vector<128x128xf32>, vector<40x128xf32> -> vector<40x128xf32>
    %128 = arith.maximumf %124, %127 : vector<40x128xf32>
    %c1_70 = arith.constant 1 : index
    %c0_71 = arith.constant 0 : index
    %c0_72 = arith.constant 0 : index
    %129 = vector.load %arg5[%c1_70, %c0_71, %c0_72] : memref<3x128x128xf32, #tpu.memory_space<vmem>>, vector<1x128x128xf32>
    %130 = vector.shape_cast %129 : vector<1x128x128xf32> to vector<128x128xf32>
    %cst_73 = arith.constant dense<0.000000e+00> : vector<40x128xf32>
    %131 = tpu.matmul %128, %130, %cst_73 {dimension_numbers = #tpu.dot_dimension_numbers<[1], [0], [0], [1], [0, 0, 1, 1], [], []>} : vector<40x128xf32>, vector<128x128xf32>, vector<40x128xf32> -> vector<40x128xf32>
    %132 = arith.maximumf %128, %131 : vector<40x128xf32>
    %c2 = arith.constant 2 : index
    %c0_74 = arith.constant 0 : index
    %c0_75 = arith.constant 0 : index
    %133 = vector.load %arg5[%c2, %c0_74, %c0_75] : memref<3x128x128xf32, #tpu.memory_space<vmem>>, vector<1x128x128xf32>
    %134 = vector.shape_cast %133 : vector<1x128x128xf32> to vector<128x128xf32>
    %cst_76 = arith.constant dense<0.000000e+00> : vector<40x128xf32>
    %135 = tpu.matmul %132, %134, %cst_76 {dimension_numbers = #tpu.dot_dimension_numbers<[1], [0], [0], [1], [0, 0, 1, 1], [], []>} : vector<40x128xf32>, vector<128x128xf32>, vector<40x128xf32> -> vector<40x128xf32>
    %136 = arith.maximumf %132, %135 : vector<40x128xf32>
    %137 = vector.extract_strided_slice %124 {offsets = [0, 0], sizes = [36, 128], strides = [1, 1]} : vector<40x128xf32> to vector<36x128xf32>
    %138 = vector.extract_strided_slice %124 {offsets = [1, 0], sizes = [36, 128], strides = [1, 1]} : vector<40x128xf32> to vector<36x128xf32>
    %139 = vector.extract_strided_slice %124 {offsets = [2, 0], sizes = [36, 128], strides = [1, 1]} : vector<40x128xf32> to vector<36x128xf32>
    %140 = vector.extract_strided_slice %124 {offsets = [3, 0], sizes = [36, 128], strides = [1, 1]} : vector<40x128xf32> to vector<36x128xf32>
    %141 = vector.extract_strided_slice %124 {offsets = [4, 0], sizes = [36, 128], strides = [1, 1]} : vector<40x128xf32> to vector<36x128xf32>
    %142 = tpu.concatenate %137, %138, %139, %140, %141 in 1 : vector<36x128xf32>, vector<36x128xf32>, vector<36x128xf32>, vector<36x128xf32>, vector<36x128xf32> -> vector<36x640xf32>
    %143 = vector.extract_strided_slice %136 {offsets = [0, 0], sizes = [36, 128], strides = [1, 1]} : vector<40x128xf32> to vector<36x128xf32>
    %144 = vector.extract_strided_slice %136 {offsets = [1, 0], sizes = [36, 128], strides = [1, 1]} : vector<40x128xf32> to vector<36x128xf32>
    %145 = vector.extract_strided_slice %136 {offsets = [2, 0], sizes = [36, 128], strides = [1, 1]} : vector<40x128xf32> to vector<36x128xf32>
    %146 = vector.extract_strided_slice %136 {offsets = [3, 0], sizes = [36, 128], strides = [1, 1]} : vector<40x128xf32> to vector<36x128xf32>
    %147 = vector.extract_strided_slice %136 {offsets = [4, 0], sizes = [36, 128], strides = [1, 1]} : vector<40x128xf32> to vector<36x128xf32>
    %148 = tpu.concatenate %143, %144, %145, %146, %147 in 1 : vector<36x128xf32>, vector<36x128xf32>, vector<36x128xf32>, vector<36x128xf32>, vector<36x128xf32> -> vector<36x640xf32>
    %149 = tpu.concatenate %142, %148 in 1 : vector<36x640xf32>, vector<36x640xf32> -> vector<36x1280xf32>
    %c0_77 = arith.constant 0 : index
    %c0_78 = arith.constant 0 : index
    %150 = vector.load %arg4[%c0_77, %c0_78] : memref<1280x128xf32, #tpu.memory_space<vmem>>, vector<1280x128xf32>
    %cst_79 = arith.constant dense<0.000000e+00> : vector<36x128xf32>
    %151 = tpu.matmul %149, %150, %cst_79 {dimension_numbers = #tpu.dot_dimension_numbers<[1], [0], [0], [1], [0, 0, 1, 1], [], []>} : vector<36x1280xf32>, vector<1280x128xf32>, vector<36x128xf32> -> vector<36x128xf32>
    %cst_80 = arith.constant 0.000000e+00 : f32
    %152 = vector.broadcast %cst_80 : f32 to vector<36x128xf32>
    %153 = arith.maximumf %151, %152 : vector<36x128xf32>
    %154 = arith.negf %153 : vector<36x128xf32>
    %155 = math.exp %154 : vector<36x128xf32>
    %cst_81 = arith.constant 1.000000e+00 : f32
    %156 = vector.broadcast %cst_81 : f32 to vector<36x128xf32>
    %157 = arith.addf %156, %155 : vector<36x128xf32>
    %158 = arith.divf %156, %157 : vector<36x128xf32>
    %159 = vector.extract_strided_slice %6 {offsets = [2, 0], sizes = [36, 128], strides = [1, 1]} : vector<40x128xf32> to vector<36x128xf32>
    %160 = vector.extract_strided_slice %124 {offsets = [2, 0], sizes = [36, 128], strides = [1, 1]} : vector<40x128xf32> to vector<36x128xf32>
    %161 = arith.mulf %160, %158 : vector<36x128xf32>
    %162 = arith.addf %159, %161 : vector<36x128xf32>
    %163 = vector.extract_strided_slice %162 {offsets = [0, 0], sizes = [16, 128], strides = [1, 1]} : vector<36x128xf32> to vector<16x128xf32>
    %c0_82 = arith.constant 0 : index
    %c0_83 = arith.constant 0 : index
    %c0_84 = arith.constant 0 : index
    %164 = vector.load %arg7[%c0_82, %c0_83, %c0_84] : memref<2x16x128xf32, #tpu.memory_space<vmem>>, vector<1x16x128xf32>
    %165 = vector.shape_cast %164 : vector<1x16x128xf32> to vector<16x128xf32>
    %166 = vector.shape_cast %163 : vector<16x128xf32> to vector<1x16x128xf32>
    tpu.vector_store %arg7[%c0_82, %c0_83, %c0_84], %166 {strides = array<i32>} : memref<2x16x128xf32, #tpu.memory_space<vmem>>, vector<1x16x128xf32>,
    %167 = vector.extract_strided_slice %162 {offsets = [20, 0], sizes = [16, 128], strides = [1, 1]} : vector<36x128xf32> to vector<16x128xf32>
    %c1_85 = arith.constant 1 : index
    %c0_86 = arith.constant 0 : index
    %c0_87 = arith.constant 0 : index
    %168 = vector.load %arg7[%c1_85, %c0_86, %c0_87] : memref<2x16x128xf32, #tpu.memory_space<vmem>>, vector<1x16x128xf32>
    %169 = vector.shape_cast %168 : vector<1x16x128xf32> to vector<16x128xf32>
    %170 = vector.shape_cast %167 : vector<16x128xf32> to vector<1x16x128xf32>
    tpu.vector_store %arg7[%c1_85, %c0_86, %c0_87], %170 {strides = array<i32>} : memref<2x16x128xf32, #tpu.memory_space<vmem>>, vector<1x16x128xf32>,
    return
  }
  func.func @transform_0(%arg0: i32) -> (i32, i32, i32) {
    %c0_i32 = arith.constant 0 : i32
    %c0_i32_0 = arith.constant 0 : i32
    %c0_i32_1 = arith.constant 0 : i32
    return %arg0, %c0_i32, %c0_i32_0 : i32, i32, i32
  }
  func.func @transform_1(%arg0: i32) -> (i32, i32, i32) {
    %c0_i32 = arith.constant 0 : i32
    %c0_i32_0 = arith.constant 0 : i32
    %c0_i32_1 = arith.constant 0 : i32
    %c0_i32_2 = arith.constant 0 : i32
    return %c0_i32, %c0_i32_0, %c0_i32_1 : i32, i32, i32
  }
  func.func @transform_2(%arg0: i32) -> (i32, i32, i32) {
    %c0_i32 = arith.constant 0 : i32
    %c0_i32_0 = arith.constant 0 : i32
    %c0_i32_1 = arith.constant 0 : i32
    %c0_i32_2 = arith.constant 0 : i32
    return %c0_i32, %c0_i32_0, %c0_i32_1 : i32, i32, i32
  }
  func.func @transform_3(%arg0: i32) -> (i32, i32) {
    %c0_i32 = arith.constant 0 : i32
    %c0_i32_0 = arith.constant 0 : i32
    %c0_i32_1 = arith.constant 0 : i32
    return %c0_i32, %c0_i32_0 : i32, i32
  }
  func.func @transform_4(%arg0: i32) -> (i32, i32, i32) {
    %c0_i32 = arith.constant 0 : i32
    %c0_i32_0 = arith.constant 0 : i32
    %c0_i32_1 = arith.constant 0 : i32
    %c0_i32_2 = arith.constant 0 : i32
    return %c0_i32, %c0_i32_0, %c0_i32_1 : i32, i32, i32
  }
  func.func @transform_5(%arg0: i32) -> (i32, i32) {
    %c0_i32 = arith.constant 0 : i32
    %c0_i32_0 = arith.constant 0 : i32
    %c0_i32_1 = arith.constant 0 : i32
    return %c0_i32, %c0_i32_0 : i32, i32
  }
  func.func @transform_6(%arg0: i32) -> (i32, i32, i32) {
    %c0_i32 = arith.constant 0 : i32
    %c0_i32_0 = arith.constant 0 : i32
    %c0_i32_1 = arith.constant 0 : i32
    return %arg0, %c0_i32, %c0_i32_0 : i32, i32, i32
  }
}

</mosaic_0001>

<llo_original>
// kernel: tile.21
$region0: #{tile.21}
  #allocation0 [shape = 's32[1]{0}', space=sflag, size = 0x4, scoped, tag = 'scoped memory for tile.21']
  %s0 = inlined_call_operand.vmem [shape: f32[8], index: 0, kind: input, shape index: {}]
  %s1 = inlined_call_operand.vmem [shape: f32[16,8], index: 1, kind: output, shape index: {}]
  // Predicated region
  $region2: #{tile.21} parent=0 // pred_check
    _
  $region3: #{tile.21} parent=0 // pred_check_branch
    %3 = sbr.rel (0) target = $region5
  $region4: #{tile.21} parent=0 // pred_region
    _
  $region5: #{tile.21} parent=0 // pred_fallthru
    _
  %v4 = vld [vmem:[%s0] ss:$0 sm:$0xff]
  %5 = vst [vmem:[%s1] sm:$0xff] %v4
  %s6 = scalar_lea.vmem %s1, 8
  %7 = vst [vmem:[%s6] sm:$0xff] %v4

// kernel: tile.23
$region0: #{tile.23}
  %s0 = inlined_call_operand.vmem [shape: f32[16,8], index: 0, kind: input, shape index: {}]
  %s1 = inlined_call_operand.vmem [shape: f32[1,128], index: 1, kind: output, shape index: {}]
  $region1: #{tile.23} parent=0
    #allocation0 [shape = 'u8[4096]{0}', space=vmem, size = 0x1000, scoped, tag = 'scoped mem for output reshape']
    %v2 = vld [vmem:[%s0] sm:$0x1]
    %vm3 = vcmask 64512
    %4 = vst.msk [vmem:[#allocation0] sm:$0x1] %vm3, %v2
    %s5 = scalar_lea.vmem %s0, 15
    %v6 = vld [vmem:[%s5] sm:$0x1]
    %7 = vrot.lane.b32.xlu0 %v6, 120
    %v8 = vpop.permute.xlu0 %7
    %vm9 = vcmask 1048512
    %10 = vst.msk [vmem:[#allocation0] sm:$0x1] %vm9, %v8
    %s11 = scalar_lea.vmem %s0, 14
    %v12 = vld [vmem:[%s11] sm:$0x1]
    %13 = vrot.lane.b32.xlu0 %v12, 112
    %v14 = vpop.permute.xlu0 %13
    %vm15 = vcmask 982912
    %16 = vst.msk [vmem:[#allocation0] sm:$0x1] %vm15, %v14
    %s17 = scalar_lea.vmem %s0, 13
    %v18 = vld [vmem:[%s17] sm:$0x1]
    %19 = vrot.lane.b32.xlu0 %v18, 104
    %v20 = vpop.permute.xlu0 %19
    %vm21 = vcmask 917312
    %22 = vst.msk [vmem:[#allocation0] sm:$0x1] %vm21, %v20
    %s23 = scalar_lea.vmem %s0, 12
    %v24 = vld [vmem:[%s23] sm:$0x1]
    %25 = vrot.lane.b32.xlu0 %v24, 96
    %v26 = vpop.permute.xlu0 %25
    %vm27 = vcmask 851712
    %28 = vst.msk [vmem:[#allocation0] sm:$0x1] %vm27, %v26
    %s29 = scalar_lea.vmem %s0, 11
    %v30 = vld [vmem:[%s29] sm:$0x1]
    %31 = vrot.lane.b32.xlu0 %v30, 88
    %v32 = vpop.permute.xlu0 %31
    %vm33 = vcmask 786112
    %34 = vst.msk [vmem:[#allocation0] sm:$0x1] %vm33, %v32
    %s35 = scalar_lea.vmem %s0, 10
    %v36 = vld [vmem:[%s35] sm:$0x1]
    %37 = vrot.lane.b32.xlu0 %v36, 80
    %v38 = vpop.permute.xlu0 %37
    %vm39 = vcmask 720512
    %40 = vst.msk [vmem:[#allocation0] sm:$0x1] %vm39, %v38
    %s41 = scalar_lea.vmem %s0, 9
    %v42 = vld [vmem:[%s41] sm:$0x1]
    %43 = vrot.lane.b32.xlu0 %v42, 72
    %v44 = vpop.permute.xlu0 %43
    %vm45 = vcmask 654912
    %46 = vst.msk [vmem:[#allocation0] sm:$0x1] %vm45, %v44
    %s47 = scalar_lea.vmem %s0, 8
    %v48 = vld [vmem:[%s47] sm:$0x1]
    %49 = vrot.lane.b32.xlu0 %v48, 64
    %v50 = vpop.permute.xlu0 %49
    %vm51 = vcmask 589312
    %52 = vst.msk [vmem:[#allocation0] sm:$0x1] %vm51, %v50
    %s53 = scalar_lea.vmem %s0, 7
    %v54 = vld [vmem:[%s53] sm:$0x1]
    %55 = vrot.lane.b32.xlu0 %v54, 56
    %v56 = vpop.permute.xlu0 %55
    %vm57 = vcmask 523712
    %58 = vst.msk [vmem:[#allocation0] sm:$0x1] %vm57, %v56
    %s59 = scalar_lea.vmem %s0, 6
    %v60 = vld [vmem:[%s59] sm:$0x1]
    %61 = vrot.lane.b32.xlu0 %v60, 48
    %v62 = vpop.permute.xlu0 %61
    %vm63 = vcmask 458112
    %64 = vst.msk [vmem:[#allocation0] sm:$0x1] %vm63, %v62
    %s65 = scalar_lea.vmem %s0, 5
    %v66 = vld [vmem:[%s65] sm:$0x1]
    %67 = vrot.lane.b32.xlu0 %v66, 40
    %v68 = vpop.permute.xlu0 %67
    %vm69 = vcmask 392512
    %70 = vst.msk [vmem:[#allocation0] sm:$0x1] %vm69, %v68
    %s71 = scalar_lea.vmem %s0, 4
    %v72 = vld [vmem:[%s71] sm:$0x1]
    %73 = vrot.lane.b32.xlu0 %v72, 32
    %v74 = vpop.permute.xlu0 %73
    %vm75 = vcmask 326912
    %76 = vst.msk [vmem:[#allocation0] sm:$0x1] %vm75, %v74
    %s77 = scalar_lea.vmem %s0, 3
    %v78 = vld [vmem:[%s77] sm:$0x1]
    %79 = vrot.lane.b32.xlu0 %v78, 24
    %v80 = vpop.permute.xlu0 %79
    %vm81 = vcmask 261312
    %82 = vst.msk [vmem:[#allocation0] sm:$0x1] %vm81, %v80
    %s83 = scalar_lea.vmem %s0, 2
    %v84 = vld [vmem:[%s83] sm:$0x1]
    %85 = vrot.lane.b32.xlu0 %v84, 16
    %v86 = vpop.permute.xlu0 %85
    %vm87 = vcmask 195712
    %88 = vst.msk [vmem:[#allocation0] sm:$0x1] %vm87, %v86
    %s89 = scalar_lea.vmem %s0, 1
    %v90 = vld [vmem:[%s89] sm:$0x1]
    %91 = vrot.lane.b32.xlu0 %v90, 8
    %v92 = vpop.permute.xlu0 %91
    %vm93 = vcmask 130112
    %94 = vst.msk [vmem:[#allocation0] sm:$0x1] %vm93, %v92
    %s96 = sshllo.u32 0, 1
    %v98 = vld [vmem:[#allocation0] sm:%s96]
    %s99 = sshllo.u32 0, 1
    %100 = vst [vmem:[%s1] sm:%s99] %v98

// kernel: rab_forward_pallas.1
$region0: #{rab_forward_pallas.1}
  #allocation0 [shape = 'u32[]', space=smem, size = 0x4, offset = 0x4, fixed_abs, tag = 'smem constant byte address 0x4 - core index']
  #allocation1 [shape = 'u32[144,128]{1,0:T(1,128)}', space=vmem, size = 0x12000, scoped, tag = 'internal scratch']
  %s0 = inlined_call_operand.vmem [shape: f32[2,16,128], index: 0, kind: input, shape index: {}]
  %s1 = inlined_call_operand.vmem [shape: f32[2,384,128], index: 1, kind: input, shape index: {}]
  %s2 = inlined_call_operand.vmem [shape: f32[2,1,128], index: 2, kind: input, shape index: {}]
  %s3 = inlined_call_operand.vmem [shape: f32[1280,128], index: 3, kind: input, shape index: {}]
  %s4 = inlined_call_operand.vmem [shape: f32[3,128,128], index: 4, kind: input, shape index: {}]
  %s5 = inlined_call_operand.vmem [shape: f32[40,128], index: 5, kind: input, shape index: {}]
  %s6 = inlined_call_operand.vmem [shape: f32[2,16,128], index: 6, kind: output, shape index: {}]
  %s7 = sld [smem:[#allocation0]]
  $region34: #{rab_forward_pallas.1} parent=0
    _
  %s9 = ssub.s32 1, %s7
  %s10 = scalar_select 0, %s9, %s7
  // Predicated region
  $region2: #{rab_forward_pallas.1} parent=0 // pred_check
    _
  $region3: #{rab_forward_pallas.1} parent=0 // pred_check_branch
    %12 = sbr.rel (0) target = $region5
  $region4: #{rab_forward_pallas.1} parent=0 // pred_region
    _
  $region5: #{rab_forward_pallas.1} parent=0 // pred_fallthru
    _
  // Predicated region
  $region6: #{rab_forward_pallas.1} parent=0 // pred_check
    _
  $region7: #{rab_forward_pallas.1} parent=0 // pred_check_branch
    %14 = sbr.rel (0) target = $region9
  $region8: #{rab_forward_pallas.1} parent=0 // pred_region
    _
  $region9: #{rab_forward_pallas.1} parent=0 // pred_fallthru
    _
  // Predicated region
  $region10: #{rab_forward_pallas.1} parent=0 // pred_check
    _
  $region11: #{rab_forward_pallas.1} parent=0 // pred_check_branch
    %16 = sbr.rel (0) target = $region13
  $region12: #{rab_forward_pallas.1} parent=0 // pred_region
    _
  $region13: #{rab_forward_pallas.1} parent=0 // pred_fallthru
    _
  // Predicated region
  $region14: #{rab_forward_pallas.1} parent=0 // pred_check
    _
  $region15: #{rab_forward_pallas.1} parent=0 // pred_check_branch
    %18 = sbr.rel (0) target = $region17
  $region16: #{rab_forward_pallas.1} parent=0 // pred_region
    _
  $region17: #{rab_forward_pallas.1} parent=0 // pred_fallthru
    _
  // Predicated region
  $region18: #{rab_forward_pallas.1} parent=0 // pred_check
    _
  $region19: #{rab_forward_pallas.1} parent=0 // pred_check_branch
    %20 = sbr.rel (0) target = $region21
  $region20: #{rab_forward_pallas.1} parent=0 // pred_region
    _
  $region21: #{rab_forward_pallas.1} parent=0 // pred_fallthru
    _
  // Predicated region
  $region22: #{rab_forward_pallas.1} parent=0 // pred_check
    _
  $region23: #{rab_forward_pallas.1} parent=0 // pred_check_branch
    %22 = sbr.rel (0) target = $region25
  $region24: #{rab_forward_pallas.1} parent=0 // pred_region
    _
  $region25: #{rab_forward_pallas.1} parent=0 // pred_fallthru
    _
  %v23 = vld [vmem:[%s5] sm:$0xff]
  %v24 = vld [vmem:[%s5 + $0x8] sm:$0xff]
  %v25 = vld [vmem:[%s5 + $0x10] sm:$0xff]
  %v26 = vld [vmem:[%s5 + $0x18] sm:$0xff]
  %v27 = vld [vmem:[%s5 + $0x20] sm:$0xff]
  %v28 = vld [vmem:[%s0] sm:$0xff]
  %v29 = vld [vmem:[%s0 + $0x8] sm:$0xff]
  %s30 = scalar_lea.vmem %s0, 16
  %v31 = vld [vmem:[%s30] sm:$0xff]
  %v32 = vld [vmem:[%s30 + $0x8] sm:$0xff]
  %vm35 = vcmask 1041408
  %v36 = vrot.slane %v28, 6
  %v37 = vrot.slane %v29, 6
  %v38 = vsel %vm35, %v36, %v37
  %vm44 = vcmask 1045504
  %v45 = vrot.slane %v31, 2
  %v46 = vrot.slane %v32, 2
  %v47 = vsel %vm44, %v45, %v46
  %v51 = vsel %vm35, 0.0, %v36
  %v52 = vsel %vm35, %v37, 0.0
  %vm53 = vcmask 1043456
  %v54 = vsel %vm53, %v52, 0.0
  %v55 = vsel %vm44, %v54, %v45
  %v56 = vsel %vm44, %v46, 0.0
  %vm60 = vcmask 1046528
  %v61 = vrot.slane %v51, 1
  %v62 = vrot.slane %v38, 1
  %v63 = vsel %vm60, %v61, %v62
  %v64 = vrot.slane %v55, 1
  %v65 = vsel %vm60, %v62, %v64
  %v66 = vrot.slane %v47, 1
  %v67 = vsel %vm60, %v64, %v66
  %v68 = vrot.slane %v56, 1
  %v69 = vsel %vm60, %v66, %v68
  %v70 = vrot.slane %v51, 2
  %v71 = vrot.slane %v38, 2
  %v72 = vsel %vm44, %v70, %v71
  %v73 = vrot.slane %v55, 2
  %v74 = vsel %vm44, %v71, %v73
  %v75 = vrot.slane %v47, 2
  %v76 = vsel %vm44, %v73, %v75
  %v77 = vrot.slane %v56, 2
  %v78 = vsel %vm44, %v75, %v77
  %v79 = vld [vmem:[%s1] sm:$0xff]
  %v80 = vld [vmem:[%s1 + $0x8] sm:$0xff]
  %v81 = vld [vmem:[%s1 + $0x10] sm:$0xff]
  %v82 = vld [vmem:[%s1 + $0x18] sm:$0xff]
  %v83 = vld [vmem:[%s1 + $0x20] sm:$0xff]
  %v84 = vld [vmem:[%s1 + $0x28] sm:$0xff]
  %v85 = vld [vmem:[%s1 + $0x30] sm:$0xff]
  %v86 = vld [vmem:[%s1 + $0x38] sm:$0xff]
  %v87 = vld [vmem:[%s1 + $0x40] sm:$0xff]
  %v88 = vld [vmem:[%s1 + $0x48] sm:$0xff]
  %v89 = vld [vmem:[%s1 + $0x50] sm:$0xff]
  %v90 = vld [vmem:[%s1 + $0x58] sm:$0xff]
  %v91 = vld [vmem:[%s1 + $0x60] sm:$0xff]
  %v92 = vld [vmem:[%s1 + $0x68] sm:$0xff]
  %v93 = vld [vmem:[%s1 + $0x70] sm:$0xff]
  %v94 = vld [vmem:[%s1 + $0x78] sm:$0xff]
  %v95 = vld [vmem:[%s1 + $0x80] sm:$0xff]
  %v96 = vld [vmem:[%s1 + $0x88] sm:$0xff]
  %v97 = vld [vmem:[%s1 + $0x90] sm:$0xff]
  %v98 = vld [vmem:[%s1 + $0x98] sm:$0xff]
  %v99 = vld [vmem:[%s1 + $0xa0] sm:$0xff]
  %v100 = vld [vmem:[%s1 + $0xa8] sm:$0xff]
  %v101 = vld [vmem:[%s1 + $0xb0] sm:$0xff]
  %v102 = vld [vmem:[%s1 + $0xb8] sm:$0xff]
  %v103 = vld [vmem:[%s1 + $0xc0] sm:$0xff]
  %v104 = vld [vmem:[%s1 + $0xc8] sm:$0xff]
  %v105 = vld [vmem:[%s1 + $0xd0] sm:$0xff]
  %v106 = vld [vmem:[%s1 + $0xd8] sm:$0xff]
  %v107 = vld [vmem:[%s1 + $0xe0] sm:$0xff]
  %v108 = vld [vmem:[%s1 + $0xe8] sm:$0xff]
  %v109 = vld [vmem:[%s1 + $0xf0] sm:$0xff]
  %v110 = vld [vmem:[%s1 + $0xf8] sm:$0xff]
  %v111 = vld [vmem:[%s1 + $0x100] sm:$0xff]
  %v112 = vld [vmem:[%s1 + $0x108] sm:$0xff]
  %v113 = vld [vmem:[%s1 + $0x110] sm:$0xff]
  %v114 = vld [vmem:[%s1 + $0x118] sm:$0xff]
  %v115 = vld [vmem:[%s1 + $0x120] sm:$0xff]
  %v116 = vld [vmem:[%s1 + $0x128] sm:$0xff]
  %v117 = vld [vmem:[%s1 + $0x130] sm:$0xff]
  %v118 = vld [vmem:[%s1 + $0x138] sm:$0xff]
  %v119 = vld [vmem:[%s1 + $0x140] sm:$0xff]
  %v120 = vld [vmem:[%s1 + $0x148] sm:$0xff]
  %v121 = vld [vmem:[%s1 + $0x150] sm:$0xff]
  %v122 = vld [vmem:[%s1 + $0x158] sm:$0xff]
  %v123 = vld [vmem:[%s1 + $0x160] sm:$0xff]
  %v124 = vld [vmem:[%s1 + $0x168] sm:$0xff]
  %v125 = vld [vmem:[%s1 + $0x170] sm:$0xff]
  %v126 = vld [vmem:[%s1 + $0x178] sm:$0xff]
  %v127 = vld [vmem:[%s2] sm:$0x1]
  %v129 = vlaneseq
  %v130 = vshrl.u32 %v129, 7
  %v131 = vsub.s32 0, %v130
  %v132 = vrot.slane %v127, %v131
  %v134 = vrot.slane %v63, 1
  %v135 = vrot.slane %v65, 1
  %v136 = vsel %vm60, %v134, %v135
  %v137 = vrot.slane %v72, 1
  %v138 = vrot.slane %v74, 1
  %v139 = vsel %vm60, %v137, %v138
  %v140 = vrot.slane %v67, 1
  %v141 = vsel %vm60, %v135, %v140
  %v142 = vrot.slane %v76, 1
  %v143 = vsel %vm60, %v138, %v142
  %v144 = vrot.slane %v69, 1
  %v145 = vsel %vm60, %v140, %v144
  %v146 = vrot.slane %v78, 1
  %v147 = vsel %vm60, %v142, %v146
  %v148 = vrot.slane %v68, 1
  %v149 = vsel %vm60, %v144, %v148
  %v150 = vrot.slane %v77, 1
  %v151 = vsel %vm60, %v146, %v150
  %167 = vmatprep.subr.mxu0 0.0
  %168 = vmatpush1.msra.mxu0 %v79
  %169 = vmatprep.subr.mxu0 0.0
  %170 = vmatpush1.msra.mxu0 %v80
  %171 = vmatprep.subr.mxu0 0.0
  %172 = vmatpush1.msra.mxu0 %v81
  %173 = vmatprep.subr.mxu0 0.0
  %174 = vmatpush1.msra.mxu0 %v82
  %175 = vmatprep.subr.mxu0 0.0
  %176 = vmatpush1.msra.mxu0 %v83
  %177 = vmatprep.subr.mxu0 0.0
  %178 = vmatpush1.msra.mxu0 %v84
  %179 = vmatprep.subr.mxu0 0.0
  %180 = vmatpush1.msra.mxu0 %v85
  %181 = vmatprep.subr.mxu0 0.0
  %182 = vmatpush1.msra.mxu0 %v86
  %183 = vmatprep.subr.mxu0 0.0
  %184 = vmatpush1.msra.mxu0 %v87
  %185 = vmatprep.subr.mxu0 0.0
  %186 = vmatpush1.msra.mxu0 %v88
  %187 = vmatprep.subr.mxu0 0.0
  %188 = vmatpush1.msra.mxu0 %v89
  %189 = vmatprep.subr.mxu0 0.0
  %190 = vmatpush1.msra.mxu0 %v90
  %191 = vmatprep.subr.mxu0 0.0
  %192 = vmatpush1.msra.mxu0 %v91
  %193 = vmatprep.subr.mxu0 0.0
  %194 = vmatpush1.msra.mxu0 %v92
  %195 = vmatprep.subr.mxu0 0.0
  %196 = vmatpush1.msra.mxu0 %v93
  %197 = vmatprep.subr.mxu0 0.0
  %198 = vmatpush1.msra.mxu0 %v94
  %199 = vmatprep.subr.mxu0 0.0
  %200 = vmatpush1.msra.mxu0 %v95
  %201 = vmatprep.subr.mxu0 0.0
  %202 = vmatpush1.msra.mxu0 %v96
  %203 = vmatprep.subr.mxu0 0.0
  %204 = vmatpush1.msra.mxu0 %v97
  %205 = vmatprep.subr.mxu0 0.0
  %206 = vmatpush1.msra.mxu0 %v98
  %207 = vmatprep.subr.mxu0 0.0
  %208 = vmatpush1.msra.mxu0 %v99
  %209 = vmatprep.subr.mxu0 0.0
  %210 = vmatpush1.msra.mxu0 %v100
  %211 = vmatprep.subr.mxu0 0.0
  %212 = vmatpush1.msra.mxu0 %v101
  %213 = vmatprep.subr.mxu0 0.0
  %214 = vmatpush1.msra.mxu0 %v102
  %215 = vmatprep.subr.mxu0 0.0
  %216 = vmatpush1.msra.mxu0 %v103
  %217 = vmatprep.subr.mxu0 0.0
  %218 = vmatpush1.msra.mxu0 %v104
  %219 = vmatprep.subr.mxu0 0.0
  %220 = vmatpush1.msra.mxu0 %v105
  %221 = vmatprep.subr.mxu0 0.0
  %222 = vmatpush1.msra.mxu0 %v106
  %223 = vmatprep.subr.mxu0 0.0
  %224 = vmatpush1.msra.mxu0 %v107
  %225 = vmatprep.subr.mxu0 0.0
  %226 = vmatpush1.msra.mxu0 %v108
  %227 = vmatprep.subr.mxu0 0.0
  %228 = vmatpush1.msra.mxu0 %v109
  %229 = vmatprep.subr.mxu0 0.0
  %230 = vmatpush1.msra.mxu0 %v110
  %231 = vmatprep.mubr.f32.mxu0 %v136
  %232 = vmatmul.mubr.f32.gmra.mrb[0].mxu0 %v63
  %v233 = vpop.f32.mrb[0].mxu0
  %v234 = vadd.f32 %v132, %v233
  %v235 = vpop.f32.mrb[0].mxu0
  %236 = vmatprep.mubr.f32.mxu0 %v141
  %237 = vmatmul.mubr.f32.gmra.mrb[0].mxu0 %v65
  %v238 = vpop.f32.mrb[0].mxu0
  %v239 = vadd.f32 %v132, %v238
  %v240 = vpop.f32.mrb[0].mxu0
  %241 = vmatprep.mubr.f32.mxu0 %v145
  %242 = vmatmul.mubr.f32.gmra.mrb[0].mxu0 %v67
  %v243 = vpop.f32.mrb[0].mxu0
  %v244 = vadd.f32 %v132, %v243
  %v245 = vpop.f32.mrb[0].mxu0
  %246 = vmatprep.mubr.f32.mxu0 %v149
  %247 = vmatmul.mubr.f32.gmra.mrb[0].mxu0 %v69
  %v248 = vpop.f32.mrb[0].mxu0
  %v249 = vadd.f32 %v132, %v248
  %v250 = vpop.f32.mrb[0].mxu0
  %251 = vmatprep.mubr.f32.mxu0 %v148
  %252 = vmatmul.mubr.f32.gmra.mrb[0].mxu0 %v68
  %v253 = vpop.f32.mrb[0].mxu0
  %v254 = vadd.f32 %v132, %v253
  %v255 = vpop.f32.mrb[0].mxu0
  %256 = vdwg.mxu0
  %257 = vmatprep.subr.mxu0 0.0
  %258 = vmatpush1.msra.mxu0 %v111
  %259 = vmatprep.subr.mxu0 0.0
  %260 = vmatpush1.msra.mxu0 %v112
  %261 = vmatprep.subr.mxu0 0.0
  %262 = vmatpush1.msra.mxu0 %v113
  %263 = vmatprep.subr.mxu0 0.0
  %264 = vmatpush1.msra.mxu0 %v114
  %265 = vmatprep.subr.mxu0 0.0
  %266 = vmatpush1.msra.mxu0 %v115
  %267 = vmatprep.subr.mxu0 0.0
  %268 = vmatpush1.msra.mxu0 %v116
  %269 = vmatprep.subr.mxu0 0.0
  %270 = vmatpush1.msra.mxu0 %v117
  %271 = vmatprep.subr.mxu0 0.0
  %272 = vmatpush1.msra.mxu0 %v118
  %273 = vmatprep.subr.mxu0 0.0
  %274 = vmatpush1.msra.mxu0 %v119
  %275 = vmatprep.subr.mxu0 0.0
  %276 = vmatpush1.msra.mxu0 %v120
  %277 = vmatprep.subr.mxu0 0.0
  %278 = vmatpush1.msra.mxu0 %v121
  %279 = vmatprep.subr.mxu0 0.0
  %280 = vmatpush1.msra.mxu0 %v122
  %281 = vmatprep.subr.mxu0 0.0
  %282 = vmatpush1.msra.mxu0 %v123
  %283 = vmatprep.subr.mxu0 0.0
  %284 = vmatpush1.msra.mxu0 %v124
  %285 = vmatprep.subr.mxu0 0.0
  %286 = vmatpush1.msra.mxu0 %v125
  %287 = vmatprep.subr.mxu0 0.0
  %288 = vmatpush1.msra.mxu0 %v126
  %289 = vmatprep.subr.mxu0 0.0
  %290 = vmatpush1.msra.mxu0 0.0
  %291 = vmatprep.subr.mxu0 0.0
  %292 = vmatpush1.msra.mxu0 0.0
  %293 = vmatprep.subr.mxu0 0.0
  %294 = vmatpush1.msra.mxu0 0.0
  %295 = vmatprep.subr.mxu0 0.0
  %296 = vmatpush1.msra.mxu0 0.0
  %297 = vmatprep.subr.mxu0 0.0
  %298 = vmatpush1.msra.mxu0 0.0
  %299 = vmatprep.subr.mxu0 0.0
  %300 = vmatpush1.msra.mxu0 0.0
  %301 = vmatprep.subr.mxu0 0.0
  %302 = vmatpush1.msra.mxu0 0.0
  %303 = vmatprep.subr.mxu0 0.0
  %304 = vmatpush1.msra.mxu0 0.0
  %305 = vmatprep.subr.mxu0 0.0
  %306 = vmatpush1.msra.mxu0 0.0
  %307 = vmatprep.subr.mxu0 0.0
  %308 = vmatpush1.msra.mxu0 0.0
  %309 = vmatprep.subr.mxu0 0.0
  %310 = vmatpush1.msra.mxu0 0.0
  %311 = vmatprep.subr.mxu0 0.0
  %312 = vmatpush1.msra.mxu0 0.0
  %313 = vmatprep.subr.mxu0 0.0
  %314 = vmatpush1.msra.mxu0 0.0
  %315 = vmatprep.subr.mxu0 0.0
  %316 = vmatpush1.msra.mxu0 0.0
  %317 = vmatprep.subr.mxu0 0.0
  %318 = vmatpush1.msra.mxu0 0.0
  %319 = vmatprep.subr.mxu0 0.0
  %320 = vmatpush1.msra.mxu0 0.0
  %321 = vmatprep.mubr.f32.mxu0 0.0
  %322 = vmatmul.mubr.f32.gmra.mrb[0].mxu0 %v139
  %v323 = vpop.f32.mrb[0].mxu0
  %v324 = vadd.f32 %v234, %v323
  %v325 = vpop.f32.mrb[0].mxu0
  %326 = vmatprep.mubr.f32.mxu0 0.0
  %327 = vmatmul.mubr.f32.gmra.mrb[0].mxu0 %v143
  %v328 = vpop.f32.mrb[0].mxu0
  %v329 = vadd.f32 %v239, %v328
  %v330 = vpop.f32.mrb[0].mxu0
  %331 = vmatprep.mubr.f32.mxu0 0.0
  %332 = vmatmul.mubr.f32.gmra.mrb[0].mxu0 %v147
  %v333 = vpop.f32.mrb[0].mxu0
  %v334 = vadd.f32 %v244, %v333
  %v335 = vpop.f32.mrb[0].mxu0
  %336 = vmatprep.mubr.f32.mxu0 0.0
  %337 = vmatmul.mubr.f32.gmra.mrb[0].mxu0 %v151
  %v338 = vpop.f32.mrb[0].mxu0
  %v339 = vadd.f32 %v249, %v338
  %v340 = vpop.f32.mrb[0].mxu0
  %341 = vmatprep.mubr.f32.mxu0 0.0
  %342 = vmatmul.mubr.f32.gmra.mrb[0].mxu0 %v150
  %v343 = vpop.f32.mrb[0].mxu0
  %v344 = vadd.f32 %v254, %v343
  %v345 = vpop.f32.mrb[0].mxu0
  %346 = vdwg.mxu0
  %v352 = vrot.slane %v324, 6
  %v353 = vrot.slane %v329, 6
  %v354 = vsel %vm35, %v352, %v353
  %v355 = vrot.slane %v334, 6
  %v356 = vsel %vm35, %v353, %v355
  %v357 = vrot.slane %v339, 6
  %v358 = vsel %vm35, %v355, %v357
  %v359 = vrot.slane %v344, 6
  %v360 = vsel %vm35, %v357, %v359
  %v366 = vsel %vm35, 0.0, %v352
  %v367 = vsel %vm44, %v360, 0.0
  %v368 = vmul.f32 %v366, %v23
  %v369 = vmul.f32 %v354, %v24
  %v370 = vmul.f32 %v356, %v25
  %v371 = vmul.f32 %v358, %v26
  %v372 = vmul.f32 %v367, %v27
  %v373 = vmax.f32 %v368, 0.0
  %v374 = vmax.f32 %v369, 0.0
  %v375 = vmax.f32 %v370, 0.0
  %v376 = vmax.f32 %v371, 0.0
  %v377 = vmax.f32 %v372, 0.0
  %v383 = vrot.slane %v373, 1
  %v384 = vrot.slane %v374, 1
  %v385 = vsel %vm60, %v383, %v384
  %v386 = vrot.slane %v375, 1
  %v387 = vsel %vm60, %v384, %v386
  %v388 = vrot.slane %v376, 1
  %v389 = vsel %vm60, %v386, %v388
  %v390 = vrot.slane %v377, 1
  %v391 = vsel %vm60, %v388, %v390
  %v392 = vrot.slane %v373, 2
  %v393 = vrot.slane %v374, 2
  %v394 = vsel %vm44, %v392, %v393
  %v395 = vrot.slane %v375, 2
  %v396 = vsel %vm44, %v393, %v395
  %v397 = vrot.slane %v376, 2
  %v398 = vsel %vm44, %v395, %v397
  %v399 = vrot.slane %v377, 2
  %v400 = vsel %vm44, %v397, %v399
  %s401 = scalar_lea.vmem %s1, 384
  %v402 = vld [vmem:[%s401] sm:$0xff]
  %v403 = vld [vmem:[%s401 + $0x8] sm:$0xff]
  %v404 = vld [vmem:[%s401 + $0x10] sm:$0xff]
  %v405 = vld [vmem:[%s401 + $0x18] sm:$0xff]
  %v406 = vld [vmem:[%s401 + $0x20] sm:$0xff]
  %v407 = vld [vmem:[%s401 + $0x28] sm:$0xff]
  %v408 = vld [vmem:[%s401 + $0x30] sm:$0xff]
  %v409 = vld [vmem:[%s401 + $0x38] sm:$0xff]
  %v410 = vld [vmem:[%s401 + $0x40] sm:$0xff]
  %v411 = vld [vmem:[%s401 + $0x48] sm:$0xff]
  %v412 = vld [vmem:[%s401 + $0x50] sm:$0xff]
  %v413 = vld [vmem:[%s401 + $0x58] sm:$0xff]
  %v414 = vld [vmem:[%s401 + $0x60] sm:$0xff]
  %v415 = vld [vmem:[%s401 + $0x68] sm:$0xff]
  %v416 = vld [vmem:[%s401 + $0x70] sm:$0xff]
  %v417 = vld [vmem:[%s401 + $0x78] sm:$0xff]
  %v418 = vld [vmem:[%s401 + $0x80] sm:$0xff]
  %v419 = vld [vmem:[%s401 + $0x88] sm:$0xff]
  %v420 = vld [vmem:[%s401 + $0x90] sm:$0xff]
  %v421 = vld [vmem:[%s401 + $0x98] sm:$0xff]
  %v422 = vld [vmem:[%s401 + $0xa0] sm:$0xff]
  %v423 = vld [vmem:[%s401 + $0xa8] sm:$0xff]
  %v424 = vld [vmem:[%s401 + $0xb0] sm:$0xff]
  %v425 = vld [vmem:[%s401 + $0xb8] sm:$0xff]
  %v426 = vld [vmem:[%s401 + $0xc0] sm:$0xff]
  %v427 = vld [vmem:[%s401 + $0xc8] sm:$0xff]
  %v428 = vld [vmem:[%s401 + $0xd0] sm:$0xff]
  %v429 = vld [vmem:[%s401 + $0xd8] sm:$0xff]
  %v430 = vld [vmem:[%s401 + $0xe0] sm:$0xff]
  %v431 = vld [vmem:[%s401 + $0xe8] sm:$0xff]
  %v432 = vld [vmem:[%s401 + $0xf0] sm:$0xff]
  %v433 = vld [vmem:[%s401 + $0xf8] sm:$0xff]
  %v434 = vld [vmem:[%s401 + $0x100] sm:$0xff]
  %v435 = vld [vmem:[%s401 + $0x108] sm:$0xff]
  %v436 = vld [vmem:[%s401 + $0x110] sm:$0xff]
  %v437 = vld [vmem:[%s401 + $0x118] sm:$0xff]
  %v438 = vld [vmem:[%s401 + $0x120] sm:$0xff]
  %v439 = vld [vmem:[%s401 + $0x128] sm:$0xff]
  %v440 = vld [vmem:[%s401 + $0x130] sm:$0xff]
  %v441 = vld [vmem:[%s401 + $0x138] sm:$0xff]
  %v442 = vld [vmem:[%s401 + $0x140] sm:$0xff]
  %v443 = vld [vmem:[%s401 + $0x148] sm:$0xff]
  %v444 = vld [vmem:[%s401 + $0x150] sm:$0xff]
  %v445 = vld [vmem:[%s401 + $0x158] sm:$0xff]
  %v446 = vld [vmem:[%s401 + $0x160] sm:$0xff]
  %v447 = vld [vmem:[%s401 + $0x168] sm:$0xff]
  %v448 = vld [vmem:[%s401 + $0x170] sm:$0xff]
  %v449 = vld [vmem:[%s401 + $0x178] sm:$0xff]
  %s450 = scalar_lea.vmem %s2, 1
  %v451 = vld [vmem:[%s450] sm:$0x1]
  %v453 = vlaneseq
  %v454 = vshrl.u32 %v453, 7
  %v455 = vsub.s32 0, %v454
  %v456 = vrot.slane %v451, %v455
  %v458 = vrot.slane %v385, 1
  %v459 = vrot.slane %v387, 1
  %v460 = vsel %vm60, %v458, %v459
  %v461 = vrot.slane %v394, 1
  %v462 = vrot.slane %v396, 1
  %v463 = vsel %vm60, %v461, %v462
  %v464 = vrot.slane %v389, 1
  %v465 = vsel %vm60, %v459, %v464
  %v466 = vrot.slane %v398, 1
  %v467 = vsel %vm60, %v462, %v466
  %v468 = vrot.slane %v391, 1
  %v469 = vsel %vm60, %v464, %v468
  %v470 = vrot.slane %v400, 1
  %v471 = vsel %vm60, %v466, %v470
  %v472 = vrot.slane %v390, 1
  %v473 = vsel %vm60, %v468, %v472
  %v474 = vrot.slane %v399, 1
  %v475 = vsel %vm60, %v470, %v474
  %491 = vmatprep.subr.mxu0 0.0
  %492 = vmatpush1.msra.mxu0 %v402
  %493 = vmatprep.subr.mxu0 0.0
  %494 = vmatpush1.msra.mxu0 %v403
  %495 = vmatprep.subr.mxu0 0.0
  %496 = vmatpush1.msra.mxu0 %v404
  %497 = vmatprep.subr.mxu0 0.0
  %498 = vmatpush1.msra.mxu0 %v405
  %499 = vmatprep.subr.mxu0 0.0
  %500 = vmatpush1.msra.mxu0 %v406
  %501 = vmatprep.subr.mxu0 0.0
  %502 = vmatpush1.msra.mxu0 %v407
  %503 = vmatprep.subr.mxu0 0.0
  %504 = vmatpush1.msra.mxu0 %v408
  %505 = vmatprep.subr.mxu0 0.0
  %506 = vmatpush1.msra.mxu0 %v409
  %507 = vmatprep.subr.mxu0 0.0
  %508 = vmatpush1.msra.mxu0 %v410
  %509 = vmatprep.subr.mxu0 0.0
  %510 = vmatpush1.msra.mxu0 %v411
  %511 = vmatprep.subr.mxu0 0.0
  %512 = vmatpush1.msra.mxu0 %v412
  %513 = vmatprep.subr.mxu0 0.0
  %514 = vmatpush1.msra.mxu0 %v413
  %515 = vmatprep.subr.mxu0 0.0
  %516 = vmatpush1.msra.mxu0 %v414
  %517 = vmatprep.subr.mxu0 0.0
  %518 = vmatpush1.msra.mxu0 %v415
  %519 = vmatprep.subr.mxu0 0.0
  %520 = vmatpush1.msra.mxu0 %v416
  %521 = vmatprep.subr.mxu0 0.0
  %522 = vmatpush1.msra.mxu0 %v417
  %523 = vmatprep.subr.mxu0 0.0
  %524 = vmatpush1.msra.mxu0 %v418
  %525 = vmatprep.subr.mxu0 0.0
  %526 = vmatpush1.msra.mxu0 %v419
  %527 = vmatprep.subr.mxu0 0.0
  %528 = vmatpush1.msra.mxu0 %v420
  %529 = vmatprep.subr.mxu0 0.0
  %530 = vmatpush1.msra.mxu0 %v421
  %531 = vmatprep.subr.mxu0 0.0
  %532 = vmatpush1.msra.mxu0 %v422
  %533 = vmatprep.subr.mxu0 0.0
  %534 = vmatpush1.msra.mxu0 %v423
  %535 = vmatprep.subr.mxu0 0.0
  %536 = vmatpush1.msra.mxu0 %v424
  %537 = vmatprep.subr.mxu0 0.0
  %538 = vmatpush1.msra.mxu0 %v425
  %539 = vmatprep.subr.mxu0 0.0
  %540 = vmatpush1.msra.mxu0 %v426
  %541 = vmatprep.subr.mxu0 0.0
  %542 = vmatpush1.msra.mxu0 %v427
  %543 = vmatprep.subr.mxu0 0.0
  %544 = vmatpush1.msra.mxu0 %v428
  %545 = vmatprep.subr.mxu0 0.0
  %546 = vmatpush1.msra.mxu0 %v429
  %547 = vmatprep.subr.mxu0 0.0
  %548 = vmatpush1.msra.mxu0 %v430
  %549 = vmatprep.subr.mxu0 0.0
  %550 = vmatpush1.msra.mxu0 %v431
  %551 = vmatprep.subr.mxu0 0.0
  %552 = vmatpush1.msra.mxu0 %v432
  %553 = vmatprep.subr.mxu0 0.0
  %554 = vmatpush1.msra.mxu0 %v433
  %555 = vmatprep.mubr.f32.mxu0 %v460
  %556 = vmatmul.mubr.f32.gmra.mrb[0].mxu0 %v385
  %v557 = vpop.f32.mrb[0].mxu0
  %v558 = vadd.f32 %v456, %v557
  %v559 = vpop.f32.mrb[0].mxu0
  %560 = vmatprep.mubr.f32.mxu0 %v465
  %561 = vmatmul.mubr.f32.gmra.mrb[0].mxu0 %v387
  %v562 = vpop.f32.mrb[0].mxu0
  %v563 = vadd.f32 %v456, %v562
  %v564 = vpop.f32.mrb[0].mxu0
  %565 = vmatprep.mubr.f32.mxu0 %v469
  %566 = vmatmul.mubr.f32.gmra.mrb[0].mxu0 %v389
  %v567 = vpop.f32.mrb[0].mxu0
  %v568 = vadd.f32 %v456, %v567
  %v569 = vpop.f32.mrb[0].mxu0
  %570 = vmatprep.mubr.f32.mxu0 %v473
  %571 = vmatmul.mubr.f32.gmra.mrb[0].mxu0 %v391
  %v572 = vpop.f32.mrb[0].mxu0
  %v573 = vadd.f32 %v456, %v572
  %v574 = vpop.f32.mrb[0].mxu0
  %575 = vmatprep.mubr.f32.mxu0 %v472
  %576 = vmatmul.mubr.f32.gmra.mrb[0].mxu0 %v390
  %v577 = vpop.f32.mrb[0].mxu0
  %v578 = vadd.f32 %v456, %v577
  %v579 = vpop.f32.mrb[0].mxu0
  %580 = vdwg.mxu0
  %581 = vmatprep.subr.mxu0 0.0
  %582 = vmatpush1.msra.mxu0 %v434
  %583 = vmatprep.subr.mxu0 0.0
  %584 = vmatpush1.msra.mxu0 %v435
  %585 = vmatprep.subr.mxu0 0.0
  %586 = vmatpush1.msra.mxu0 %v436
  %587 = vmatprep.subr.mxu0 0.0
  %588 = vmatpush1.msra.mxu0 %v437
  %589 = vmatprep.subr.mxu0 0.0
  %590 = vmatpush1.msra.mxu0 %v438
  %591 = vmatprep.subr.mxu0 0.0
  %592 = vmatpush1.msra.mxu0 %v439
  %593 = vmatprep.subr.mxu0 0.0
  %594 = vmatpush1.msra.mxu0 %v440
  %595 = vmatprep.subr.mxu0 0.0
  %596 = vmatpush1.msra.mxu0 %v441
  %597 = vmatprep.subr.mxu0 0.0
  %598 = vmatpush1.msra.mxu0 %v442
  %599 = vmatprep.subr.mxu0 0.0
  %600 = vmatpush1.msra.mxu0 %v443
  %601 = vmatprep.subr.mxu0 0.0
  %602 = vmatpush1.msra.mxu0 %v444
  %603 = vmatprep.subr.mxu0 0.0
  %604 = vmatpush1.msra.mxu0 %v445
  %605 = vmatprep.subr.mxu0 0.0
  %606 = vmatpush1.msra.mxu0 %v446
  %607 = vmatprep.subr.mxu0 0.0
  %608 = vmatpush1.msra.mxu0 %v447
  %609 = vmatprep.subr.mxu0 0.0
  %610 = vmatpush1.msra.mxu0 %v448
  %611 = vmatprep.subr.mxu0 0.0
  %612 = vmatpush1.msra.mxu0 %v449
  %613 = vmatprep.subr.mxu0 0.0
  %614 = vmatpush1.msra.mxu0 0.0
  %615 = vmatprep.subr.mxu0 0.0
  %616 = vmatpush1.msra.mxu0 0.0
  %617 = vmatprep.subr.mxu0 0.0
  %618 = vmatpush1.msra.mxu0 0.0
  %619 = vmatprep.subr.mxu0 0.0
  %620 = vmatpush1.msra.mxu0 0.0
  %621 = vmatprep.subr.mxu0 0.0
  %622 = vmatpush1.msra.mxu0 0.0
  %623 = vmatprep.subr.mxu0 0.0
  %624 = vmatpush1.msra.mxu0 0.0
  %625 = vmatprep.subr.mxu0 0.0
  %626 = vmatpush1.msra.mxu0 0.0
  %627 = vmatprep.subr.mxu0 0.0
  %628 = vmatpush1.msra.mxu0 0.0
  %629 = vmatprep.subr.mxu0 0.0
  %630 = vmatpush1.msra.mxu0 0.0
  %631 = vmatprep.subr.mxu0 0.0
  %632 = vmatpush1.msra.mxu0 0.0
  %633 = vmatprep.subr.mxu0 0.0
  %634 = vmatpush1.msra.mxu0 0.0
  %635 = vmatprep.subr.mxu0 0.0
  %636 = vmatpush1.msra.mxu0 0.0
  %637 = vmatprep.subr.mxu0 0.0
  %638 = vmatpush1.msra.mxu0 0.0
  %639 = vmatprep.subr.mxu0 0.0
  %640 = vmatpush1.msra.mxu0 0.0
  %641 = vmatprep.subr.mxu0 0.0
  %642 = vmatpush1.msra.mxu0 0.0
  %643 = vmatprep.subr.mxu0 0.0
  %644 = vmatpush1.msra.mxu0 0.0
  %645 = vmatprep.mubr.f32.mxu0 0.0
  %646 = vmatmul.mubr.f32.gmra.mrb[0].mxu0 %v463
  %v647 = vpop.f32.mrb[0].mxu0
  %v648 = vadd.f32 %v558, %v647
  %v649 = vpop.f32.mrb[0].mxu0
  %650 = vmatprep.mubr.f32.mxu0 0.0
  %651 = vmatmul.mubr.f32.gmra.mrb[0].mxu0 %v467
  %v652 = vpop.f32.mrb[0].mxu0
  %v653 = vadd.f32 %v563, %v652
  %v654 = vpop.f32.mrb[0].mxu0
  %655 = vmatprep.mubr.f32.mxu0 0.0
  %656 = vmatmul.mubr.f32.gmra.mrb[0].mxu0 %v471
  %v657 = vpop.f32.mrb[0].mxu0
  %v658 = vadd.f32 %v568, %v657
  %v659 = vpop.f32.mrb[0].mxu0
  %660 = vmatprep.mubr.f32.mxu0 0.0
  %661 = vmatmul.mubr.f32.gmra.mrb[0].mxu0 %v475
  %v662 = vpop.f32.mrb[0].mxu0
  %v663 = vadd.f32 %v573, %v662
  %v664 = vpop.f32.mrb[0].mxu0
  %665 = vmatprep.mubr.f32.mxu0 0.0
  %666 = vmatmul.mubr.f32.gmra.mrb[0].mxu0 %v474
  %v667 = vpop.f32.mrb[0].mxu0
  %v668 = vadd.f32 %v578, %v667
  %v669 = vpop.f32.mrb[0].mxu0
  %670 = vdwg.mxu0
  %v676 = vrot.slane %v648, 6
  %v677 = vrot.slane %v653, 6
  %v678 = vsel %vm35, %v676, %v677
  %v679 = vrot.slane %v658, 6
  %v680 = vsel %vm35, %v677, %v679
  %v681 = vrot.slane %v663, 6
  %v682 = vsel %vm35, %v679, %v681
  %v683 = vrot.slane %v668, 6
  %v684 = vsel %vm35, %v681, %v683
  %v690 = vsel %vm35, 0.0, %v676
  %v691 = vsel %vm44, %v684, 0.0
  %v692 = vmul.f32 %v690, %v23
  %v693 = vmul.f32 %v678, %v24
  %v694 = vmul.f32 %v680, %v25
  %v695 = vmul.f32 %v682, %v26
  %v696 = vmul.f32 %v691, %v27
  %v697 = vadd.f32 %v51, %v692
  %v698 = vadd.f32 %v38, %v693
  %v699 = vadd.f32 %v55, %v694
  %v700 = vadd.f32 %v47, %v695
  %v701 = vadd.f32 %v56, %v696
  %v707 = vrot.slane %v697, 1
  %v708 = vrot.slane %v698, 1
  %v709 = vsel %vm60, %v707, %v708
  %v710 = vrot.slane %v699, 1
  %v711 = vsel %vm60, %v708, %v710
  %v712 = vrot.slane %v700, 1
  %v713 = vsel %vm60, %v710, %v712
  %v714 = vrot.slane %v701, 1
  %v715 = vsel %vm60, %v712, %v714
  %v716 = vrot.slane %v697, 2
  %v717 = vrot.slane %v698, 2
  %v718 = vsel %vm44, %v716, %v717
  %v719 = vrot.slane %v699, 2
  %v720 = vsel %vm44, %v717, %v719
  %v721 = vrot.slane %v700, 2
  %v722 = vsel %vm44, %v719, %v721
  %v723 = vrot.slane %v701, 2
  %v724 = vsel %vm44, %v721, %v723
  %v725 = vrot.slane %v709, 1
  %v726 = vrot.slane %v711, 1
  %v727 = vsel %vm60, %v725, %v726
  %v728 = vrot.slane %v718, 1
  %v729 = vrot.slane %v720, 1
  %v730 = vsel %vm60, %v728, %v729
  %v731 = vrot.slane %v713, 1
  %v732 = vsel %vm60, %v726, %v731
  %v733 = vrot.slane %v722, 1
  %v734 = vsel %vm60, %v729, %v733
  %v735 = vrot.slane %v715, 1
  %v736 = vsel %vm60, %v731, %v735
  %v737 = vrot.slane %v724, 1
  %v738 = vsel %vm60, %v733, %v737
  %v739 = vrot.slane %v714, 1
  %v740 = vsel %vm60, %v735, %v739
  %v741 = vrot.slane %v723, 1
  %v742 = vsel %vm60, %v737, %v741
  %758 = vmatprep.subr.mxu0 0.0
  %759 = vmatpush1.msra.mxu0 %v79
  %760 = vmatprep.subr.mxu0 0.0
  %761 = vmatpush1.msra.mxu0 %v80
  %762 = vmatprep.subr.mxu0 0.0
  %763 = vmatpush1.msra.mxu0 %v81
  %764 = vmatprep.subr.mxu0 0.0
  %765 = vmatpush1.msra.mxu0 %v82
  %766 = vmatprep.subr.mxu0 0.0
  %767 = vmatpush1.msra.mxu0 %v83
  %768 = vmatprep.subr.mxu0 0.0
  %769 = vmatpush1.msra.mxu0 %v84
  %770 = vmatprep.subr.mxu0 0.0
  %771 = vmatpush1.msra.mxu0 %v85
  %772 = vmatprep.subr.mxu0 0.0
  %773 = vmatpush1.msra.mxu0 %v86
  %774 = vmatprep.subr.mxu0 0.0
  %775 = vmatpush1.msra.mxu0 %v87
  %776 = vmatprep.subr.mxu0 0.0
  %777 = vmatpush1.msra.mxu0 %v88
  %778 = vmatprep.subr.mxu0 0.0
  %779 = vmatpush1.msra.mxu0 %v89
  %780 = vmatprep.subr.mxu0 0.0
  %781 = vmatpush1.msra.mxu0 %v90
  %782 = vmatprep.subr.mxu0 0.0
  %783 = vmatpush1.msra.mxu0 %v91
  %784 = vmatprep.subr.mxu0 0.0
  %785 = vmatpush1.msra.mxu0 %v92
  %786 = vmatprep.subr.mxu0 0.0
  %787 = vmatpush1.msra.mxu0 %v93
  %788 = vmatprep.subr.mxu0 0.0
  %789 = vmatpush1.msra.mxu0 %v94
  %790 = vmatprep.subr.mxu0 0.0
  %791 = vmatpush1.msra.mxu0 %v95
  %792 = vmatprep.subr.mxu0 0.0
  %793 = vmatpush1.msra.mxu0 %v96
  %794 = vmatprep.subr.mxu0 0.0
  %795 = vmatpush1.msra.mxu0 %v97
  %796 = vmatprep.subr.mxu0 0.0
  %797 = vmatpush1.msra.mxu0 %v98
  %798 = vmatprep.subr.mxu0 0.0
  %799 = vmatpush1.msra.mxu0 %v99
  %800 = vmatprep.subr.mxu0 0.0
  %801 = vmatpush1.msra.mxu0 %v100
  %802 = vmatprep.subr.mxu0 0.0
  %803 = vmatpush1.msra.mxu0 %v101
  %804 = vmatprep.subr.mxu0 0.0
  %805 = vmatpush1.msra.mxu0 %v102
  %806 = vmatprep.subr.mxu0 0.0
  %807 = vmatpush1.msra.mxu0 %v103
  %808 = vmatprep.subr.mxu0 0.0
  %809 = vmatpush1.msra.mxu0 %v104
  %810 = vmatprep.subr.mxu0 0.0
  %811 = vmatpush1.msra.mxu0 %v105
  %812 = vmatprep.subr.mxu0 0.0
  %813 = vmatpush1.msra.mxu0 %v106
  %814 = vmatprep.subr.mxu0 0.0
  %815 = vmatpush1.msra.mxu0 %v107
  %816 = vmatprep.subr.mxu0 0.0
  %817 = vmatpush1.msra.mxu0 %v108
  %818 = vmatprep.subr.mxu0 0.0
  %819 = vmatpush1.msra.mxu0 %v109
  %820 = vmatprep.subr.mxu0 0.0
  %821 = vmatpush1.msra.mxu0 %v110
  %822 = vmatprep.mubr.f32.mxu0 %v727
  %823 = vmatmul.mubr.f32.gmra.mrb[0].mxu0 %v709
  %v824 = vpop.f32.mrb[0].mxu0
  %v825 = vadd.f32 %v132, %v824
  %v826 = vpop.f32.mrb[0].mxu0
  %827 = vmatprep.mubr.f32.mxu0 %v732
  %828 = vmatmul.mubr.f32.gmra.mrb[0].mxu0 %v711
  %v829 = vpop.f32.mrb[0].mxu0
  %v830 = vadd.f32 %v132, %v829
  %v831 = vpop.f32.mrb[0].mxu0
  %832 = vmatprep.mubr.f32.mxu0 %v736
  %833 = vmatmul.mubr.f32.gmra.mrb[0].mxu0 %v713
  %v834 = vpop.f32.mrb[0].mxu0
  %v835 = vadd.f32 %v132, %v834
  %v836 = vpop.f32.mrb[0].mxu0
  %837 = vmatprep.mubr.f32.mxu0 %v740
  %838 = vmatmul.mubr.f32.gmra.mrb[0].mxu0 %v715
  %v839 = vpop.f32.mrb[0].mxu0
  %v840 = vadd.f32 %v132, %v839
  %v841 = vpop.f32.mrb[0].mxu0
  %842 = vmatprep.mubr.f32.mxu0 %v739
  %843 = vmatmul.mubr.f32.gmra.mrb[0].mxu0 %v714
  %v844 = vpop.f32.mrb[0].mxu0
  %v845 = vadd.f32 %v132, %v844
  %v846 = vpop.f32.mrb[0].mxu0
  %847 = vdwg.mxu0
  %848 = vmatprep.subr.mxu0 0.0
  %849 = vmatpush1.msra.mxu0 %v111
  %850 = vmatprep.subr.mxu0 0.0
  %851 = vmatpush1.msra.mxu0 %v112
  %852 = vmatprep.subr.mxu0 0.0
  %853 = vmatpush1.msra.mxu0 %v113
  %854 = vmatprep.subr.mxu0 0.0
  %855 = vmatpush1.msra.mxu0 %v114
  %856 = vmatprep.subr.mxu0 0.0
  %857 = vmatpush1.msra.mxu0 %v115
  %858 = vmatprep.subr.mxu0 0.0
  %859 = vmatpush1.msra.mxu0 %v116
  %860 = vmatprep.subr.mxu0 0.0
  %861 = vmatpush1.msra.mxu0 %v117
  %862 = vmatprep.subr.mxu0 0.0
  %863 = vmatpush1.msra.mxu0 %v118
  %864 = vmatprep.subr.mxu0 0.0
  %865 = vmatpush1.msra.mxu0 %v119
  %866 = vmatprep.subr.mxu0 0.0
  %867 = vmatpush1.msra.mxu0 %v120
  %868 = vmatprep.subr.mxu0 0.0
  %869 = vmatpush1.msra.mxu0 %v121
  %870 = vmatprep.subr.mxu0 0.0
  %871 = vmatpush1.msra.mxu0 %v122
  %872 = vmatprep.subr.mxu0 0.0
  %873 = vmatpush1.msra.mxu0 %v123
  %874 = vmatprep.subr.mxu0 0.0
  %875 = vmatpush1.msra.mxu0 %v124
  %876 = vmatprep.subr.mxu0 0.0
  %877 = vmatpush1.msra.mxu0 %v125
  %878 = vmatprep.subr.mxu0 0.0
  %879 = vmatpush1.msra.mxu0 %v126
  %880 = vmatprep.subr.mxu0 0.0
  %881 = vmatpush1.msra.mxu0 0.0
  %882 = vmatprep.subr.mxu0 0.0
  %883 = vmatpush1.msra.mxu0 0.0
  %884 = vmatprep.subr.mxu0 0.0
  %885 = vmatpush1.msra.mxu0 0.0
  %886 = vmatprep.subr.mxu0 0.0
  %887 = vmatpush1.msra.mxu0 0.0
  %888 = vmatprep.subr.mxu0 0.0
  %889 = vmatpush1.msra.mxu0 0.0
  %890 = vmatprep.subr.mxu0 0.0
  %891 = vmatpush1.msra.mxu0 0.0
  %892 = vmatprep.subr.mxu0 0.0
  %893 = vmatpush1.msra.mxu0 0.0
  %894 = vmatprep.subr.mxu0 0.0
  %895 = vmatpush1.msra.mxu0 0.0
  %896 = vmatprep.subr.mxu0 0.0
  %897 = vmatpush1.msra.mxu0 0.0
  %898 = vmatprep.subr.mxu0 0.0
  %899 = vmatpush1.msra.mxu0 0.0
  %900 = vmatprep.subr.mxu0 0.0
  %901 = vmatpush1.msra.mxu0 0.0
  %902 = vmatprep.subr.mxu0 0.0
  %903 = vmatpush1.msra.mxu0 0.0
  %904 = vmatprep.subr.mxu0 0.0
  %905 = vmatpush1.msra.mxu0 0.0
  %906 = vmatprep.subr.mxu0 0.0
  %907 = vmatpush1.msra.mxu0 0.0
  %908 = vmatprep.subr.mxu0 0.0
  %909 = vmatpush1.msra.mxu0 0.0
  %910 = vmatprep.subr.mxu0 0.0
  %911 = vmatpush1.msra.mxu0 0.0
  %912 = vmatprep.mubr.f32.mxu0 0.0
  %913 = vmatmul.mubr.f32.gmra.mrb[0].mxu0 %v730
  %v914 = vpop.f32.mrb[0].mxu0
  %v915 = vadd.f32 %v825, %v914
  %v916 = vpop.f32.mrb[0].mxu0
  %917 = vmatprep.mubr.f32.mxu0 0.0
  %918 = vmatmul.mubr.f32.gmra.mrb[0].mxu0 %v734
  %v919 = vpop.f32.mrb[0].mxu0
  %v920 = vadd.f32 %v830, %v919
  %v921 = vpop.f32.mrb[0].mxu0
  %922 = vmatprep.mubr.f32.mxu0 0.0
  %923 = vmatmul.mubr.f32.gmra.mrb[0].mxu0 %v738
  %v924 = vpop.f32.mrb[0].mxu0
  %v925 = vadd.f32 %v835, %v924
  %v926 = vpop.f32.mrb[0].mxu0
  %927 = vmatprep.mubr.f32.mxu0 0.0
  %928 = vmatmul.mubr.f32.gmra.mrb[0].mxu0 %v742
  %v929 = vpop.f32.mrb[0].mxu0
  %v930 = vadd.f32 %v840, %v929
  %v931 = vpop.f32.mrb[0].mxu0
  %932 = vmatprep.mubr.f32.mxu0 0.0
  %933 = vmatmul.mubr.f32.gmra.mrb[0].mxu0 %v741
  %v934 = vpop.f32.mrb[0].mxu0
  %v935 = vadd.f32 %v845, %v934
  %v936 = vpop.f32.mrb[0].mxu0
  %937 = vdwg.mxu0
  %v943 = vrot.slane %v915, 6
  %v944 = vrot.slane %v920, 6
  %v945 = vsel %vm35, %v943, %v944
  %v946 = vrot.slane %v925, 6
  %v947 = vsel %vm35, %v944, %v946
  %v948 = vrot.slane %v930, 6
  %v949 = vsel %vm35, %v946, %v948
  %v950 = vrot.slane %v935, 6
  %v951 = vsel %vm35, %v948, %v950
  %v957 = vsel %vm35, 0.0, %v943
  %v958 = vsel %vm44, %v951, 0.0
  %v959 = vmul.f32 %v957, %v23
  %v960 = vmul.f32 %v945, %v24
  %v961 = vmul.f32 %v947, %v25
  %v962 = vmul.f32 %v949, %v26
  %v963 = vmul.f32 %v958, %v27
  %v964 = vmax.f32 %v959, 0.0
  %v965 = vmax.f32 %v960, 0.0
  %v966 = vmax.f32 %v961, 0.0
  %v967 = vmax.f32 %v962, 0.0
  %v968 = vmax.f32 %v963, 0.0
  %v974 = vrot.slane %v964, 1
  %v975 = vrot.slane %v965, 1
  %v976 = vsel %vm60, %v974, %v975
  %v977 = vrot.slane %v966, 1
  %v978 = vsel %vm60, %v975, %v977
  %v979 = vrot.slane %v967, 1
  %v980 = vsel %vm60, %v977, %v979
  %v981 = vrot.slane %v968, 1
  %v982 = vsel %vm60, %v979, %v981
  %v983 = vrot.slane %v964, 2
  %v984 = vrot.slane %v965, 2
  %v985 = vsel %vm44, %v983, %v984
  %v986 = vrot.slane %v966, 2
  %v987 = vsel %vm44, %v984, %v986
  %v988 = vrot.slane %v967, 2
  %v989 = vsel %vm44, %v986, %v988
  %v990 = vrot.slane %v968, 2
  %v991 = vsel %vm44, %v988, %v990
  %v992 = vrot.slane %v976, 1
  %v993 = vrot.slane %v978, 1
  %v994 = vsel %vm60, %v992, %v993
  %v995 = vrot.slane %v985, 1
  %v996 = vrot.slane %v987, 1
  %v997 = vsel %vm60, %v995, %v996
  %v998 = vrot.slane %v980, 1
  %v999 = vsel %vm60, %v993, %v998
  %v1000 = vrot.slane %v989, 1
  %v1001 = vsel %vm60, %v996, %v1000
  %v1002 = vrot.slane %v982, 1
  %v1003 = vsel %vm60, %v998, %v1002
  %v1004 = vrot.slane %v991, 1
  %v1005 = vsel %vm60, %v1000, %v1004
  %v1006 = vrot.slane %v981, 1
  %v1007 = vsel %vm60, %v1002, %v1006
  %v1008 = vrot.slane %v990, 1
  %v1009 = vsel %vm60, %v1004, %v1008
  %1025 = vmatprep.subr.mxu0 0.0
  %1026 = vmatpush1.msra.mxu0 %v402
  %1027 = vmatprep.subr.mxu0 0.0
  %1028 = vmatpush1.msra.mxu0 %v403
  %1029 = vmatprep.subr.mxu0 0.0
  %1030 = vmatpush1.msra.mxu0 %v404
  %1031 = vmatprep.subr.mxu0 0.0
  %1032 = vmatpush1.msra.mxu0 %v405
  %1033 = vmatprep.subr.mxu0 0.0
  %1034 = vmatpush1.msra.mxu0 %v406
  %1035 = vmatprep.subr.mxu0 0.0
  %1036 = vmatpush1.msra.mxu0 %v407
  %1037 = vmatprep.subr.mxu0 0.0
  %1038 = vmatpush1.msra.mxu0 %v408
  %1039 = vmatprep.subr.mxu0 0.0
  %1040 = vmatpush1.msra.mxu0 %v409
  %1041 = vmatprep.subr.mxu0 0.0
  %1042 = vmatpush1.msra.mxu0 %v410
  %1043 = vmatprep.subr.mxu0 0.0
  %1044 = vmatpush1.msra.mxu0 %v411
  %1045 = vmatprep.subr.mxu0 0.0
  %1046 = vmatpush1.msra.mxu0 %v412
  %1047 = vmatprep.subr.mxu0 0.0
  %1048 = vmatpush1.msra.mxu0 %v413
  %1049 = vmatprep.subr.mxu0 0.0
  %1050 = vmatpush1.msra.mxu0 %v414
  %1051 = vmatprep.subr.mxu0 0.0
  %1052 = vmatpush1.msra.mxu0 %v415
  %1053 = vmatprep.subr.mxu0 0.0
  %1054 = vmatpush1.msra.mxu0 %v416
  %1055 = vmatprep.subr.mxu0 0.0
  %1056 = vmatpush1.msra.mxu0 %v417
  %1057 = vmatprep.subr.mxu0 0.0
  %1058 = vmatpush1.msra.mxu0 %v418
  %1059 = vmatprep.subr.mxu0 0.0
  %1060 = vmatpush1.msra.mxu0 %v419
  %1061 = vmatprep.subr.mxu0 0.0
  %1062 = vmatpush1.msra.mxu0 %v420
  %1063 = vmatprep.subr.mxu0 0.0
  %1064 = vmatpush1.msra.mxu0 %v421
  %1065 = vmatprep.subr.mxu0 0.0
  %1066 = vmatpush1.msra.mxu0 %v422
  %1067 = vmatprep.subr.mxu0 0.0
  %1068 = vmatpush1.msra.mxu0 %v423
  %1069 = vmatprep.subr.mxu0 0.0
  %1070 = vmatpush1.msra.mxu0 %v424
  %1071 = vmatprep.subr.mxu0 0.0
  %1072 = vmatpush1.msra.mxu0 %v425
  %1073 = vmatprep.subr.mxu0 0.0
  %1074 = vmatpush1.msra.mxu0 %v426
  %1075 = vmatprep.subr.mxu0 0.0
  %1076 = vmatpush1.msra.mxu0 %v427
  %1077 = vmatprep.subr.mxu0 0.0
  %1078 = vmatpush1.msra.mxu0 %v428
  %1079 = vmatprep.subr.mxu0 0.0
  %1080 = vmatpush1.msra.mxu0 %v429
  %1081 = vmatprep.subr.mxu0 0.0
  %1082 = vmatpush1.msra.mxu0 %v430
  %1083 = vmatprep.subr.mxu0 0.0
  %1084 = vmatpush1.msra.mxu0 %v431
  %1085 = vmatprep.subr.mxu0 0.0
  %1086 = vmatpush1.msra.mxu0 %v432
  %1087 = vmatprep.subr.mxu0 0.0
  %1088 = vmatpush1.msra.mxu0 %v433
  %1089 = vmatprep.mubr.f32.mxu0 %v994
  %1090 = vmatmul.mubr.f32.gmra.mrb[0].mxu0 %v976
  %v1091 = vpop.f32.mrb[0].mxu0
  %v1092 = vadd.f32 %v456, %v1091
  %v1093 = vpop.f32.mrb[0].mxu0
  %1094 = vmatprep.mubr.f32.mxu0 %v999
  %1095 = vmatmul.mubr.f32.gmra.mrb[0].mxu0 %v978
  %v1096 = vpop.f32.mrb[0].mxu0
  %v1097 = vadd.f32 %v456, %v1096
  %v1098 = vpop.f32.mrb[0].mxu0
  %1099 = vmatprep.mubr.f32.mxu0 %v1003
  %1100 = vmatmul.mubr.f32.gmra.mrb[0].mxu0 %v980
  %v1101 = vpop.f32.mrb[0].mxu0
  %v1102 = vadd.f32 %v456, %v1101
  %v1103 = vpop.f32.mrb[0].mxu0
  %1104 = vmatprep.mubr.f32.mxu0 %v1007
  %1105 = vmatmul.mubr.f32.gmra.mrb[0].mxu0 %v982
  %v1106 = vpop.f32.mrb[0].mxu0
  %v1107 = vadd.f32 %v456, %v1106
  %v1108 = vpop.f32.mrb[0].mxu0
  %1109 = vmatprep.mubr.f32.mxu0 %v1006
  %1110 = vmatmul.mubr.f32.gmra.mrb[0].mxu0 %v981
  %v1111 = vpop.f32.mrb[0].mxu0
  %v1112 = vadd.f32 %v456, %v1111
  %v1113 = vpop.f32.mrb[0].mxu0
  %1114 = vdwg.mxu0
  %1115 = vmatprep.subr.mxu0 0.0
  %1116 = vmatpush1.msra.mxu0 %v434
  %1117 = vmatprep.subr.mxu0 0.0
  %1118 = vmatpush1.msra.mxu0 %v435
  %1119 = vmatprep.subr.mxu0 0.0
  %1120 = vmatpush1.msra.mxu0 %v436
  %1121 = vmatprep.subr.mxu0 0.0
  %1122 = vmatpush1.msra.mxu0 %v437
  %1123 = vmatprep.subr.mxu0 0.0
  %1124 = vmatpush1.msra.mxu0 %v438
  %1125 = vmatprep.subr.mxu0 0.0
  %1126 = vmatpush1.msra.mxu0 %v439
  %1127 = vmatprep.subr.mxu0 0.0
  %1128 = vmatpush1.msra.mxu0 %v440
  %1129 = vmatprep.subr.mxu0 0.0
  %1130 = vmatpush1.msra.mxu0 %v441
  %1131 = vmatprep.subr.mxu0 0.0
  %1132 = vmatpush1.msra.mxu0 %v442
  %1133 = vmatprep.subr.mxu0 0.0
  %1134 = vmatpush1.msra.mxu0 %v443
  %1135 = vmatprep.subr.mxu0 0.0
  %1136 = vmatpush1.msra.mxu0 %v444
  %1137 = vmatprep.subr.mxu0 0.0
  %1138 = vmatpush1.msra.mxu0 %v445
  %1139 = vmatprep.subr.mxu0 0.0
  %1140 = vmatpush1.msra.mxu0 %v446
  %1141 = vmatprep.subr.mxu0 0.0
  %1142 = vmatpush1.msra.mxu0 %v447
  %1143 = vmatprep.subr.mxu0 0.0
  %1144 = vmatpush1.msra.mxu0 %v448
  %1145 = vmatprep.subr.mxu0 0.0
  %1146 = vmatpush1.msra.mxu0 %v449
  %1147 = vmatprep.subr.mxu0 0.0
  %1148 = vmatpush1.msra.mxu0 0.0
  %1149 = vmatprep.subr.mxu0 0.0
  %1150 = vmatpush1.msra.mxu0 0.0
  %1151 = vmatprep.subr.mxu0 0.0
  %1152 = vmatpush1.msra.mxu0 0.0
  %1153 = vmatprep.subr.mxu0 0.0
  %1154 = vmatpush1.msra.mxu0 0.0
  %1155 = vmatprep.subr.mxu0 0.0
  %1156 = vmatpush1.msra.mxu0 0.0
  %1157 = vmatprep.subr.mxu0 0.0
  %1158 = vmatpush1.msra.mxu0 0.0
  %1159 = vmatprep.subr.mxu0 0.0
  %1160 = vmatpush1.msra.mxu0 0.0
  %1161 = vmatprep.subr.mxu0 0.0
  %1162 = vmatpush1.msra.mxu0 0.0
  %1163 = vmatprep.subr.mxu0 0.0
  %1164 = vmatpush1.msra.mxu0 0.0
  %1165 = vmatprep.subr.mxu0 0.0
  %1166 = vmatpush1.msra.mxu0 0.0
  %1167 = vmatprep.subr.mxu0 0.0
  %1168 = vmatpush1.msra.mxu0 0.0
  %1169 = vmatprep.subr.mxu0 0.0
  %1170 = vmatpush1.msra.mxu0 0.0
  %1171 = vmatprep.subr.mxu0 0.0
  %1172 = vmatpush1.msra.mxu0 0.0
  %1173 = vmatprep.subr.mxu0 0.0
  %1174 = vmatpush1.msra.mxu0 0.0
  %1175 = vmatprep.subr.mxu0 0.0
  %1176 = vmatpush1.msra.mxu0 0.0
  %1177 = vmatprep.subr.mxu0 0.0
  %1178 = vmatpush1.msra.mxu0 0.0
  %1179 = vmatprep.mubr.f32.mxu0 0.0
  %1180 = vmatmul.mubr.f32.gmra.mrb[0].mxu0 %v997
  %v1181 = vpop.f32.mrb[0].mxu0
  %v1182 = vadd.f32 %v1092, %v1181
  %v1183 = vpop.f32.mrb[0].mxu0
  %1184 = vmatprep.mubr.f32.mxu0 0.0
  %1185 = vmatmul.mubr.f32.gmra.mrb[0].mxu0 %v1001
  %v1186 = vpop.f32.mrb[0].mxu0
  %v1187 = vadd.f32 %v1097, %v1186
  %v1188 = vpop.f32.mrb[0].mxu0
  %1189 = vmatprep.mubr.f32.mxu0 0.0
  %1190 = vmatmul.mubr.f32.gmra.mrb[0].mxu0 %v1005
  %v1191 = vpop.f32.mrb[0].mxu0
  %v1192 = vadd.f32 %v1102, %v1191
  %v1193 = vpop.f32.mrb[0].mxu0
  %1194 = vmatprep.mubr.f32.mxu0 0.0
  %1195 = vmatmul.mubr.f32.gmra.mrb[0].mxu0 %v1009
  %v1196 = vpop.f32.mrb[0].mxu0
  %v1197 = vadd.f32 %v1107, %v1196
  %v1198 = vpop.f32.mrb[0].mxu0
  %1199 = vmatprep.mubr.f32.mxu0 0.0
  %1200 = vmatmul.mubr.f32.gmra.mrb[0].mxu0 %v1008
  %v1201 = vpop.f32.mrb[0].mxu0
  %v1202 = vadd.f32 %v1112, %v1201
  %v1203 = vpop.f32.mrb[0].mxu0
  %1204 = vdwg.mxu0
  %v1210 = vrot.slane %v1182, 6
  %v1211 = vrot.slane %v1187, 6
  %v1212 = vsel %vm35, %v1210, %v1211
  %v1213 = vrot.slane %v1192, 6
  %v1214 = vsel %vm35, %v1211, %v1213
  %v1215 = vrot.slane %v1197, 6
  %v1216 = vsel %vm35, %v1213, %v1215
  %v1217 = vrot.slane %v1202, 6
  %v1218 = vsel %vm35, %v1215, %v1217
  %v1224 = vsel %vm35, 0.0, %v1210
  %v1225 = vsel %vm44, %v1218, 0.0
  %v1226 = vmul.f32 %v1224, %v23
  %v1227 = vmul.f32 %v1212, %v24
  %v1228 = vmul.f32 %v1214, %v25
  %v1229 = vmul.f32 %v1216, %v26
  %v1230 = vmul.f32 %v1225, %v27
  %v1231 = vadd.f32 %v697, %v1226
  %v1232 = vadd.f32 %v698, %v1227
  %v1233 = vadd.f32 %v699, %v1228
  %v1234 = vadd.f32 %v700, %v1229
  %v1235 = vadd.f32 %v701, %v1230
  %v1241 = vrot.slane %v1231, 1
  %v1242 = vrot.slane %v1232, 1
  %v1243 = vsel %vm60, %v1241, %v1242
  %v1244 = vrot.slane %v1233, 1
  %v1245 = vsel %vm60, %v1242, %v1244
  %v1246 = vrot.slane %v1234, 1
  %v1247 = vsel %vm60, %v1244, %v1246
  %v1248 = vrot.slane %v1235, 1
  %v1249 = vsel %vm60, %v1246, %v1248
  %v1250 = vrot.slane %v1231, 2
  %v1251 = vrot.slane %v1232, 2
  %v1252 = vsel %vm44, %v1250, %v1251
  %v1253 = vrot.slane %v1233, 2
  %v1254 = vsel %vm44, %v1251, %v1253
  %v1255 = vrot.slane %v1234, 2
  %v1256 = vsel %vm44, %v1253, %v1255
  %v1257 = vrot.slane %v1235, 2
  %v1258 = vsel %vm44, %v1255, %v1257
  %v1259 = vrot.slane %v1243, 1
  %v1260 = vrot.slane %v1245, 1
  %v1261 = vsel %vm60, %v1259, %v1260
  %v1262 = vrot.slane %v1252, 1
  %v1263 = vrot.slane %v1254, 1
  %v1264 = vsel %vm60, %v1262, %v1263
  %v1265 = vrot.slane %v1247, 1
  %v1266 = vsel %vm60, %v1260, %v1265
  %v1267 = vrot.slane %v1256, 1
  %v1268 = vsel %vm60, %v1263, %v1267
  %v1269 = vrot.slane %v1249, 1
  %v1270 = vsel %vm60, %v1265, %v1269
  %v1271 = vrot.slane %v1258, 1
  %v1272 = vsel %vm60, %v1267, %v1271
  %v1273 = vrot.slane %v1248, 1
  %v1274 = vsel %vm60, %v1269, %v1273
  %v1275 = vrot.slane %v1257, 1
  %v1276 = vsel %vm60, %v1271, %v1275
  %1292 = vmatprep.subr.mxu0 0.0
  %1293 = vmatpush1.msra.mxu0 %v79
  %1294 = vmatprep.subr.mxu0 0.0
  %1295 = vmatpush1.msra.mxu0 %v80
  %1296 = vmatprep.subr.mxu0 0.0
  %1297 = vmatpush1.msra.mxu0 %v81
  %1298 = vmatprep.subr.mxu0 0.0
  %1299 = vmatpush1.msra.mxu0 %v82
  %1300 = vmatprep.subr.mxu0 0.0
  %1301 = vmatpush1.msra.mxu0 %v83
  %1302 = vmatprep.subr.mxu0 0.0
  %1303 = vmatpush1.msra.mxu0 %v84
  %1304 = vmatprep.subr.mxu0 0.0
  %1305 = vmatpush1.msra.mxu0 %v85
  %1306 = vmatprep.subr.mxu0 0.0
  %1307 = vmatpush1.msra.mxu0 %v86
  %1308 = vmatprep.subr.mxu0 0.0
  %1309 = vmatpush1.msra.mxu0 %v87
  %1310 = vmatprep.subr.mxu0 0.0
  %1311 = vmatpush1.msra.mxu0 %v88
  %1312 = vmatprep.subr.mxu0 0.0
  %1313 = vmatpush1.msra.mxu0 %v89
  %1314 = vmatprep.subr.mxu0 0.0
  %1315 = vmatpush1.msra.mxu0 %v90
  %1316 = vmatprep.subr.mxu0 0.0
  %1317 = vmatpush1.msra.mxu0 %v91
  %1318 = vmatprep.subr.mxu0 0.0
  %1319 = vmatpush1.msra.mxu0 %v92
  %1320 = vmatprep.subr.mxu0 0.0
  %1321 = vmatpush1.msra.mxu0 %v93
  %1322 = vmatprep.subr.mxu0 0.0
  %1323 = vmatpush1.msra.mxu0 %v94
  %1324 = vmatprep.subr.mxu0 0.0
  %1325 = vmatpush1.msra.mxu0 %v95
  %1326 = vmatprep.subr.mxu0 0.0
  %1327 = vmatpush1.msra.mxu0 %v96
  %1328 = vmatprep.subr.mxu0 0.0
  %1329 = vmatpush1.msra.mxu0 %v97
  %1330 = vmatprep.subr.mxu0 0.0
  %1331 = vmatpush1.msra.mxu0 %v98
  %1332 = vmatprep.subr.mxu0 0.0
  %1333 = vmatpush1.msra.mxu0 %v99
  %1334 = vmatprep.subr.mxu0 0.0
  %1335 = vmatpush1.msra.mxu0 %v100
  %1336 = vmatprep.subr.mxu0 0.0
  %1337 = vmatpush1.msra.mxu0 %v101
  %1338 = vmatprep.subr.mxu0 0.0
  %1339 = vmatpush1.msra.mxu0 %v102
  %1340 = vmatprep.subr.mxu0 0.0
  %1341 = vmatpush1.msra.mxu0 %v103
  %1342 = vmatprep.subr.mxu0 0.0
  %1343 = vmatpush1.msra.mxu0 %v104
  %1344 = vmatprep.subr.mxu0 0.0
  %1345 = vmatpush1.msra.mxu0 %v105
  %1346 = vmatprep.subr.mxu0 0.0
  %1347 = vmatpush1.msra.mxu0 %v106
  %1348 = vmatprep.subr.mxu0 0.0
  %1349 = vmatpush1.msra.mxu0 %v107
  %1350 = vmatprep.subr.mxu0 0.0
  %1351 = vmatpush1.msra.mxu0 %v108
  %1352 = vmatprep.subr.mxu0 0.0
  %1353 = vmatpush1.msra.mxu0 %v109
  %1354 = vmatprep.subr.mxu0 0.0
  %1355 = vmatpush1.msra.mxu0 %v110
  %1356 = vmatprep.mubr.f32.mxu0 %v1261
  %1357 = vmatmul.mubr.f32.gmra.mrb[0].mxu0 %v1243
  %v1358 = vpop.f32.mrb[0].mxu0
  %v1359 = vadd.f32 %v132, %v1358
  %v1360 = vpop.f32.mrb[0].mxu0
  %1361 = vmatprep.mubr.f32.mxu0 %v1266
  %1362 = vmatmul.mubr.f32.gmra.mrb[0].mxu0 %v1245
  %v1363 = vpop.f32.mrb[0].mxu0
  %v1364 = vadd.f32 %v132, %v1363
  %v1365 = vpop.f32.mrb[0].mxu0
  %1366 = vmatprep.mubr.f32.mxu0 %v1270
  %1367 = vmatmul.mubr.f32.gmra.mrb[0].mxu0 %v1247
  %v1368 = vpop.f32.mrb[0].mxu0
  %v1369 = vadd.f32 %v132, %v1368
  %v1370 = vpop.f32.mrb[0].mxu0
  %1371 = vmatprep.mubr.f32.mxu0 %v1274
  %1372 = vmatmul.mubr.f32.gmra.mrb[0].mxu0 %v1249
  %v1373 = vpop.f32.mrb[0].mxu0
  %v1374 = vadd.f32 %v132, %v1373
  %v1375 = vpop.f32.mrb[0].mxu0
  %1376 = vmatprep.mubr.f32.mxu0 %v1273
  %1377 = vmatmul.mubr.f32.gmra.mrb[0].mxu0 %v1248
  %v1378 = vpop.f32.mrb[0].mxu0
  %v1379 = vadd.f32 %v132, %v1378
  %v1380 = vpop.f32.mrb[0].mxu0
  %1381 = vdwg.mxu0
  %1382 = vmatprep.subr.mxu0 0.0
  %1383 = vmatpush1.msra.mxu0 %v111
  %1384 = vmatprep.subr.mxu0 0.0
  %1385 = vmatpush1.msra.mxu0 %v112
  %1386 = vmatprep.subr.mxu0 0.0
  %1387 = vmatpush1.msra.mxu0 %v113
  %1388 = vmatprep.subr.mxu0 0.0
  %1389 = vmatpush1.msra.mxu0 %v114
  %1390 = vmatprep.subr.mxu0 0.0
  %1391 = vmatpush1.msra.mxu0 %v115
  %1392 = vmatprep.subr.mxu0 0.0
  %1393 = vmatpush1.msra.mxu0 %v116
  %1394 = vmatprep.subr.mxu0 0.0
  %1395 = vmatpush1.msra.mxu0 %v117
  %1396 = vmatprep.subr.mxu0 0.0
  %1397 = vmatpush1.msra.mxu0 %v118
  %1398 = vmatprep.subr.mxu0 0.0
  %1399 = vmatpush1.msra.mxu0 %v119
  %1400 = vmatprep.subr.mxu0 0.0
  %1401 = vmatpush1.msra.mxu0 %v120
  %1402 = vmatprep.subr.mxu0 0.0
  %1403 = vmatpush1.msra.mxu0 %v121
  %1404 = vmatprep.subr.mxu0 0.0
  %1405 = vmatpush1.msra.mxu0 %v122
  %1406 = vmatprep.subr.mxu0 0.0
  %1407 = vmatpush1.msra.mxu0 %v123
  %1408 = vmatprep.subr.mxu0 0.0
  %1409 = vmatpush1.msra.mxu0 %v124
  %1410 = vmatprep.subr.mxu0 0.0
  %1411 = vmatpush1.msra.mxu0 %v125
  %1412 = vmatprep.subr.mxu0 0.0
  %1413 = vmatpush1.msra.mxu0 %v126
  %1414 = vmatprep.subr.mxu0 0.0
  %1415 = vmatpush1.msra.mxu0 0.0
  %1416 = vmatprep.subr.mxu0 0.0
  %1417 = vmatpush1.msra.mxu0 0.0
  %1418 = vmatprep.subr.mxu0 0.0
  %1419 = vmatpush1.msra.mxu0 0.0
  %1420 = vmatprep.subr.mxu0 0.0
  %1421 = vmatpush1.msra.mxu0 0.0
  %1422 = vmatprep.subr.mxu0 0.0
  %1423 = vmatpush1.msra.mxu0 0.0
  %1424 = vmatprep.subr.mxu0 0.0
  %1425 = vmatpush1.msra.mxu0 0.0
  %1426 = vmatprep.subr.mxu0 0.0
  %1427 = vmatpush1.msra.mxu0 0.0
  %1428 = vmatprep.subr.mxu0 0.0
  %1429 = vmatpush1.msra.mxu0 0.0
  %1430 = vmatprep.subr.mxu0 0.0
  %1431 = vmatpush1.msra.mxu0 0.0
  %1432 = vmatprep.subr.mxu0 0.0
  %1433 = vmatpush1.msra.mxu0 0.0
  %1434 = vmatprep.subr.mxu0 0.0
  %1435 = vmatpush1.msra.mxu0 0.0
  %1436 = vmatprep.subr.mxu0 0.0
  %1437 = vmatpush1.msra.mxu0 0.0
  %1438 = vmatprep.subr.mxu0 0.0
  %1439 = vmatpush1.msra.mxu0 0.0
  %1440 = vmatprep.subr.mxu0 0.0
  %1441 = vmatpush1.msra.mxu0 0.0
  %1442 = vmatprep.subr.mxu0 0.0
  %1443 = vmatpush1.msra.mxu0 0.0
  %1444 = vmatprep.subr.mxu0 0.0
  %1445 = vmatpush1.msra.mxu0 0.0
  %1446 = vmatprep.mubr.f32.mxu0 0.0
  %1447 = vmatmul.mubr.f32.gmra.mrb[0].mxu0 %v1264
  %v1448 = vpop.f32.mrb[0].mxu0
  %v1449 = vadd.f32 %v1359, %v1448
  %v1450 = vpop.f32.mrb[0].mxu0
  %1451 = vmatprep.mubr.f32.mxu0 0.0
  %1452 = vmatmul.mubr.f32.gmra.mrb[0].mxu0 %v1268
  %v1453 = vpop.f32.mrb[0].mxu0
  %v1454 = vadd.f32 %v1364, %v1453
  %v1455 = vpop.f32.mrb[0].mxu0
  %1456 = vmatprep.mubr.f32.mxu0 0.0
  %1457 = vmatmul.mubr.f32.gmra.mrb[0].mxu0 %v1272
  %v1458 = vpop.f32.mrb[0].mxu0
  %v1459 = vadd.f32 %v1369, %v1458
  %v1460 = vpop.f32.mrb[0].mxu0
  %1461 = vmatprep.mubr.f32.mxu0 0.0
  %1462 = vmatmul.mubr.f32.gmra.mrb[0].mxu0 %v1276
  %v1463 = vpop.f32.mrb[0].mxu0
  %v1464 = vadd.f32 %v1374, %v1463
  %v1465 = vpop.f32.mrb[0].mxu0
  %1466 = vmatprep.mubr.f32.mxu0 0.0
  %1467 = vmatmul.mubr.f32.gmra.mrb[0].mxu0 %v1275
  %v1468 = vpop.f32.mrb[0].mxu0
  %v1469 = vadd.f32 %v1379, %v1468
  %v1470 = vpop.f32.mrb[0].mxu0
  %1471 = vdwg.mxu0
  %v1477 = vrot.slane %v1449, 6
  %v1478 = vrot.slane %v1454, 6
  %v1479 = vsel %vm35, %v1477, %v1478
  %v1480 = vrot.slane %v1459, 6
  %v1481 = vsel %vm35, %v1478, %v1480
  %v1482 = vrot.slane %v1464, 6
  %v1483 = vsel %vm35, %v1480, %v1482
  %v1484 = vrot.slane %v1469, 6
  %v1485 = vsel %vm35, %v1482, %v1484
  %v1491 = vsel %vm35, 0.0, %v1477
  %v1492 = vsel %vm44, %v1485, 0.0
  %v1493 = vmul.f32 %v1491, %v23
  %v1494 = vmul.f32 %v1479, %v24
  %v1495 = vmul.f32 %v1481, %v25
  %v1496 = vmul.f32 %v1483, %v26
  %v1497 = vmul.f32 %v1492, %v27
  %v1498 = vmax.f32 %v1493, 0.0
  %v1499 = vmax.f32 %v1494, 0.0
  %v1500 = vmax.f32 %v1495, 0.0
  %v1501 = vmax.f32 %v1496, 0.0
  %v1502 = vmax.f32 %v1497, 0.0
  %v1508 = vrot.slane %v1498, 1
  %v1509 = vrot.slane %v1499, 1
  %v1510 = vsel %vm60, %v1508, %v1509
  %v1511 = vrot.slane %v1500, 1
  %v1512 = vsel %vm60, %v1509, %v1511
  %v1513 = vrot.slane %v1501, 1
  %v1514 = vsel %vm60, %v1511, %v1513
  %v1515 = vrot.slane %v1502, 1
  %v1516 = vsel %vm60, %v1513, %v1515
  %v1517 = vrot.slane %v1498, 2
  %v1518 = vrot.slane %v1499, 2
  %v1519 = vsel %vm44, %v1517, %v1518
  %v1520 = vrot.slane %v1500, 2
  %v1521 = vsel %vm44, %v1518, %v1520
  %v1522 = vrot.slane %v1501, 2
  %v1523 = vsel %vm44, %v1520, %v1522
  %v1524 = vrot.slane %v1502, 2
  %v1525 = vsel %vm44, %v1522, %v1524
  %v1526 = vrot.slane %v1510, 1
  %v1527 = vrot.slane %v1512, 1
  %v1528 = vsel %vm60, %v1526, %v1527
  %v1529 = vrot.slane %v1519, 1
  %v1530 = vrot.slane %v1521, 1
  %v1531 = vsel %vm60, %v1529, %v1530
  %v1532 = vrot.slane %v1514, 1
  %v1533 = vsel %vm60, %v1527, %v1532
  %v1534 = vrot.slane %v1523, 1
  %v1535 = vsel %vm60, %v1530, %v1534
  %v1536 = vrot.slane %v1516, 1
  %v1537 = vsel %vm60, %v1532, %v1536
  %v1538 = vrot.slane %v1525, 1
  %v1539 = vsel %vm60, %v1534, %v1538
  %v1540 = vrot.slane %v1515, 1
  %v1541 = vsel %vm60, %v1536, %v1540
  %v1542 = vrot.slane %v1524, 1
  %v1543 = vsel %vm60, %v1538, %v1542
  %1559 = vmatprep.subr.mxu0 0.0
  %1560 = vmatpush1.msra.mxu0 %v402
  %1561 = vmatprep.subr.mxu0 0.0
  %1562 = vmatpush1.msra.mxu0 %v403
  %1563 = vmatprep.subr.mxu0 0.0
  %1564 = vmatpush1.msra.mxu0 %v404
  %1565 = vmatprep.subr.mxu0 0.0
  %1566 = vmatpush1.msra.mxu0 %v405
  %1567 = vmatprep.subr.mxu0 0.0
  %1568 = vmatpush1.msra.mxu0 %v406
  %1569 = vmatprep.subr.mxu0 0.0
  %1570 = vmatpush1.msra.mxu0 %v407
  %1571 = vmatprep.subr.mxu0 0.0
  %1572 = vmatpush1.msra.mxu0 %v408
  %1573 = vmatprep.subr.mxu0 0.0
  %1574 = vmatpush1.msra.mxu0 %v409
  %1575 = vmatprep.subr.mxu0 0.0
  %1576 = vmatpush1.msra.mxu0 %v410
  %1577 = vmatprep.subr.mxu0 0.0
  %1578 = vmatpush1.msra.mxu0 %v411
  %1579 = vmatprep.subr.mxu0 0.0
  %1580 = vmatpush1.msra.mxu0 %v412
  %1581 = vmatprep.subr.mxu0 0.0
  %1582 = vmatpush1.msra.mxu0 %v413
  %1583 = vmatprep.subr.mxu0 0.0
  %1584 = vmatpush1.msra.mxu0 %v414
  %1585 = vmatprep.subr.mxu0 0.0
  %1586 = vmatpush1.msra.mxu0 %v415
  %1587 = vmatprep.subr.mxu0 0.0
  %1588 = vmatpush1.msra.mxu0 %v416
  %1589 = vmatprep.subr.mxu0 0.0
  %1590 = vmatpush1.msra.mxu0 %v417
  %1591 = vmatprep.subr.mxu0 0.0
  %1592 = vmatpush1.msra.mxu0 %v418
  %1593 = vmatprep.subr.mxu0 0.0
  %1594 = vmatpush1.msra.mxu0 %v419
  %1595 = vmatprep.subr.mxu0 0.0
  %1596 = vmatpush1.msra.mxu0 %v420
  %1597 = vmatprep.subr.mxu0 0.0
  %1598 = vmatpush1.msra.mxu0 %v421
  %1599 = vmatprep.subr.mxu0 0.0
  %1600 = vmatpush1.msra.mxu0 %v422
  %1601 = vmatprep.subr.mxu0 0.0
  %1602 = vmatpush1.msra.mxu0 %v423
  %1603 = vmatprep.subr.mxu0 0.0
  %1604 = vmatpush1.msra.mxu0 %v424
  %1605 = vmatprep.subr.mxu0 0.0
  %1606 = vmatpush1.msra.mxu0 %v425
  %1607 = vmatprep.subr.mxu0 0.0
  %1608 = vmatpush1.msra.mxu0 %v426
  %1609 = vmatprep.subr.mxu0 0.0
  %1610 = vmatpush1.msra.mxu0 %v427
  %1611 = vmatprep.subr.mxu0 0.0
  %1612 = vmatpush1.msra.mxu0 %v428
  %1613 = vmatprep.subr.mxu0 0.0
  %1614 = vmatpush1.msra.mxu0 %v429
  %1615 = vmatprep.subr.mxu0 0.0
  %1616 = vmatpush1.msra.mxu0 %v430
  %1617 = vmatprep.subr.mxu0 0.0
  %1618 = vmatpush1.msra.mxu0 %v431
  %1619 = vmatprep.subr.mxu0 0.0
  %1620 = vmatpush1.msra.mxu0 %v432
  %1621 = vmatprep.subr.mxu0 0.0
  %1622 = vmatpush1.msra.mxu0 %v433
  %1623 = vmatprep.mubr.f32.mxu0 %v1528
  %1624 = vmatmul.mubr.f32.gmra.mrb[0].mxu0 %v1510
  %v1625 = vpop.f32.mrb[0].mxu0
  %v1626 = vadd.f32 %v456, %v1625
  %v1627 = vpop.f32.mrb[0].mxu0
  %1628 = vmatprep.mubr.f32.mxu0 %v1533
  %1629 = vmatmul.mubr.f32.gmra.mrb[0].mxu0 %v1512
  %v1630 = vpop.f32.mrb[0].mxu0
  %v1631 = vadd.f32 %v456, %v1630
  %v1632 = vpop.f32.mrb[0].mxu0
  %1633 = vmatprep.mubr.f32.mxu0 %v1537
  %1634 = vmatmul.mubr.f32.gmra.mrb[0].mxu0 %v1514
  %v1635 = vpop.f32.mrb[0].mxu0
  %v1636 = vadd.f32 %v456, %v1635
  %v1637 = vpop.f32.mrb[0].mxu0
  %1638 = vmatprep.mubr.f32.mxu0 %v1541
  %1639 = vmatmul.mubr.f32.gmra.mrb[0].mxu0 %v1516
  %v1640 = vpop.f32.mrb[0].mxu0
  %v1641 = vadd.f32 %v456, %v1640
  %v1642 = vpop.f32.mrb[0].mxu0
  %1643 = vmatprep.mubr.f32.mxu0 %v1540
  %1644 = vmatmul.mubr.f32.gmra.mrb[0].mxu0 %v1515
  %v1645 = vpop.f32.mrb[0].mxu0
  %v1646 = vadd.f32 %v456, %v1645
  %v1647 = vpop.f32.mrb[0].mxu0
  %1648 = vdwg.mxu0
  %1649 = vmatprep.subr.mxu0 0.0
  %1650 = vmatpush1.msra.mxu0 %v434
  %1651 = vmatprep.subr.mxu0 0.0
  %1652 = vmatpush1.msra.mxu0 %v435
  %1653 = vmatprep.subr.mxu0 0.0
  %1654 = vmatpush1.msra.mxu0 %v436
  %1655 = vmatprep.subr.mxu0 0.0
  %1656 = vmatpush1.msra.mxu0 %v437
  %1657 = vmatprep.subr.mxu0 0.0
  %1658 = vmatpush1.msra.mxu0 %v438
  %1659 = vmatprep.subr.mxu0 0.0
  %1660 = vmatpush1.msra.mxu0 %v439
  %1661 = vmatprep.subr.mxu0 0.0
  %1662 = vmatpush1.msra.mxu0 %v440
  %1663 = vmatprep.subr.mxu0 0.0
  %1664 = vmatpush1.msra.mxu0 %v441
  %1665 = vmatprep.subr.mxu0 0.0
  %1666 = vmatpush1.msra.mxu0 %v442
  %1667 = vmatprep.subr.mxu0 0.0
  %1668 = vmatpush1.msra.mxu0 %v443
  %1669 = vmatprep.subr.mxu0 0.0
  %1670 = vmatpush1.msra.mxu0 %v444
  %1671 = vmatprep.subr.mxu0 0.0
  %1672 = vmatpush1.msra.mxu0 %v445
  %1673 = vmatprep.subr.mxu0 0.0
  %1674 = vmatpush1.msra.mxu0 %v446
  %1675 = vmatprep.subr.mxu0 0.0
  %1676 = vmatpush1.msra.mxu0 %v447
  %1677 = vmatprep.subr.mxu0 0.0
  %1678 = vmatpush1.msra.mxu0 %v448
  %1679 = vmatprep.subr.mxu0 0.0
  %1680 = vmatpush1.msra.mxu0 %v449
  %1681 = vmatprep.subr.mxu0 0.0
  %1682 = vmatpush1.msra.mxu0 0.0
  %1683 = vmatprep.subr.mxu0 0.0
  %1684 = vmatpush1.msra.mxu0 0.0
  %1685 = vmatprep.subr.mxu0 0.0
  %1686 = vmatpush1.msra.mxu0 0.0
  %1687 = vmatprep.subr.mxu0 0.0
  %1688 = vmatpush1.msra.mxu0 0.0
  %1689 = vmatprep.subr.mxu0 0.0
  %1690 = vmatpush1.msra.mxu0 0.0
  %1691 = vmatprep.subr.mxu0 0.0
  %1692 = vmatpush1.msra.mxu0 0.0
  %1693 = vmatprep.subr.mxu0 0.0
  %1694 = vmatpush1.msra.mxu0 0.0
  %1695 = vmatprep.subr.mxu0 0.0
  %1696 = vmatpush1.msra.mxu0 0.0
  %1697 = vmatprep.subr.mxu0 0.0
  %1698 = vmatpush1.msra.mxu0 0.0
  %1699 = vmatprep.subr.mxu0 0.0
  %1700 = vmatpush1.msra.mxu0 0.0
  %1701 = vmatprep.subr.mxu0 0.0
  %1702 = vmatpush1.msra.mxu0 0.0
  %1703 = vmatprep.subr.mxu0 0.0
  %1704 = vmatpush1.msra.mxu0 0.0
  %1705 = vmatprep.subr.mxu0 0.0
  %1706 = vmatpush1.msra.mxu0 0.0
  %1707 = vmatprep.subr.mxu0 0.0
  %1708 = vmatpush1.msra.mxu0 0.0
  %1709 = vmatprep.subr.mxu0 0.0
  %1710 = vmatpush1.msra.mxu0 0.0
  %1711 = vmatprep.subr.mxu0 0.0
  %1712 = vmatpush1.msra.mxu0 0.0
  %1713 = vmatprep.mubr.f32.mxu0 0.0
  %1714 = vmatmul.mubr.f32.gmra.mrb[0].mxu0 %v1531
  %v1715 = vpop.f32.mrb[0].mxu0
  %v1716 = vadd.f32 %v1626, %v1715
  %v1717 = vpop.f32.mrb[0].mxu0
  %1718 = vmatprep.mubr.f32.mxu0 0.0
  %1719 = vmatmul.mubr.f32.gmra.mrb[0].mxu0 %v1535
  %v1720 = vpop.f32.mrb[0].mxu0
  %v1721 = vadd.f32 %v1631, %v1720
  %v1722 = vpop.f32.mrb[0].mxu0
  %1723 = vmatprep.mubr.f32.mxu0 0.0
  %1724 = vmatmul.mubr.f32.gmra.mrb[0].mxu0 %v1539
  %v1725 = vpop.f32.mrb[0].mxu0
  %v1726 = vadd.f32 %v1636, %v1725
  %v1727 = vpop.f32.mrb[0].mxu0
  %1728 = vmatprep.mubr.f32.mxu0 0.0
  %1729 = vmatmul.mubr.f32.gmra.mrb[0].mxu0 %v1543
  %v1730 = vpop.f32.mrb[0].mxu0
  %v1731 = vadd.f32 %v1641, %v1730
  %v1732 = vpop.f32.mrb[0].mxu0
  %1733 = vmatprep.mubr.f32.mxu0 0.0
  %1734 = vmatmul.mubr.f32.gmra.mrb[0].mxu0 %v1542
  %v1735 = vpop.f32.mrb[0].mxu0
  %v1736 = vadd.f32 %v1646, %v1735
  %v1737 = vpop.f32.mrb[0].mxu0
  %1738 = vdwg.mxu0
  %v1744 = vrot.slane %v1716, 6
  %v1745 = vrot.slane %v1721, 6
  %v1746 = vsel %vm35, %v1744, %v1745
  %v1747 = vrot.slane %v1726, 6
  %v1748 = vsel %vm35, %v1745, %v1747
  %v1749 = vrot.slane %v1731, 6
  %v1750 = vsel %vm35, %v1747, %v1749
  %v1751 = vrot.slane %v1736, 6
  %v1752 = vsel %vm35, %v1749, %v1751
  %v1758 = vsel %vm35, 0.0, %v1744
  %v1759 = vsel %vm44, %v1752, 0.0
  %v1760 = vmul.f32 %v1758, %v23
  %v1761 = vmul.f32 %v1746, %v24
  %v1762 = vmul.f32 %v1748, %v25
  %v1763 = vmul.f32 %v1750, %v26
  %v1764 = vmul.f32 %v1759, %v27
  %v1765 = vadd.f32 %v1231, %v1760
  %v1766 = vadd.f32 %v1232, %v1761
  %v1767 = vadd.f32 %v1233, %v1762
  %v1768 = vadd.f32 %v1234, %v1763
  %v1769 = vadd.f32 %v1235, %v1764
  %v1770 = vadd.f32 %v697, %v1765
  %v1771 = vadd.f32 %v698, %v1766
  %v1772 = vadd.f32 %v699, %v1767
  %v1773 = vadd.f32 %v700, %v1768
  %v1774 = vadd.f32 %v701, %v1769
  %v1780 = vrot.slane %v1770, 1
  %v1781 = vrot.slane %v1771, 1
  %v1782 = vsel %vm60, %v1780, %v1781
  %v1783 = vrot.slane %v1772, 1
  %v1784 = vsel %vm60, %v1781, %v1783
  %v1785 = vrot.slane %v1773, 1
  %v1786 = vsel %vm60, %v1783, %v1785
  %v1787 = vrot.slane %v1774, 1
  %v1788 = vsel %vm60, %v1785, %v1787
  %v1789 = vrot.slane %v1770, 2
  %v1790 = vrot.slane %v1771, 2
  %v1791 = vsel %vm44, %v1789, %v1790
  %v1792 = vrot.slane %v1772, 2
  %v1793 = vsel %vm44, %v1790, %v1792
  %v1794 = vrot.slane %v1773, 2
  %v1795 = vsel %vm44, %v1792, %v1794
  %v1796 = vrot.slane %v1774, 2
  %v1797 = vsel %vm44, %v1794, %v1796
  %v1798 = vrot.slane %v1782, 1
  %v1799 = vrot.slane %v1784, 1
  %v1800 = vsel %vm60, %v1798, %v1799
  %v1801 = vrot.slane %v1791, 1
  %v1802 = vrot.slane %v1793, 1
  %v1803 = vsel %vm60, %v1801, %v1802
  %v1804 = vrot.slane %v1786, 1
  %v1805 = vsel %vm60, %v1799, %v1804
  %v1806 = vrot.slane %v1795, 1
  %v1807 = vsel %vm60, %v1802, %v1806
  %v1808 = vrot.slane %v1788, 1
  %v1809 = vsel %vm60, %v1804, %v1808
  %v1810 = vrot.slane %v1797, 1
  %v1811 = vsel %vm60, %v1806, %v1810
  %v1812 = vrot.slane %v1787, 1
  %v1813 = vsel %vm60, %v1808, %v1812
  %v1814 = vrot.slane %v1796, 1
  %v1815 = vsel %vm60, %v1810, %v1814
  %1831 = vmatprep.subr.mxu0 0.0
  %1832 = vmatpush1.msra.mxu0 %v79
  %1833 = vmatprep.subr.mxu0 0.0
  %1834 = vmatpush1.msra.mxu0 %v80
  %1835 = vmatprep.subr.mxu0 0.0
  %1836 = vmatpush1.msra.mxu0 %v81
  %1837 = vmatprep.subr.mxu0 0.0
  %1838 = vmatpush1.msra.mxu0 %v82
  %1839 = vmatprep.subr.mxu0 0.0
  %1840 = vmatpush1.msra.mxu0 %v83
  %1841 = vmatprep.subr.mxu0 0.0
  %1842 = vmatpush1.msra.mxu0 %v84
  %1843 = vmatprep.subr.mxu0 0.0
  %1844 = vmatpush1.msra.mxu0 %v85
  %1845 = vmatprep.subr.mxu0 0.0
  %1846 = vmatpush1.msra.mxu0 %v86
  %1847 = vmatprep.subr.mxu0 0.0
  %1848 = vmatpush1.msra.mxu0 %v87
  %1849 = vmatprep.subr.mxu0 0.0
  %1850 = vmatpush1.msra.mxu0 %v88
  %1851 = vmatprep.subr.mxu0 0.0
  %1852 = vmatpush1.msra.mxu0 %v89
  %1853 = vmatprep.subr.mxu0 0.0
  %1854 = vmatpush1.msra.mxu0 %v90
  %1855 = vmatprep.subr.mxu0 0.0
  %1856 = vmatpush1.msra.mxu0 %v91
  %1857 = vmatprep.subr.mxu0 0.0
  %1858 = vmatpush1.msra.mxu0 %v92
  %1859 = vmatprep.subr.mxu0 0.0
  %1860 = vmatpush1.msra.mxu0 %v93
  %1861 = vmatprep.subr.mxu0 0.0
  %1862 = vmatpush1.msra.mxu0 %v94
  %1863 = vmatprep.subr.mxu0 0.0
  %1864 = vmatpush1.msra.mxu0 %v95
  %1865 = vmatprep.subr.mxu0 0.0
  %1866 = vmatpush1.msra.mxu0 %v96
  %1867 = vmatprep.subr.mxu0 0.0
  %1868 = vmatpush1.msra.mxu0 %v97
  %1869 = vmatprep.subr.mxu0 0.0
  %1870 = vmatpush1.msra.mxu0 %v98
  %1871 = vmatprep.subr.mxu0 0.0
  %1872 = vmatpush1.msra.mxu0 %v99
  %1873 = vmatprep.subr.mxu0 0.0
  %1874 = vmatpush1.msra.mxu0 %v100
  %1875 = vmatprep.subr.mxu0 0.0
  %1876 = vmatpush1.msra.mxu0 %v101
  %1877 = vmatprep.subr.mxu0 0.0
  %1878 = vmatpush1.msra.mxu0 %v102
  %1879 = vmatprep.subr.mxu0 0.0
  %1880 = vmatpush1.msra.mxu0 %v103
  %1881 = vmatprep.subr.mxu0 0.0
  %1882 = vmatpush1.msra.mxu0 %v104
  %1883 = vmatprep.subr.mxu0 0.0
  %1884 = vmatpush1.msra.mxu0 %v105
  %1885 = vmatprep.subr.mxu0 0.0
  %1886 = vmatpush1.msra.mxu0 %v106
  %1887 = vmatprep.subr.mxu0 0.0
  %1888 = vmatpush1.msra.mxu0 %v107
  %1889 = vmatprep.subr.mxu0 0.0
  %1890 = vmatpush1.msra.mxu0 %v108
  %1891 = vmatprep.subr.mxu0 0.0
  %1892 = vmatpush1.msra.mxu0 %v109
  %1893 = vmatprep.subr.mxu0 0.0
  %1894 = vmatpush1.msra.mxu0 %v110
  %1895 = vmatprep.mubr.f32.mxu0 %v1800
  %1896 = vmatmul.mubr.f32.gmra.mrb[0].mxu0 %v1782
  %v1897 = vpop.f32.mrb[0].mxu0
  %v1898 = vadd.f32 %v132, %v1897
  %v1899 = vpop.f32.mrb[0].mxu0
  %1900 = vmatprep.mubr.f32.mxu0 %v1805
  %1901 = vmatmul.mubr.f32.gmra.mrb[0].mxu0 %v1784
  %v1902 = vpop.f32.mrb[0].mxu0
  %v1903 = vadd.f32 %v132, %v1902
  %v1904 = vpop.f32.mrb[0].mxu0
  %1905 = vmatprep.mubr.f32.mxu0 %v1809
  %1906 = vmatmul.mubr.f32.gmra.mrb[0].mxu0 %v1786
  %v1907 = vpop.f32.mrb[0].mxu0
  %v1908 = vadd.f32 %v132, %v1907
  %v1909 = vpop.f32.mrb[0].mxu0
  %1910 = vmatprep.mubr.f32.mxu0 %v1813
  %1911 = vmatmul.mubr.f32.gmra.mrb[0].mxu0 %v1788
  %v1912 = vpop.f32.mrb[0].mxu0
  %v1913 = vadd.f32 %v132, %v1912
  %v1914 = vpop.f32.mrb[0].mxu0
  %1915 = vmatprep.mubr.f32.mxu0 %v1812
  %1916 = vmatmul.mubr.f32.gmra.mrb[0].mxu0 %v1787
  %v1917 = vpop.f32.mrb[0].mxu0
  %v1918 = vadd.f32 %v132, %v1917
  %v1919 = vpop.f32.mrb[0].mxu0
  %1920 = vdwg.mxu0
  %1921 = vmatprep.subr.mxu0 0.0
  %1922 = vmatpush1.msra.mxu0 %v111
  %1923 = vmatprep.subr.mxu0 0.0
  %1924 = vmatpush1.msra.mxu0 %v112
  %1925 = vmatprep.subr.mxu0 0.0
  %1926 = vmatpush1.msra.mxu0 %v113
  %1927 = vmatprep.subr.mxu0 0.0
  %1928 = vmatpush1.msra.mxu0 %v114
  %1929 = vmatprep.subr.mxu0 0.0
  %1930 = vmatpush1.msra.mxu0 %v115
  %1931 = vmatprep.subr.mxu0 0.0
  %1932 = vmatpush1.msra.mxu0 %v116
  %1933 = vmatprep.subr.mxu0 0.0
  %1934 = vmatpush1.msra.mxu0 %v117
  %1935 = vmatprep.subr.mxu0 0.0
  %1936 = vmatpush1.msra.mxu0 %v118
  %1937 = vmatprep.subr.mxu0 0.0
  %1938 = vmatpush1.msra.mxu0 %v119
  %1939 = vmatprep.subr.mxu0 0.0
  %1940 = vmatpush1.msra.mxu0 %v120
  %1941 = vmatprep.subr.mxu0 0.0
  %1942 = vmatpush1.msra.mxu0 %v121
  %1943 = vmatprep.subr.mxu0 0.0
  %1944 = vmatpush1.msra.mxu0 %v122
  %1945 = vmatprep.subr.mxu0 0.0
  %1946 = vmatpush1.msra.mxu0 %v123
  %1947 = vmatprep.subr.mxu0 0.0
  %1948 = vmatpush1.msra.mxu0 %v124
  %1949 = vmatprep.subr.mxu0 0.0
  %1950 = vmatpush1.msra.mxu0 %v125
  %1951 = vmatprep.subr.mxu0 0.0
  %1952 = vmatpush1.msra.mxu0 %v126
  %1953 = vmatprep.subr.mxu0 0.0
  %1954 = vmatpush1.msra.mxu0 0.0
  %1955 = vmatprep.subr.mxu0 0.0
  %1956 = vmatpush1.msra.mxu0 0.0
  %1957 = vmatprep.subr.mxu0 0.0
  %1958 = vmatpush1.msra.mxu0 0.0
  %1959 = vmatprep.subr.mxu0 0.0
  %1960 = vmatpush1.msra.mxu0 0.0
  %1961 = vmatprep.subr.mxu0 0.0
  %1962 = vmatpush1.msra.mxu0 0.0
  %1963 = vmatprep.subr.mxu0 0.0
  %1964 = vmatpush1.msra.mxu0 0.0
  %1965 = vmatprep.subr.mxu0 0.0
  %1966 = vmatpush1.msra.mxu0 0.0
  %1967 = vmatprep.subr.mxu0 0.0
  %1968 = vmatpush1.msra.mxu0 0.0
  %1969 = vmatprep.subr.mxu0 0.0
  %1970 = vmatpush1.msra.mxu0 0.0
  %1971 = vmatprep.subr.mxu0 0.0
  %1972 = vmatpush1.msra.mxu0 0.0
  %1973 = vmatprep.subr.mxu0 0.0
  %1974 = vmatpush1.msra.mxu0 0.0
  %1975 = vmatprep.subr.mxu0 0.0
  %1976 = vmatpush1.msra.mxu0 0.0
  %1977 = vmatprep.subr.mxu0 0.0
  %1978 = vmatpush1.msra.mxu0 0.0
  %1979 = vmatprep.subr.mxu0 0.0
  %1980 = vmatpush1.msra.mxu0 0.0
  %1981 = vmatprep.subr.mxu0 0.0
  %1982 = vmatpush1.msra.mxu0 0.0
  %1983 = vmatprep.subr.mxu0 0.0
  %1984 = vmatpush1.msra.mxu0 0.0
  %1985 = vmatprep.mubr.f32.mxu0 0.0
  %1986 = vmatmul.mubr.f32.gmra.mrb[0].mxu0 %v1803
  %v1987 = vpop.f32.mrb[0].mxu0
  %v1988 = vadd.f32 %v1898, %v1987
  %v1989 = vpop.f32.mrb[0].mxu0
  %1990 = vmatprep.mubr.f32.mxu0 0.0
  %1991 = vmatmul.mubr.f32.gmra.mrb[0].mxu0 %v1807
  %v1992 = vpop.f32.mrb[0].mxu0
  %v1993 = vadd.f32 %v1903, %v1992
  %v1994 = vpop.f32.mrb[0].mxu0
  %1995 = vmatprep.mubr.f32.mxu0 0.0
  %1996 = vmatmul.mubr.f32.gmra.mrb[0].mxu0 %v1811
  %v1997 = vpop.f32.mrb[0].mxu0
  %v1998 = vadd.f32 %v1908, %v1997
  %v1999 = vpop.f32.mrb[0].mxu0
  %2000 = vmatprep.mubr.f32.mxu0 0.0
  %2001 = vmatmul.mubr.f32.gmra.mrb[0].mxu0 %v1815
  %v2002 = vpop.f32.mrb[0].mxu0
  %v2003 = vadd.f32 %v1913, %v2002
  %v2004 = vpop.f32.mrb[0].mxu0
  %2005 = vmatprep.mubr.f32.mxu0 0.0
  %2006 = vmatmul.mubr.f32.gmra.mrb[0].mxu0 %v1814
  %v2007 = vpop.f32.mrb[0].mxu0
  %v2008 = vadd.f32 %v1918, %v2007
  %v2009 = vpop.f32.mrb[0].mxu0
  %2010 = vdwg.mxu0
  %v2016 = vrot.slane %v1988, 6
  %v2017 = vrot.slane %v1993, 6
  %v2018 = vsel %vm35, %v2016, %v2017
  %v2019 = vrot.slane %v1998, 6
  %v2020 = vsel %vm35, %v2017, %v2019
  %v2021 = vrot.slane %v2003, 6
  %v2022 = vsel %vm35, %v2019, %v2021
  %v2023 = vrot.slane %v2008, 6
  %v2024 = vsel %vm35, %v2021, %v2023
  %v2030 = vsel %vm35, 0.0, %v2016
  %v2031 = vsel %vm44, %v2024, 0.0
  %v2032 = vmul.f32 %v2030, %v23
  %v2033 = vmul.f32 %v2018, %v24
  %v2034 = vmul.f32 %v2020, %v25
  %v2035 = vmul.f32 %v2022, %v26
  %v2036 = vmul.f32 %v2031, %v27
  %v2037 = vmax.f32 %v2032, 0.0
  %v2038 = vmax.f32 %v2033, 0.0
  %v2039 = vmax.f32 %v2034, 0.0
  %v2040 = vmax.f32 %v2035, 0.0
  %v2041 = vmax.f32 %v2036, 0.0
  %v2047 = vrot.slane %v2037, 1
  %v2048 = vrot.slane %v2038, 1
  %v2049 = vsel %vm60, %v2047, %v2048
  %v2050 = vrot.slane %v2039, 1
  %v2051 = vsel %vm60, %v2048, %v2050
  %v2052 = vrot.slane %v2040, 1
  %v2053 = vsel %vm60, %v2050, %v2052
  %v2054 = vrot.slane %v2041, 1
  %v2055 = vsel %vm60, %v2052, %v2054
  %v2056 = vrot.slane %v2037, 2
  %v2057 = vrot.slane %v2038, 2
  %v2058 = vsel %vm44, %v2056, %v2057
  %v2059 = vrot.slane %v2039, 2
  %v2060 = vsel %vm44, %v2057, %v2059
  %v2061 = vrot.slane %v2040, 2
  %v2062 = vsel %vm44, %v2059, %v2061
  %v2063 = vrot.slane %v2041, 2
  %v2064 = vsel %vm44, %v2061, %v2063
  %v2065 = vrot.slane %v2049, 1
  %v2066 = vrot.slane %v2051, 1
  %v2067 = vsel %vm60, %v2065, %v2066
  %v2068 = vrot.slane %v2058, 1
  %v2069 = vrot.slane %v2060, 1
  %v2070 = vsel %vm60, %v2068, %v2069
  %v2071 = vrot.slane %v2053, 1
  %v2072 = vsel %vm60, %v2066, %v2071
  %v2073 = vrot.slane %v2062, 1
  %v2074 = vsel %vm60, %v2069, %v2073
  %v2075 = vrot.slane %v2055, 1
  %v2076 = vsel %vm60, %v2071, %v2075
  %v2077 = vrot.slane %v2064, 1
  %v2078 = vsel %vm60, %v2073, %v2077
  %v2079 = vrot.slane %v2054, 1
  %v2080 = vsel %vm60, %v2075, %v2079
  %v2081 = vrot.slane %v2063, 1
  %v2082 = vsel %vm60, %v2077, %v2081
  %2098 = vmatprep.subr.mxu0 0.0
  %2099 = vmatpush1.msra.mxu0 %v402
  %2100 = vmatprep.subr.mxu0 0.0
  %2101 = vmatpush1.msra.mxu0 %v403
  %2102 = vmatprep.subr.mxu0 0.0
  %2103 = vmatpush1.msra.mxu0 %v404
  %2104 = vmatprep.subr.mxu0 0.0
  %2105 = vmatpush1.msra.mxu0 %v405
  %2106 = vmatprep.subr.mxu0 0.0
  %2107 = vmatpush1.msra.mxu0 %v406
  %2108 = vmatprep.subr.mxu0 0.0
  %2109 = vmatpush1.msra.mxu0 %v407
  %2110 = vmatprep.subr.mxu0 0.0
  %2111 = vmatpush1.msra.mxu0 %v408
  %2112 = vmatprep.subr.mxu0 0.0
  %2113 = vmatpush1.msra.mxu0 %v409
  %2114 = vmatprep.subr.mxu0 0.0
  %2115 = vmatpush1.msra.mxu0 %v410
  %2116 = vmatprep.subr.mxu0 0.0
  %2117 = vmatpush1.msra.mxu0 %v411
  %2118 = vmatprep.subr.mxu0 0.0
  %2119 = vmatpush1.msra.mxu0 %v412
  %2120 = vmatprep.subr.mxu0 0.0
  %2121 = vmatpush1.msra.mxu0 %v413
  %2122 = vmatprep.subr.mxu0 0.0
  %2123 = vmatpush1.msra.mxu0 %v414
  %2124 = vmatprep.subr.mxu0 0.0
  %2125 = vmatpush1.msra.mxu0 %v415
  %2126 = vmatprep.subr.mxu0 0.0
  %2127 = vmatpush1.msra.mxu0 %v416
  %2128 = vmatprep.subr.mxu0 0.0
  %2129 = vmatpush1.msra.mxu0 %v417
  %2130 = vmatprep.subr.mxu0 0.0
  %2131 = vmatpush1.msra.mxu0 %v418
  %2132 = vmatprep.subr.mxu0 0.0
  %2133 = vmatpush1.msra.mxu0 %v419
  %2134 = vmatprep.subr.mxu0 0.0
  %2135 = vmatpush1.msra.mxu0 %v420
  %2136 = vmatprep.subr.mxu0 0.0
  %2137 = vmatpush1.msra.mxu0 %v421
  %2138 = vmatprep.subr.mxu0 0.0
  %2139 = vmatpush1.msra.mxu0 %v422
  %2140 = vmatprep.subr.mxu0 0.0
  %2141 = vmatpush1.msra.mxu0 %v423
  %2142 = vmatprep.subr.mxu0 0.0
  %2143 = vmatpush1.msra.mxu0 %v424
  %2144 = vmatprep.subr.mxu0 0.0
  %2145 = vmatpush1.msra.mxu0 %v425
  %2146 = vmatprep.subr.mxu0 0.0
  %2147 = vmatpush1.msra.mxu0 %v426
  %2148 = vmatprep.subr.mxu0 0.0
  %2149 = vmatpush1.msra.mxu0 %v427
  %2150 = vmatprep.subr.mxu0 0.0
  %2151 = vmatpush1.msra.mxu0 %v428
  %2152 = vmatprep.subr.mxu0 0.0
  %2153 = vmatpush1.msra.mxu0 %v429
  %2154 = vmatprep.subr.mxu0 0.0
  %2155 = vmatpush1.msra.mxu0 %v430
  %2156 = vmatprep.subr.mxu0 0.0
  %2157 = vmatpush1.msra.mxu0 %v431
  %2158 = vmatprep.subr.mxu0 0.0
  %2159 = vmatpush1.msra.mxu0 %v432
  %2160 = vmatprep.subr.mxu0 0.0
  %2161 = vmatpush1.msra.mxu0 %v433
  %2162 = vmatprep.mubr.f32.mxu0 %v2067
  %2163 = vmatmul.mubr.f32.gmra.mrb[0].mxu0 %v2049
  %v2164 = vpop.f32.mrb[0].mxu0
  %v2165 = vadd.f32 %v456, %v2164
  %v2166 = vpop.f32.mrb[0].mxu0
  %2167 = vmatprep.mubr.f32.mxu0 %v2072
  %2168 = vmatmul.mubr.f32.gmra.mrb[0].mxu0 %v2051
  %v2169 = vpop.f32.mrb[0].mxu0
  %v2170 = vadd.f32 %v456, %v2169
  %v2171 = vpop.f32.mrb[0].mxu0
  %2172 = vmatprep.mubr.f32.mxu0 %v2076
  %2173 = vmatmul.mubr.f32.gmra.mrb[0].mxu0 %v2053
  %v2174 = vpop.f32.mrb[0].mxu0
  %v2175 = vadd.f32 %v456, %v2174
  %v2176 = vpop.f32.mrb[0].mxu0
  %2177 = vmatprep.mubr.f32.mxu0 %v2080
  %2178 = vmatmul.mubr.f32.gmra.mrb[0].mxu0 %v2055
  %v2179 = vpop.f32.mrb[0].mxu0
  %v2180 = vadd.f32 %v456, %v2179
  %v2181 = vpop.f32.mrb[0].mxu0
  %2182 = vmatprep.mubr.f32.mxu0 %v2079
  %2183 = vmatmul.mubr.f32.gmra.mrb[0].mxu0 %v2054
  %v2184 = vpop.f32.mrb[0].mxu0
  %v2185 = vadd.f32 %v456, %v2184
  %v2186 = vpop.f32.mrb[0].mxu0
  %2187 = vdwg.mxu0
  %2188 = vmatprep.subr.mxu0 0.0
  %2189 = vmatpush1.msra.mxu0 %v434
  %2190 = vmatprep.subr.mxu0 0.0
  %2191 = vmatpush1.msra.mxu0 %v435
  %2192 = vmatprep.subr.mxu0 0.0
  %2193 = vmatpush1.msra.mxu0 %v436
  %2194 = vmatprep.subr.mxu0 0.0
  %2195 = vmatpush1.msra.mxu0 %v437
  %2196 = vmatprep.subr.mxu0 0.0
  %2197 = vmatpush1.msra.mxu0 %v438
  %2198 = vmatprep.subr.mxu0 0.0
  %2199 = vmatpush1.msra.mxu0 %v439
  %2200 = vmatprep.subr.mxu0 0.0
  %2201 = vmatpush1.msra.mxu0 %v440
  %2202 = vmatprep.subr.mxu0 0.0
  %2203 = vmatpush1.msra.mxu0 %v441
  %2204 = vmatprep.subr.mxu0 0.0
  %2205 = vmatpush1.msra.mxu0 %v442
  %2206 = vmatprep.subr.mxu0 0.0
  %2207 = vmatpush1.msra.mxu0 %v443
  %2208 = vmatprep.subr.mxu0 0.0
  %2209 = vmatpush1.msra.mxu0 %v444
  %2210 = vmatprep.subr.mxu0 0.0
  %2211 = vmatpush1.msra.mxu0 %v445
  %2212 = vmatprep.subr.mxu0 0.0
  %2213 = vmatpush1.msra.mxu0 %v446
  %2214 = vmatprep.subr.mxu0 0.0
  %2215 = vmatpush1.msra.mxu0 %v447
  %2216 = vmatprep.subr.mxu0 0.0
  %2217 = vmatpush1.msra.mxu0 %v448
  %2218 = vmatprep.subr.mxu0 0.0
  %2219 = vmatpush1.msra.mxu0 %v449
  %2220 = vmatprep.subr.mxu0 0.0
  %2221 = vmatpush1.msra.mxu0 0.0
  %2222 = vmatprep.subr.mxu0 0.0
  %2223 = vmatpush1.msra.mxu0 0.0
  %2224 = vmatprep.subr.mxu0 0.0
  %2225 = vmatpush1.msra.mxu0 0.0
  %2226 = vmatprep.subr.mxu0 0.0
  %2227 = vmatpush1.msra.mxu0 0.0
  %2228 = vmatprep.subr.mxu0 0.0
  %2229 = vmatpush1.msra.mxu0 0.0
  %2230 = vmatprep.subr.mxu0 0.0
  %2231 = vmatpush1.msra.mxu0 0.0
  %2232 = vmatprep.subr.mxu0 0.0
  %2233 = vmatpush1.msra.mxu0 0.0
  %2234 = vmatprep.subr.mxu0 0.0
  %2235 = vmatpush1.msra.mxu0 0.0
  %2236 = vmatprep.subr.mxu0 0.0
  %2237 = vmatpush1.msra.mxu0 0.0
  %2238 = vmatprep.subr.mxu0 0.0
  %2239 = vmatpush1.msra.mxu0 0.0
  %2240 = vmatprep.subr.mxu0 0.0
  %2241 = vmatpush1.msra.mxu0 0.0
  %2242 = vmatprep.subr.mxu0 0.0
  %2243 = vmatpush1.msra.mxu0 0.0
  %2244 = vmatprep.subr.mxu0 0.0
  %2245 = vmatpush1.msra.mxu0 0.0
  %2246 = vmatprep.subr.mxu0 0.0
  %2247 = vmatpush1.msra.mxu0 0.0
  %2248 = vmatprep.subr.mxu0 0.0
  %2249 = vmatpush1.msra.mxu0 0.0
  %2250 = vmatprep.subr.mxu0 0.0
  %2251 = vmatpush1.msra.mxu0 0.0
  %2252 = vmatprep.mubr.f32.mxu0 0.0
  %2253 = vmatmul.mubr.f32.gmra.mrb[0].mxu0 %v2070
  %v2254 = vpop.f32.mrb[0].mxu0
  %v2255 = vadd.f32 %v2165, %v2254
  %v2256 = vpop.f32.mrb[0].mxu0
  %2257 = vmatprep.mubr.f32.mxu0 0.0
  %2258 = vmatmul.mubr.f32.gmra.mrb[0].mxu0 %v2074
  %v2259 = vpop.f32.mrb[0].mxu0
  %v2260 = vadd.f32 %v2170, %v2259
  %v2261 = vpop.f32.mrb[0].mxu0
  %2262 = vmatprep.mubr.f32.mxu0 0.0
  %2263 = vmatmul.mubr.f32.gmra.mrb[0].mxu0 %v2078
  %v2264 = vpop.f32.mrb[0].mxu0
  %v2265 = vadd.f32 %v2175, %v2264
  %v2266 = vpop.f32.mrb[0].mxu0
  %2267 = vmatprep.mubr.f32.mxu0 0.0
  %2268 = vmatmul.mubr.f32.gmra.mrb[0].mxu0 %v2082
  %v2269 = vpop.f32.mrb[0].mxu0
  %v2270 = vadd.f32 %v2180, %v2269
  %v2271 = vpop.f32.mrb[0].mxu0
  %2272 = vmatprep.mubr.f32.mxu0 0.0
  %2273 = vmatmul.mubr.f32.gmra.mrb[0].mxu0 %v2081
  %v2274 = vpop.f32.mrb[0].mxu0
  %v2275 = vadd.f32 %v2185, %v2274
  %v2276 = vpop.f32.mrb[0].mxu0
  %2277 = vdwg.mxu0
  %v2283 = vrot.slane %v2255, 6
  %v2284 = vrot.slane %v2260, 6
  %v2285 = vsel %vm35, %v2283, %v2284
  %v2286 = vrot.slane %v2265, 6
  %v2287 = vsel %vm35, %v2284, %v2286
  %v2288 = vrot.slane %v2270, 6
  %v2289 = vsel %vm35, %v2286, %v2288
  %v2290 = vrot.slane %v2275, 6
  %v2291 = vsel %vm35, %v2288, %v2290
  %v2297 = vsel %vm35, 0.0, %v2283
  %v2298 = vsel %vm44, %v2291, 0.0
  %v2299 = vmul.f32 %v2297, %v23
  %v2300 = vmul.f32 %v2285, %v24
  %v2301 = vmul.f32 %v2287, %v25
  %v2302 = vmul.f32 %v2289, %v26
  %v2303 = vmul.f32 %v2298, %v27
  %v2304 = vadd.f32 %v1770, %v2299
  %v2305 = vadd.f32 %v1771, %v2300
  %v2306 = vadd.f32 %v1772, %v2301
  %v2307 = vadd.f32 %v1773, %v2302
  %v2308 = vadd.f32 %v1774, %v2303
  %v2309 = vadd.f32 %v51, %v2304
  %v2310 = vadd.f32 %v38, %v2305
  %v2311 = vadd.f32 %v55, %v2306
  %v2312 = vadd.f32 %v47, %v2307
  %v2313 = vadd.f32 %v56, %v2308
  %v2314 = vld [vmem:[%s4] sm:$0xff]
  %v2315 = vld [vmem:[%s4 + $0x8] sm:$0xff]
  %v2316 = vld [vmem:[%s4 + $0x10] sm:$0xff]
  %v2317 = vld [vmem:[%s4 + $0x18] sm:$0xff]
  %v2318 = vld [vmem:[%s4 + $0x20] sm:$0xff]
  %v2319 = vld [vmem:[%s4 + $0x28] sm:$0xff]
  %v2320 = vld [vmem:[%s4 + $0x30] sm:$0xff]
  %v2321 = vld [vmem:[%s4 + $0x38] sm:$0xff]
  %v2322 = vld [vmem:[%s4 + $0x40] sm:$0xff]
  %v2323 = vld [vmem:[%s4 + $0x48] sm:$0xff]
  %v2324 = vld [vmem:[%s4 + $0x50] sm:$0xff]
  %v2325 = vld [vmem:[%s4 + $0x58] sm:$0xff]
  %v2326 = vld [vmem:[%s4 + $0x60] sm:$0xff]
  %v2327 = vld [vmem:[%s4 + $0x68] sm:$0xff]
  %v2328 = vld [vmem:[%s4 + $0x70] sm:$0xff]
  %v2329 = vld [vmem:[%s4 + $0x78] sm:$0xff]
  %2330 = vmatprep.subr.mxu0 0.0
  %2331 = vmatpush1.msra.mxu0 %v2314
  %2332 = vmatprep.subr.mxu0 0.0
  %2333 = vmatpush1.msra.mxu0 %v2315
  %2334 = vmatprep.subr.mxu0 0.0
  %2335 = vmatpush1.msra.mxu0 %v2316
  %2336 = vmatprep.subr.mxu0 0.0
  %2337 = vmatpush1.msra.mxu0 %v2317
  %2338 = vmatprep.subr.mxu0 0.0
  %2339 = vmatpush1.msra.mxu0 %v2318
  %2340 = vmatprep.subr.mxu0 0.0
  %2341 = vmatpush1.msra.mxu0 %v2319
  %2342 = vmatprep.subr.mxu0 0.0
  %2343 = vmatpush1.msra.mxu0 %v2320
  %2344 = vmatprep.subr.mxu0 0.0
  %2345 = vmatpush1.msra.mxu0 %v2321
  %2346 = vmatprep.subr.mxu0 0.0
  %2347 = vmatpush1.msra.mxu0 %v2322
  %2348 = vmatprep.subr.mxu0 0.0
  %2349 = vmatpush1.msra.mxu0 %v2323
  %2350 = vmatprep.subr.mxu0 0.0
  %2351 = vmatpush1.msra.mxu0 %v2324
  %2352 = vmatprep.subr.mxu0 0.0
  %2353 = vmatpush1.msra.mxu0 %v2325
  %2354 = vmatprep.subr.mxu0 0.0
  %2355 = vmatpush1.msra.mxu0 %v2326
  %2356 = vmatprep.subr.mxu0 0.0
  %2357 = vmatpush1.msra.mxu0 %v2327
  %2358 = vmatprep.subr.mxu0 0.0
  %2359 = vmatpush1.msra.mxu0 %v2328
  %2360 = vmatprep.subr.mxu0 0.0
  %2361 = vmatpush1.msra.mxu0 %v2329
  %2362 = vmatprep.subr.mxu0 0.0
  %2363 = vmatpush1.msra.mxu0 0.0
  %2364 = vmatprep.subr.mxu0 0.0
  %2365 = vmatpush1.msra.mxu0 0.0
  %2366 = vmatprep.subr.mxu0 0.0
  %2367 = vmatpush1.msra.mxu0 0.0
  %2368 = vmatprep.subr.mxu0 0.0
  %2369 = vmatpush1.msra.mxu0 0.0
  %2370 = vmatprep.subr.mxu0 0.0
  %2371 = vmatpush1.msra.mxu0 0.0
  %2372 = vmatprep.subr.mxu0 0.0
  %2373 = vmatpush1.msra.mxu0 0.0
  %2374 = vmatprep.subr.mxu0 0.0
  %2375 = vmatpush1.msra.mxu0 0.0
  %2376 = vmatprep.subr.mxu0 0.0
  %2377 = vmatpush1.msra.mxu0 0.0
  %2378 = vmatprep.subr.mxu0 0.0
  %2379 = vmatpush1.msra.mxu0 0.0
  %2380 = vmatprep.subr.mxu0 0.0
  %2381 = vmatpush1.msra.mxu0 0.0
  %2382 = vmatprep.subr.mxu0 0.0
  %2383 = vmatpush1.msra.mxu0 0.0
  %2384 = vmatprep.subr.mxu0 0.0
  %2385 = vmatpush1.msra.mxu0 0.0
  %2386 = vmatprep.subr.mxu0 0.0
  %2387 = vmatpush1.msra.mxu0 0.0
  %2388 = vmatprep.subr.mxu0 0.0
  %2389 = vmatpush1.msra.mxu0 0.0
  %2390 = vmatprep.subr.mxu0 0.0
  %2391 = vmatpush1.msra.mxu0 0.0
  %2392 = vmatprep.subr.mxu0 0.0
  %2393 = vmatpush1.msra.mxu0 0.0
  %2394 = vmatprep.mubr.f32.mxu0 0.0
  %2395 = vmatmul.mubr.f32.gmra.mrb[0].mxu0 %v2309
  %v2396 = vpop.f32.mrb[0].mxu0
  %v2397 = vadd.f32 0.0, %v2396
  %v2398 = vpop.f32.mrb[0].mxu0
  %2399 = vmatprep.mubr.f32.mxu0 0.0
  %2400 = vmatmul.mubr.f32.gmra.mrb[0].mxu0 %v2310
  %v2401 = vpop.f32.mrb[0].mxu0
  %v2402 = vadd.f32 0.0, %v2401
  %v2403 = vpop.f32.mrb[0].mxu0
  %2404 = vmatprep.mubr.f32.mxu0 0.0
  %2405 = vmatmul.mubr.f32.gmra.mrb[0].mxu0 %v2311
  %v2406 = vpop.f32.mrb[0].mxu0
  %v2407 = vadd.f32 0.0, %v2406
  %v2408 = vpop.f32.mrb[0].mxu0
  %2409 = vmatprep.mubr.f32.mxu0 0.0
  %2410 = vmatmul.mubr.f32.gmra.mrb[0].mxu0 %v2312
  %v2411 = vpop.f32.mrb[0].mxu0
  %v2412 = vadd.f32 0.0, %v2411
  %v2413 = vpop.f32.mrb[0].mxu0
  %2414 = vmatprep.mubr.f32.mxu0 0.0
  %2415 = vmatmul.mubr.f32.gmra.mrb[0].mxu0 %v2313
  %v2416 = vpop.f32.mrb[0].mxu0
  %v2417 = vadd.f32 0.0, %v2416
  %v2418 = vpop.f32.mrb[0].mxu0
  %2419 = vdwg.mxu0
  %v2420 = vmax.f32 %v2309, %v2397
  %v2421 = vmax.f32 %v2310, %v2402
  %v2422 = vmax.f32 %v2311, %v2407
  %v2423 = vmax.f32 %v2312, %v2412
  %v2424 = vmax.f32 %v2313, %v2417
  %s2425 = scalar_lea.vmem %s4, 128
  %v2426 = vld [vmem:[%s2425] sm:$0xff]
  %v2427 = vld [vmem:[%s2425 + $0x8] sm:$0xff]
  %v2428 = vld [vmem:[%s2425 + $0x10] sm:$0xff]
  %v2429 = vld [vmem:[%s2425 + $0x18] sm:$0xff]
  %v2430 = vld [vmem:[%s2425 + $0x20] sm:$0xff]
  %v2431 = vld [vmem:[%s2425 + $0x28] sm:$0xff]
  %v2432 = vld [vmem:[%s2425 + $0x30] sm:$0xff]
  %v2433 = vld [vmem:[%s2425 + $0x38] sm:$0xff]
  %v2434 = vld [vmem:[%s2425 + $0x40] sm:$0xff]
  %v2435 = vld [vmem:[%s2425 + $0x48] sm:$0xff]
  %v2436 = vld [vmem:[%s2425 + $0x50] sm:$0xff]
  %v2437 = vld [vmem:[%s2425 + $0x58] sm:$0xff]
  %v2438 = vld [vmem:[%s2425 + $0x60] sm:$0xff]
  %v2439 = vld [vmem:[%s2425 + $0x68] sm:$0xff]
  %v2440 = vld [vmem:[%s2425 + $0x70] sm:$0xff]
  %v2441 = vld [vmem:[%s2425 + $0x78] sm:$0xff]
  %2442 = vmatprep.subr.mxu0 0.0
  %2443 = vmatpush1.msra.mxu0 %v2426
  %2444 = vmatprep.subr.mxu0 0.0
  %2445 = vmatpush1.msra.mxu0 %v2427
  %2446 = vmatprep.subr.mxu0 0.0
  %2447 = vmatpush1.msra.mxu0 %v2428
  %2448 = vmatprep.subr.mxu0 0.0
  %2449 = vmatpush1.msra.mxu0 %v2429
  %2450 = vmatprep.subr.mxu0 0.0
  %2451 = vmatpush1.msra.mxu0 %v2430
  %2452 = vmatprep.subr.mxu0 0.0
  %2453 = vmatpush1.msra.mxu0 %v2431
  %2454 = vmatprep.subr.mxu0 0.0
  %2455 = vmatpush1.msra.mxu0 %v2432
  %2456 = vmatprep.subr.mxu0 0.0
  %2457 = vmatpush1.msra.mxu0 %v2433
  %2458 = vmatprep.subr.mxu0 0.0
  %2459 = vmatpush1.msra.mxu0 %v2434
  %2460 = vmatprep.subr.mxu0 0.0
  %2461 = vmatpush1.msra.mxu0 %v2435
  %2462 = vmatprep.subr.mxu0 0.0
  %2463 = vmatpush1.msra.mxu0 %v2436
  %2464 = vmatprep.subr.mxu0 0.0
  %2465 = vmatpush1.msra.mxu0 %v2437
  %2466 = vmatprep.subr.mxu0 0.0
  %2467 = vmatpush1.msra.mxu0 %v2438
  %2468 = vmatprep.subr.mxu0 0.0
  %2469 = vmatpush1.msra.mxu0 %v2439
  %2470 = vmatprep.subr.mxu0 0.0
  %2471 = vmatpush1.msra.mxu0 %v2440
  %2472 = vmatprep.subr.mxu0 0.0
  %2473 = vmatpush1.msra.mxu0 %v2441
  %2474 = vmatprep.subr.mxu0 0.0
  %2475 = vmatpush1.msra.mxu0 0.0
  %2476 = vmatprep.subr.mxu0 0.0
  %2477 = vmatpush1.msra.mxu0 0.0
  %2478 = vmatprep.subr.mxu0 0.0
  %2479 = vmatpush1.msra.mxu0 0.0
  %2480 = vmatprep.subr.mxu0 0.0
  %2481 = vmatpush1.msra.mxu0 0.0
  %2482 = vmatprep.subr.mxu0 0.0
  %2483 = vmatpush1.msra.mxu0 0.0
  %2484 = vmatprep.subr.mxu0 0.0
  %2485 = vmatpush1.msra.mxu0 0.0
  %2486 = vmatprep.subr.mxu0 0.0
  %2487 = vmatpush1.msra.mxu0 0.0
  %2488 = vmatprep.subr.mxu0 0.0
  %2489 = vmatpush1.msra.mxu0 0.0
  %2490 = vmatprep.subr.mxu0 0.0
  %2491 = vmatpush1.msra.mxu0 0.0
  %2492 = vmatprep.subr.mxu0 0.0
  %2493 = vmatpush1.msra.mxu0 0.0
  %2494 = vmatprep.subr.mxu0 0.0
  %2495 = vmatpush1.msra.mxu0 0.0
  %2496 = vmatprep.subr.mxu0 0.0
  %2497 = vmatpush1.msra.mxu0 0.0
  %2498 = vmatprep.subr.mxu0 0.0
  %2499 = vmatpush1.msra.mxu0 0.0
  %2500 = vmatprep.subr.mxu0 0.0
  %2501 = vmatpush1.msra.mxu0 0.0
  %2502 = vmatprep.subr.mxu0 0.0
  %2503 = vmatpush1.msra.mxu0 0.0
  %2504 = vmatprep.subr.mxu0 0.0
  %2505 = vmatpush1.msra.mxu0 0.0
  %2506 = vmatprep.mubr.f32.mxu0 0.0
  %2507 = vmatmul.mubr.f32.gmra.mrb[0].mxu0 %v2420
  %v2508 = vpop.f32.mrb[0].mxu0
  %v2509 = vadd.f32 0.0, %v2508
  %v2510 = vpop.f32.mrb[0].mxu0
  %2511 = vmatprep.mubr.f32.mxu0 0.0
  %2512 = vmatmul.mubr.f32.gmra.mrb[0].mxu0 %v2421
  %v2513 = vpop.f32.mrb[0].mxu0
  %v2514 = vadd.f32 0.0, %v2513
  %v2515 = vpop.f32.mrb[0].mxu0
  %2516 = vmatprep.mubr.f32.mxu0 0.0
  %2517 = vmatmul.mubr.f32.gmra.mrb[0].mxu0 %v2422
  %v2518 = vpop.f32.mrb[0].mxu0
  %v2519 = vadd.f32 0.0, %v2518
  %v2520 = vpop.f32.mrb[0].mxu0
  %2521 = vmatprep.mubr.f32.mxu0 0.0
  %2522 = vmatmul.mubr.f32.gmra.mrb[0].mxu0 %v2423
  %v2523 = vpop.f32.mrb[0].mxu0
  %v2524 = vadd.f32 0.0, %v2523
  %v2525 = vpop.f32.mrb[0].mxu0
  %2526 = vmatprep.mubr.f32.mxu0 0.0
  %2527 = vmatmul.mubr.f32.gmra.mrb[0].mxu0 %v2424
  %v2528 = vpop.f32.mrb[0].mxu0
  %v2529 = vadd.f32 0.0, %v2528
  %v2530 = vpop.f32.mrb[0].mxu0
  %2531 = vdwg.mxu0
  %v2532 = vmax.f32 %v2420, %v2509
  %v2533 = vmax.f32 %v2421, %v2514
  %v2534 = vmax.f32 %v2422, %v2519
  %v2535 = vmax.f32 %v2423, %v2524
  %v2536 = vmax.f32 %v2424, %v2529
  %s2537 = scalar_lea.vmem %s4, 256
  %v2538 = vld [vmem:[%s2537] sm:$0xff]
  %v2539 = vld [vmem:[%s2537 + $0x8] sm:$0xff]
  %v2540 = vld [vmem:[%s2537 + $0x10] sm:$0xff]
  %v2541 = vld [vmem:[%s2537 + $0x18] sm:$0xff]
  %v2542 = vld [vmem:[%s2537 + $0x20] sm:$0xff]
  %v2543 = vld [vmem:[%s2537 + $0x28] sm:$0xff]
  %v2544 = vld [vmem:[%s2537 + $0x30] sm:$0xff]
  %v2545 = vld [vmem:[%s2537 + $0x38] sm:$0xff]
  %v2546 = vld [vmem:[%s2537 + $0x40] sm:$0xff]
  %v2547 = vld [vmem:[%s2537 + $0x48] sm:$0xff]
  %v2548 = vld [vmem:[%s2537 + $0x50] sm:$0xff]
  %v2549 = vld [vmem:[%s2537 + $0x58] sm:$0xff]
  %v2550 = vld [vmem:[%s2537 + $0x60] sm:$0xff]
  %v2551 = vld [vmem:[%s2537 + $0x68] sm:$0xff]
  %v2552 = vld [vmem:[%s2537 + $0x70] sm:$0xff]
  %v2553 = vld [vmem:[%s2537 + $0x78] sm:$0xff]
  %2554 = vmatprep.subr.mxu0 0.0
  %2555 = vmatpush1.msra.mxu0 %v2538
  %2556 = vmatprep.subr.mxu0 0.0
  %2557 = vmatpush1.msra.mxu0 %v2539
  %2558 = vmatprep.subr.mxu0 0.0
  %2559 = vmatpush1.msra.mxu0 %v2540
  %2560 = vmatprep.subr.mxu0 0.0
  %2561 = vmatpush1.msra.mxu0 %v2541
  %2562 = vmatprep.subr.mxu0 0.0
  %2563 = vmatpush1.msra.mxu0 %v2542
  %2564 = vmatprep.subr.mxu0 0.0
  %2565 = vmatpush1.msra.mxu0 %v2543
  %2566 = vmatprep.subr.mxu0 0.0
  %2567 = vmatpush1.msra.mxu0 %v2544
  %2568 = vmatprep.subr.mxu0 0.0
  %2569 = vmatpush1.msra.mxu0 %v2545
  %2570 = vmatprep.subr.mxu0 0.0
  %2571 = vmatpush1.msra.mxu0 %v2546
  %2572 = vmatprep.subr.mxu0 0.0
  %2573 = vmatpush1.msra.mxu0 %v2547
  %2574 = vmatprep.subr.mxu0 0.0
  %2575 = vmatpush1.msra.mxu0 %v2548
  %2576 = vmatprep.subr.mxu0 0.0
  %2577 = vmatpush1.msra.mxu0 %v2549
  %2578 = vmatprep.subr.mxu0 0.0
  %2579 = vmatpush1.msra.mxu0 %v2550
  %2580 = vmatprep.subr.mxu0 0.0
  %2581 = vmatpush1.msra.mxu0 %v2551
  %2582 = vmatprep.subr.mxu0 0.0
  %2583 = vmatpush1.msra.mxu0 %v2552
  %2584 = vmatprep.subr.mxu0 0.0
  %2585 = vmatpush1.msra.mxu0 %v2553
  %2586 = vmatprep.subr.mxu0 0.0
  %2587 = vmatpush1.msra.mxu0 0.0
  %2588 = vmatprep.subr.mxu0 0.0
  %2589 = vmatpush1.msra.mxu0 0.0
  %2590 = vmatprep.subr.mxu0 0.0
  %2591 = vmatpush1.msra.mxu0 0.0
  %2592 = vmatprep.subr.mxu0 0.0
  %2593 = vmatpush1.msra.mxu0 0.0
  %2594 = vmatprep.subr.mxu0 0.0
  %2595 = vmatpush1.msra.mxu0 0.0
  %2596 = vmatprep.subr.mxu0 0.0
  %2597 = vmatpush1.msra.mxu0 0.0
  %2598 = vmatprep.subr.mxu0 0.0
  %2599 = vmatpush1.msra.mxu0 0.0
  %2600 = vmatprep.subr.mxu0 0.0
  %2601 = vmatpush1.msra.mxu0 0.0
  %2602 = vmatprep.subr.mxu0 0.0
  %2603 = vmatpush1.msra.mxu0 0.0
  %2604 = vmatprep.subr.mxu0 0.0
  %2605 = vmatpush1.msra.mxu0 0.0
  %2606 = vmatprep.subr.mxu0 0.0
  %2607 = vmatpush1.msra.mxu0 0.0
  %2608 = vmatprep.subr.mxu0 0.0
  %2609 = vmatpush1.msra.mxu0 0.0
  %2610 = vmatprep.subr.mxu0 0.0
  %2611 = vmatpush1.msra.mxu0 0.0
  %2612 = vmatprep.subr.mxu0 0.0
  %2613 = vmatpush1.msra.mxu0 0.0
  %2614 = vmatprep.subr.mxu0 0.0
  %2615 = vmatpush1.msra.mxu0 0.0
  %2616 = vmatprep.subr.mxu0 0.0
  %2617 = vmatpush1.msra.mxu0 0.0
  %2618 = vmatprep.mubr.f32.mxu0 0.0
  %2619 = vmatmul.mubr.f32.gmra.mrb[0].mxu0 %v2532
  %v2620 = vpop.f32.mrb[0].mxu0
  %v2621 = vadd.f32 0.0, %v2620
  %v2622 = vpop.f32.mrb[0].mxu0
  %2623 = vmatprep.mubr.f32.mxu0 0.0
  %2624 = vmatmul.mubr.f32.gmra.mrb[0].mxu0 %v2533
  %v2625 = vpop.f32.mrb[0].mxu0
  %v2626 = vadd.f32 0.0, %v2625
  %v2627 = vpop.f32.mrb[0].mxu0
  %2628 = vmatprep.mubr.f32.mxu0 0.0
  %2629 = vmatmul.mubr.f32.gmra.mrb[0].mxu0 %v2534
  %v2630 = vpop.f32.mrb[0].mxu0
  %v2631 = vadd.f32 0.0, %v2630
  %v2632 = vpop.f32.mrb[0].mxu0
  %2633 = vmatprep.mubr.f32.mxu0 0.0
  %2634 = vmatmul.mubr.f32.gmra.mrb[0].mxu0 %v2535
  %v2635 = vpop.f32.mrb[0].mxu0
  %v2636 = vadd.f32 0.0, %v2635
  %v2637 = vpop.f32.mrb[0].mxu0
  %2638 = vmatprep.mubr.f32.mxu0 0.0
  %2639 = vmatmul.mubr.f32.gmra.mrb[0].mxu0 %v2536
  %v2640 = vpop.f32.mrb[0].mxu0
  %v2641 = vadd.f32 0.0, %v2640
  %v2642 = vpop.f32.mrb[0].mxu0
  %2643 = vdwg.mxu0
  %v2644 = vmax.f32 %v2532, %v2621
  %v2645 = vmax.f32 %v2533, %v2626
  %v2646 = vmax.f32 %v2534, %v2631
  %v2647 = vmax.f32 %v2535, %v2636
  %v2648 = vmax.f32 %v2536, %v2641
  %v2654 = vrot.slane %v2309, 1
  %v2655 = vrot.slane %v2310, 1
  %v2656 = vsel %vm60, %v2654, %v2655
  %v2657 = vrot.slane %v2311, 1
  %v2658 = vsel %vm60, %v2655, %v2657
  %v2659 = vrot.slane %v2312, 1
  %v2660 = vsel %vm60, %v2657, %v2659
  %v2661 = vrot.slane %v2313, 1
  %v2662 = vsel %vm60, %v2659, %v2661
  %v2668 = vrot.slane %v2309, 2
  %v2669 = vrot.slane %v2310, 2
  %v2670 = vsel %vm44, %v2668, %v2669
  %v2671 = vrot.slane %v2311, 2
  %v2672 = vsel %vm44, %v2669, %v2671
  %v2673 = vrot.slane %v2312, 2
  %v2674 = vsel %vm44, %v2671, %v2673
  %v2675 = vrot.slane %v2313, 2
  %v2676 = vsel %vm44, %v2673, %v2675
  %vm2682 = vcmask 1044480
  %v2683 = vrot.slane %v2309, 3
  %v2684 = vrot.slane %v2310, 3
  %v2685 = vsel %vm2682, %v2683, %v2684
  %v2686 = vrot.slane %v2311, 3
  %v2687 = vsel %vm2682, %v2684, %v2686
  %v2688 = vrot.slane %v2312, 3
  %v2689 = vsel %vm2682, %v2686, %v2688
  %v2690 = vrot.slane %v2313, 3
  %v2691 = vsel %vm2682, %v2688, %v2690
  %v2697 = vrot.slane %v2309, 4
  %v2698 = vrot.slane %v2310, 4
  %v2699 = vsel %vm53, %v2697, %v2698
  %v2700 = vrot.slane %v2311, 4
  %v2701 = vsel %vm53, %v2698, %v2700
  %v2702 = vrot.slane %v2312, 4
  %v2703 = vsel %vm53, %v2700, %v2702
  %v2704 = vrot.slane %v2313, 4
  %v2705 = vsel %vm53, %v2702, %v2704
  %v2716 = vrot.slane %v2644, 1
  %v2717 = vrot.slane %v2645, 1
  %v2718 = vsel %vm60, %v2716, %v2717
  %v2719 = vrot.slane %v2646, 1
  %v2720 = vsel %vm60, %v2717, %v2719
  %v2721 = vrot.slane %v2647, 1
  %v2722 = vsel %vm60, %v2719, %v2721
  %v2723 = vrot.slane %v2648, 1
  %v2724 = vsel %vm60, %v2721, %v2723
  %v2730 = vrot.slane %v2644, 2
  %v2731 = vrot.slane %v2645, 2
  %v2732 = vsel %vm44, %v2730, %v2731
  %v2733 = vrot.slane %v2646, 2
  %v2734 = vsel %vm44, %v2731, %v2733
  %v2735 = vrot.slane %v2647, 2
  %v2736 = vsel %vm44, %v2733, %v2735
  %v2737 = vrot.slane %v2648, 2
  %v2738 = vsel %vm44, %v2735, %v2737
  %v2744 = vrot.slane %v2644, 3
  %v2745 = vrot.slane %v2645, 3
  %v2746 = vsel %vm2682, %v2744, %v2745
  %v2747 = vrot.slane %v2646, 3
  %v2748 = vsel %vm2682, %v2745, %v2747
  %v2749 = vrot.slane %v2647, 3
  %v2750 = vsel %vm2682, %v2747, %v2749
  %v2751 = vrot.slane %v2648, 3
  %v2752 = vsel %vm2682, %v2749, %v2751
  %v2758 = vrot.slane %v2644, 4
  %v2759 = vrot.slane %v2645, 4
  %v2760 = vsel %vm53, %v2758, %v2759
  %v2761 = vrot.slane %v2646, 4
  %v2762 = vsel %vm53, %v2759, %v2761
  %v2763 = vrot.slane %v2647, 4
  %v2764 = vsel %vm53, %v2761, %v2763
  %v2765 = vrot.slane %v2648, 4
  %v2766 = vsel %vm53, %v2763, %v2765
  %v2772 = vld [vmem:[%s3] sm:$0xff]
  %v2773 = vld [vmem:[%s3 + $0x8] sm:$0xff]
  %v2774 = vld [vmem:[%s3 + $0x10] sm:$0xff]
  %v2775 = vld [vmem:[%s3 + $0x18] sm:$0xff]
  %v2776 = vld [vmem:[%s3 + $0x20] sm:$0xff]
  %v2777 = vld [vmem:[%s3 + $0x28] sm:$0xff]
  %v2778 = vld [vmem:[%s3 + $0x30] sm:$0xff]
  %v2779 = vld [vmem:[%s3 + $0x38] sm:$0xff]
  %v2780 = vld [vmem:[%s3 + $0x40] sm:$0xff]
  %v2781 = vld [vmem:[%s3 + $0x48] sm:$0xff]
  %v2782 = vld [vmem:[%s3 + $0x50] sm:$0xff]
  %v2783 = vld [vmem:[%s3 + $0x58] sm:$0xff]
  %v2784 = vld [vmem:[%s3 + $0x60] sm:$0xff]
  %v2785 = vld [vmem:[%s3 + $0x68] sm:$0xff]
  %v2786 = vld [vmem:[%s3 + $0x70] sm:$0xff]
  %v2787 = vld [vmem:[%s3 + $0x78] sm:$0xff]
  %v2788 = vld [vmem:[%s3 + $0x80] sm:$0xff]
  %v2789 = vld [vmem:[%s3 + $0x88] sm:$0xff]
  %v2790 = vld [vmem:[%s3 + $0x90] sm:$0xff]
  %v2791 = vld [vmem:[%s3 + $0x98] sm:$0xff]
  %v2792 = vld [vmem:[%s3 + $0xa0] sm:$0xff]
  %v2793 = vld [vmem:[%s3 + $0xa8] sm:$0xff]
  %v2794 = vld [vmem:[%s3 + $0xb0] sm:$0xff]
  %v2795 = vld [vmem:[%s3 + $0xb8] sm:$0xff]
  %v2796 = vld [vmem:[%s3 + $0xc0] sm:$0xff]
  %v2797 = vld [vmem:[%s3 + $0xc8] sm:$0xff]
  %v2798 = vld [vmem:[%s3 + $0xd0] sm:$0xff]
  %v2799 = vld [vmem:[%s3 + $0xd8] sm:$0xff]
  %v2800 = vld [vmem:[%s3 + $0xe0] sm:$0xff]
  %v2801 = vld [vmem:[%s3 + $0xe8] sm:$0xff]
  %v2802 = vld [vmem:[%s3 + $0xf0] sm:$0xff]
  %v2803 = vld [vmem:[%s3 + $0xf8] sm:$0xff]
  %v2804 = vld [vmem:[%s3 + $0x100] sm:$0xff]
  %v2805 = vld [vmem:[%s3 + $0x108] sm:$0xff]
  %v2806 = vld [vmem:[%s3 + $0x110] sm:$0xff]
  %v2807 = vld [vmem:[%s3 + $0x118] sm:$0xff]
  %v2808 = vld [vmem:[%s3 + $0x120] sm:$0xff]
  %v2809 = vld [vmem:[%s3 + $0x128] sm:$0xff]
  %v2810 = vld [vmem:[%s3 + $0x130] sm:$0xff]
  %v2811 = vld [vmem:[%s3 + $0x138] sm:$0xff]
  %v2812 = vld [vmem:[%s3 + $0x140] sm:$0xff]
  %v2813 = vld [vmem:[%s3 + $0x148] sm:$0xff]
  %v2814 = vld [vmem:[%s3 + $0x150] sm:$0xff]
  %v2815 = vld [vmem:[%s3 + $0x158] sm:$0xff]
  %v2816 = vld [vmem:[%s3 + $0x160] sm:$0xff]
  %v2817 = vld [vmem:[%s3 + $0x168] sm:$0xff]
  %v2818 = vld [vmem:[%s3 + $0x170] sm:$0xff]
  %v2819 = vld [vmem:[%s3 + $0x178] sm:$0xff]
  %v2820 = vld [vmem:[%s3 + $0x180] sm:$0xff]
  %v2821 = vld [vmem:[%s3 + $0x188] sm:$0xff]
  %v2822 = vld [vmem:[%s3 + $0x190] sm:$0xff]
  %v2823 = vld [vmem:[%s3 + $0x198] sm:$0xff]
  %v2824 = vld [vmem:[%s3 + $0x1a0] sm:$0xff]
  %v2825 = vld [vmem:[%s3 + $0x1a8] sm:$0xff]
  %v2826 = vld [vmem:[%s3 + $0x1b0] sm:$0xff]
  %v2827 = vld [vmem:[%s3 + $0x1b8] sm:$0xff]
  %v2828 = vld [vmem:[%s3 + $0x1c0] sm:$0xff]
  %v2829 = vld [vmem:[%s3 + $0x1c8] sm:$0xff]
  %v2830 = vld [vmem:[%s3 + $0x1d0] sm:$0xff]
  %v2831 = vld [vmem:[%s3 + $0x1d8] sm:$0xff]
  %v2832 = vld [vmem:[%s3 + $0x1e0] sm:$0xff]
  %v2833 = vld [vmem:[%s3 + $0x1e8] sm:$0xff]
  %v2834 = vld [vmem:[%s3 + $0x1f0] sm:$0xff]
  %v2835 = vld [vmem:[%s3 + $0x1f8] sm:$0xff]
  %v2836 = vld [vmem:[%s3 + $0x200] sm:$0xff]
  %v2837 = vld [vmem:[%s3 + $0x208] sm:$0xff]
  %v2838 = vld [vmem:[%s3 + $0x210] sm:$0xff]
  %v2839 = vld [vmem:[%s3 + $0x218] sm:$0xff]
  %v2840 = vld [vmem:[%s3 + $0x220] sm:$0xff]
  %v2841 = vld [vmem:[%s3 + $0x228] sm:$0xff]
  %v2842 = vld [vmem:[%s3 + $0x230] sm:$0xff]
  %v2843 = vld [vmem:[%s3 + $0x238] sm:$0xff]
  %v2844 = vld [vmem:[%s3 + $0x240] sm:$0xff]
  %v2845 = vld [vmem:[%s3 + $0x248] sm:$0xff]
  %v2846 = vld [vmem:[%s3 + $0x250] sm:$0xff]
  %v2847 = vld [vmem:[%s3 + $0x258] sm:$0xff]
  %v2848 = vld [vmem:[%s3 + $0x260] sm:$0xff]
  %v2849 = vld [vmem:[%s3 + $0x268] sm:$0xff]
  %v2850 = vld [vmem:[%s3 + $0x270] sm:$0xff]
  %v2851 = vld [vmem:[%s3 + $0x278] sm:$0xff]
  %v2852 = vld [vmem:[%s3 + $0x280] sm:$0xff]
  %v2853 = vld [vmem:[%s3 + $0x288] sm:$0xff]
  %v2854 = vld [vmem:[%s3 + $0x290] sm:$0xff]
  %v2855 = vld [vmem:[%s3 + $0x298] sm:$0xff]
  %v2856 = vld [vmem:[%s3 + $0x2a0] sm:$0xff]
  %v2857 = vld [vmem:[%s3 + $0x2a8] sm:$0xff]
  %v2858 = vld [vmem:[%s3 + $0x2b0] sm:$0xff]
  %v2859 = vld [vmem:[%s3 + $0x2b8] sm:$0xff]
  %v2860 = vld [vmem:[%s3 + $0x2c0] sm:$0xff]
  %v2861 = vld [vmem:[%s3 + $0x2c8] sm:$0xff]
  %v2862 = vld [vmem:[%s3 + $0x2d0] sm:$0xff]
  %v2863 = vld [vmem:[%s3 + $0x2d8] sm:$0xff]
  %v2864 = vld [vmem:[%s3 + $0x2e0] sm:$0xff]
  %v2865 = vld [vmem:[%s3 + $0x2e8] sm:$0xff]
  %v2866 = vld [vmem:[%s3 + $0x2f0] sm:$0xff]
  %v2867 = vld [vmem:[%s3 + $0x2f8] sm:$0xff]
  %v2868 = vld [vmem:[%s3 + $0x300] sm:$0xff]
  %v2869 = vld [vmem:[%s3 + $0x308] sm:$0xff]
  %v2870 = vld [vmem:[%s3 + $0x310] sm:$0xff]
  %v2871 = vld [vmem:[%s3 + $0x318] sm:$0xff]
  %v2872 = vld [vmem:[%s3 + $0x320] sm:$0xff]
  %v2873 = vld [vmem:[%s3 + $0x328] sm:$0xff]
  %v2874 = vld [vmem:[%s3 + $0x330] sm:$0xff]
  %v2875 = vld [vmem:[%s3 + $0x338] sm:$0xff]
  %v2876 = vld [vmem:[%s3 + $0x340] sm:$0xff]
  %v2877 = vld [vmem:[%s3 + $0x348] sm:$0xff]
  %v2878 = vld [vmem:[%s3 + $0x350] sm:$0xff]
  %v2879 = vld [vmem:[%s3 + $0x358] sm:$0xff]
  %v2880 = vld [vmem:[%s3 + $0x360] sm:$0xff]
  %v2881 = vld [vmem:[%s3 + $0x368] sm:$0xff]
  %v2882 = vld [vmem:[%s3 + $0x370] sm:$0xff]
  %v2883 = vld [vmem:[%s3 + $0x378] sm:$0xff]
  %v2884 = vld [vmem:[%s3 + $0x380] sm:$0xff]
  %v2885 = vld [vmem:[%s3 + $0x388] sm:$0xff]
  %v2886 = vld [vmem:[%s3 + $0x390] sm:$0xff]
  %v2887 = vld [vmem:[%s3 + $0x398] sm:$0xff]
  %v2888 = vld [vmem:[%s3 + $0x3a0] sm:$0xff]
  %v2889 = vld [vmem:[%s3 + $0x3a8] sm:$0xff]
  %v2890 = vld [vmem:[%s3 + $0x3b0] sm:$0xff]
  %v2891 = vld [vmem:[%s3 + $0x3b8] sm:$0xff]
  %v2892 = vld [vmem:[%s3 + $0x3c0] sm:$0xff]
  %v2893 = vld [vmem:[%s3 + $0x3c8] sm:$0xff]
  %v2894 = vld [vmem:[%s3 + $0x3d0] sm:$0xff]
  %v2895 = vld [vmem:[%s3 + $0x3d8] sm:$0xff]
  %v2896 = vld [vmem:[%s3 + $0x3e0] sm:$0xff]
  %v2897 = vld [vmem:[%s3 + $0x3e8] sm:$0xff]
  %v2898 = vld [vmem:[%s3 + $0x3f0] sm:$0xff]
  %v2899 = vld [vmem:[%s3 + $0x3f8] sm:$0xff]
  %v2900 = vld [vmem:[%s3 + $0x400] sm:$0xff]
  %v2901 = vld [vmem:[%s3 + $0x408] sm:$0xff]
  %v2902 = vld [vmem:[%s3 + $0x410] sm:$0xff]
  %v2903 = vld [vmem:[%s3 + $0x418] sm:$0xff]
  %v2904 = vld [vmem:[%s3 + $0x420] sm:$0xff]
  %v2905 = vld [vmem:[%s3 + $0x428] sm:$0xff]
  %v2906 = vld [vmem:[%s3 + $0x430] sm:$0xff]
  %v2907 = vld [vmem:[%s3 + $0x438] sm:$0xff]
  %v2908 = vld [vmem:[%s3 + $0x440] sm:$0xff]
  %v2909 = vld [vmem:[%s3 + $0x448] sm:$0xff]
  %v2910 = vld [vmem:[%s3 + $0x450] sm:$0xff]
  %v2911 = vld [vmem:[%s3 + $0x458] sm:$0xff]
  %v2912 = vld [vmem:[%s3 + $0x460] sm:$0xff]
  %v2913 = vld [vmem:[%s3 + $0x468] sm:$0xff]
  %v2914 = vld [vmem:[%s3 + $0x470] sm:$0xff]
  %v2915 = vld [vmem:[%s3 + $0x478] sm:$0xff]
  %v2916 = vld [vmem:[%s3 + $0x480] sm:$0xff]
  %v2917 = vld [vmem:[%s3 + $0x488] sm:$0xff]
  %v2918 = vld [vmem:[%s3 + $0x490] sm:$0xff]
  %v2919 = vld [vmem:[%s3 + $0x498] sm:$0xff]
  %v2920 = vld [vmem:[%s3 + $0x4a0] sm:$0xff]
  %v2921 = vld [vmem:[%s3 + $0x4a8] sm:$0xff]
  %v2922 = vld [vmem:[%s3 + $0x4b0] sm:$0xff]
  %v2923 = vld [vmem:[%s3 + $0x4b8] sm:$0xff]
  %v2924 = vld [vmem:[%s3 + $0x4c0] sm:$0xff]
  %v2925 = vld [vmem:[%s3 + $0x4c8] sm:$0xff]
  %v2926 = vld [vmem:[%s3 + $0x4d0] sm:$0xff]
  %v2927 = vld [vmem:[%s3 + $0x4d8] sm:$0xff]
  %v2928 = vld [vmem:[%s3 + $0x4e0] sm:$0xff]
  %v2929 = vld [vmem:[%s3 + $0x4e8] sm:$0xff]
  %v2930 = vld [vmem:[%s3 + $0x4f0] sm:$0xff]
  %v2931 = vld [vmem:[%s3 + $0x4f8] sm:$0xff]
  %2932 = vmatprep.subr.mxu0 0.0
  %2933 = vmatpush1.msra.mxu0 %v2772
  %2934 = vmatprep.subr.mxu0 0.0
  %2935 = vmatpush1.msra.mxu0 %v2773
  %2936 = vmatprep.subr.mxu0 0.0
  %2937 = vmatpush1.msra.mxu0 %v2774
  %2938 = vmatprep.subr.mxu0 0.0
  %2939 = vmatpush1.msra.mxu0 %v2775
  %2940 = vmatprep.subr.mxu0 0.0
  %2941 = vmatpush1.msra.mxu0 %v2776
  %2942 = vmatprep.subr.mxu0 0.0
  %2943 = vmatpush1.msra.mxu0 %v2777
  %2944 = vmatprep.subr.mxu0 0.0
  %2945 = vmatpush1.msra.mxu0 %v2778
  %2946 = vmatprep.subr.mxu0 0.0
  %2947 = vmatpush1.msra.mxu0 %v2779
  %2948 = vmatprep.subr.mxu0 0.0
  %2949 = vmatpush1.msra.mxu0 %v2780
  %2950 = vmatprep.subr.mxu0 0.0
  %2951 = vmatpush1.msra.mxu0 %v2781
  %2952 = vmatprep.subr.mxu0 0.0
  %2953 = vmatpush1.msra.mxu0 %v2782
  %2954 = vmatprep.subr.mxu0 0.0
  %2955 = vmatpush1.msra.mxu0 %v2783
  %2956 = vmatprep.subr.mxu0 0.0
  %2957 = vmatpush1.msra.mxu0 %v2784
  %2958 = vmatprep.subr.mxu0 0.0
  %2959 = vmatpush1.msra.mxu0 %v2785
  %2960 = vmatprep.subr.mxu0 0.0
  %2961 = vmatpush1.msra.mxu0 %v2786
  %2962 = vmatprep.subr.mxu0 0.0
  %2963 = vmatpush1.msra.mxu0 %v2787
  %2964 = vmatprep.subr.mxu0 0.0
  %2965 = vmatpush1.msra.mxu0 %v2788
  %2966 = vmatprep.subr.mxu0 0.0
  %2967 = vmatpush1.msra.mxu0 %v2789
  %2968 = vmatprep.subr.mxu0 0.0
  %2969 = vmatpush1.msra.mxu0 %v2790
  %2970 = vmatprep.subr.mxu0 0.0
  %2971 = vmatpush1.msra.mxu0 %v2791
  %2972 = vmatprep.subr.mxu0 0.0
  %2973 = vmatpush1.msra.mxu0 %v2792
  %2974 = vmatprep.subr.mxu0 0.0
  %2975 = vmatpush1.msra.mxu0 %v2793
  %2976 = vmatprep.subr.mxu0 0.0
  %2977 = vmatpush1.msra.mxu0 %v2794
  %2978 = vmatprep.subr.mxu0 0.0
  %2979 = vmatpush1.msra.mxu0 %v2795
  %2980 = vmatprep.subr.mxu0 0.0
  %2981 = vmatpush1.msra.mxu0 %v2796
  %2982 = vmatprep.subr.mxu0 0.0
  %2983 = vmatpush1.msra.mxu0 %v2797
  %2984 = vmatprep.subr.mxu0 0.0
  %2985 = vmatpush1.msra.mxu0 %v2798
  %2986 = vmatprep.subr.mxu0 0.0
  %2987 = vmatpush1.msra.mxu0 %v2799
  %2988 = vmatprep.subr.mxu0 0.0
  %2989 = vmatpush1.msra.mxu0 %v2800
  %2990 = vmatprep.subr.mxu0 0.0
  %2991 = vmatpush1.msra.mxu0 %v2801
  %2992 = vmatprep.subr.mxu0 0.0
  %2993 = vmatpush1.msra.mxu0 %v2802
  %2994 = vmatprep.subr.mxu0 0.0
  %2995 = vmatpush1.msra.mxu0 %v2803
  %2996 = vmatprep.mubr.f32.mxu0 %v2656
  %2997 = vmatmul.mubr.f32.gmra.mrb[0].mxu0 %v2309
  %v2998 = vpop.f32.mrb[0].mxu0
  %v2999 = vadd.f32 0.0, %v2998
  %v3000 = vpop.f32.mrb[0].mxu0
  %3001 = vmatprep.mubr.f32.mxu0 %v2658
  %3002 = vmatmul.mubr.f32.gmra.mrb[0].mxu0 %v2310
  %v3003 = vpop.f32.mrb[0].mxu0
  %v3004 = vadd.f32 0.0, %v3003
  %v3005 = vpop.f32.mrb[0].mxu0
  %3006 = vmatprep.mubr.f32.mxu0 %v2660
  %3007 = vmatmul.mubr.f32.gmra.mrb[0].mxu0 %v2311
  %v3008 = vpop.f32.mrb[0].mxu0
  %v3009 = vadd.f32 0.0, %v3008
  %v3010 = vpop.f32.mrb[0].mxu0
  %3011 = vmatprep.mubr.f32.mxu0 %v2662
  %3012 = vmatmul.mubr.f32.gmra.mrb[0].mxu0 %v2312
  %v3013 = vpop.f32.mrb[0].mxu0
  %v3014 = vadd.f32 0.0, %v3013
  %v3015 = vpop.f32.mrb[0].mxu0
  %3016 = vmatprep.mubr.f32.mxu0 %v2661
  %3017 = vmatmul.mubr.f32.gmra.mrb[0].mxu0 %v2313
  %v3018 = vpop.f32.mrb[0].mxu0
  %v3019 = vadd.f32 0.0, %v3018
  %v3020 = vpop.f32.mrb[0].mxu0
  %3021 = vdwg.mxu0
  %3022 = vmatprep.subr.mxu0 0.0
  %3023 = vmatpush1.msra.mxu0 %v2804
  %3024 = vmatprep.subr.mxu0 0.0
  %3025 = vmatpush1.msra.mxu0 %v2805
  %3026 = vmatprep.subr.mxu0 0.0
  %3027 = vmatpush1.msra.mxu0 %v2806
  %3028 = vmatprep.subr.mxu0 0.0
  %3029 = vmatpush1.msra.mxu0 %v2807
  %3030 = vmatprep.subr.mxu0 0.0
  %3031 = vmatpush1.msra.mxu0 %v2808
  %3032 = vmatprep.subr.mxu0 0.0
  %3033 = vmatpush1.msra.mxu0 %v2809
  %3034 = vmatprep.subr.mxu0 0.0
  %3035 = vmatpush1.msra.mxu0 %v2810
  %3036 = vmatprep.subr.mxu0 0.0
  %3037 = vmatpush1.msra.mxu0 %v2811
  %3038 = vmatprep.subr.mxu0 0.0
  %3039 = vmatpush1.msra.mxu0 %v2812
  %3040 = vmatprep.subr.mxu0 0.0
  %3041 = vmatpush1.msra.mxu0 %v2813
  %3042 = vmatprep.subr.mxu0 0.0
  %3043 = vmatpush1.msra.mxu0 %v2814
  %3044 = vmatprep.subr.mxu0 0.0
  %3045 = vmatpush1.msra.mxu0 %v2815
  %3046 = vmatprep.subr.mxu0 0.0
  %3047 = vmatpush1.msra.mxu0 %v2816
  %3048 = vmatprep.subr.mxu0 0.0
  %3049 = vmatpush1.msra.mxu0 %v2817
  %3050 = vmatprep.subr.mxu0 0.0
  %3051 = vmatpush1.msra.mxu0 %v2818
  %3052 = vmatprep.subr.mxu0 0.0
  %3053 = vmatpush1.msra.mxu0 %v2819
  %3054 = vmatprep.subr.mxu0 0.0
  %3055 = vmatpush1.msra.mxu0 %v2820
  %3056 = vmatprep.subr.mxu0 0.0
  %3057 = vmatpush1.msra.mxu0 %v2821
  %3058 = vmatprep.subr.mxu0 0.0
  %3059 = vmatpush1.msra.mxu0 %v2822
  %3060 = vmatprep.subr.mxu0 0.0
  %3061 = vmatpush1.msra.mxu0 %v2823
  %3062 = vmatprep.subr.mxu0 0.0
  %3063 = vmatpush1.msra.mxu0 %v2824
  %3064 = vmatprep.subr.mxu0 0.0
  %3065 = vmatpush1.msra.mxu0 %v2825
  %3066 = vmatprep.subr.mxu0 0.0
  %3067 = vmatpush1.msra.mxu0 %v2826
  %3068 = vmatprep.subr.mxu0 0.0
  %3069 = vmatpush1.msra.mxu0 %v2827
  %3070 = vmatprep.subr.mxu0 0.0
  %3071 = vmatpush1.msra.mxu0 %v2828
  %3072 = vmatprep.subr.mxu0 0.0
  %3073 = vmatpush1.msra.mxu0 %v2829
  %3074 = vmatprep.subr.mxu0 0.0
  %3075 = vmatpush1.msra.mxu0 %v2830
  %3076 = vmatprep.subr.mxu0 0.0
  %3077 = vmatpush1.msra.mxu0 %v2831
  %3078 = vmatprep.subr.mxu0 0.0
  %3079 = vmatpush1.msra.mxu0 %v2832
  %3080 = vmatprep.subr.mxu0 0.0
  %3081 = vmatpush1.msra.mxu0 %v2833
  %3082 = vmatprep.subr.mxu0 0.0
  %3083 = vmatpush1.msra.mxu0 %v2834
  %3084 = vmatprep.subr.mxu0 0.0
  %3085 = vmatpush1.msra.mxu0 %v2835
  %3086 = vmatprep.mubr.f32.mxu0 %v2685
  %3087 = vmatmul.mubr.f32.gmra.mrb[0].mxu0 %v2670
  %v3088 = vpop.f32.mrb[0].mxu0
  %v3089 = vadd.f32 %v2999, %v3088
  %v3090 = vpop.f32.mrb[0].mxu0
  %3091 = vmatprep.mubr.f32.mxu0 %v2687
  %3092 = vmatmul.mubr.f32.gmra.mrb[0].mxu0 %v2672
  %v3093 = vpop.f32.mrb[0].mxu0
  %v3094 = vadd.f32 %v3004, %v3093
  %v3095 = vpop.f32.mrb[0].mxu0
  %3096 = vmatprep.mubr.f32.mxu0 %v2689
  %3097 = vmatmul.mubr.f32.gmra.mrb[0].mxu0 %v2674
  %v3098 = vpop.f32.mrb[0].mxu0
  %v3099 = vadd.f32 %v3009, %v3098
  %v3100 = vpop.f32.mrb[0].mxu0
  %3101 = vmatprep.mubr.f32.mxu0 %v2691
  %3102 = vmatmul.mubr.f32.gmra.mrb[0].mxu0 %v2676
  %v3103 = vpop.f32.mrb[0].mxu0
  %v3104 = vadd.f32 %v3014, %v3103
  %v3105 = vpop.f32.mrb[0].mxu0
  %3106 = vmatprep.mubr.f32.mxu0 %v2690
  %3107 = vmatmul.mubr.f32.gmra.mrb[0].mxu0 %v2675
  %v3108 = vpop.f32.mrb[0].mxu0
  %v3109 = vadd.f32 %v3019, %v3108
  %v3110 = vpop.f32.mrb[0].mxu0
  %3111 = vdwg.mxu0
  %3112 = vmatprep.subr.mxu0 0.0
  %3113 = vmatpush1.msra.mxu0 %v2836
  %3114 = vmatprep.subr.mxu0 0.0
  %3115 = vmatpush1.msra.mxu0 %v2837
  %3116 = vmatprep.subr.mxu0 0.0
  %3117 = vmatpush1.msra.mxu0 %v2838
  %3118 = vmatprep.subr.mxu0 0.0
  %3119 = vmatpush1.msra.mxu0 %v2839
  %3120 = vmatprep.subr.mxu0 0.0
  %3121 = vmatpush1.msra.mxu0 %v2840
  %3122 = vmatprep.subr.mxu0 0.0
  %3123 = vmatpush1.msra.mxu0 %v2841
  %3124 = vmatprep.subr.mxu0 0.0
  %3125 = vmatpush1.msra.mxu0 %v2842
  %3126 = vmatprep.subr.mxu0 0.0
  %3127 = vmatpush1.msra.mxu0 %v2843
  %3128 = vmatprep.subr.mxu0 0.0
  %3129 = vmatpush1.msra.mxu0 %v2844
  %3130 = vmatprep.subr.mxu0 0.0
  %3131 = vmatpush1.msra.mxu0 %v2845
  %3132 = vmatprep.subr.mxu0 0.0
  %3133 = vmatpush1.msra.mxu0 %v2846
  %3134 = vmatprep.subr.mxu0 0.0
  %3135 = vmatpush1.msra.mxu0 %v2847
  %3136 = vmatprep.subr.mxu0 0.0
  %3137 = vmatpush1.msra.mxu0 %v2848
  %3138 = vmatprep.subr.mxu0 0.0
  %3139 = vmatpush1.msra.mxu0 %v2849
  %3140 = vmatprep.subr.mxu0 0.0
  %3141 = vmatpush1.msra.mxu0 %v2850
  %3142 = vmatprep.subr.mxu0 0.0
  %3143 = vmatpush1.msra.mxu0 %v2851
  %3144 = vmatprep.subr.mxu0 0.0
  %3145 = vmatpush1.msra.mxu0 %v2852
  %3146 = vmatprep.subr.mxu0 0.0
  %3147 = vmatpush1.msra.mxu0 %v2853
  %3148 = vmatprep.subr.mxu0 0.0
  %3149 = vmatpush1.msra.mxu0 %v2854
  %3150 = vmatprep.subr.mxu0 0.0
  %3151 = vmatpush1.msra.mxu0 %v2855
  %3152 = vmatprep.subr.mxu0 0.0
  %3153 = vmatpush1.msra.mxu0 %v2856
  %3154 = vmatprep.subr.mxu0 0.0
  %3155 = vmatpush1.msra.mxu0 %v2857
  %3156 = vmatprep.subr.mxu0 0.0
  %3157 = vmatpush1.msra.mxu0 %v2858
  %3158 = vmatprep.subr.mxu0 0.0
  %3159 = vmatpush1.msra.mxu0 %v2859
  %3160 = vmatprep.subr.mxu0 0.0
  %3161 = vmatpush1.msra.mxu0 %v2860
  %3162 = vmatprep.subr.mxu0 0.0
  %3163 = vmatpush1.msra.mxu0 %v2861
  %3164 = vmatprep.subr.mxu0 0.0
  %3165 = vmatpush1.msra.mxu0 %v2862
  %3166 = vmatprep.subr.mxu0 0.0
  %3167 = vmatpush1.msra.mxu0 %v2863
  %3168 = vmatprep.subr.mxu0 0.0
  %3169 = vmatpush1.msra.mxu0 %v2864
  %3170 = vmatprep.subr.mxu0 0.0
  %3171 = vmatpush1.msra.mxu0 %v2865
  %3172 = vmatprep.subr.mxu0 0.0
  %3173 = vmatpush1.msra.mxu0 %v2866
  %3174 = vmatprep.subr.mxu0 0.0
  %3175 = vmatpush1.msra.mxu0 %v2867
  %3176 = vmatprep.mubr.f32.mxu0 %v2644
  %3177 = vmatmul.mubr.f32.gmra.mrb[0].mxu0 %v2699
  %v3178 = vpop.f32.mrb[0].mxu0
  %v3179 = vadd.f32 %v3089, %v3178
  %v3180 = vpop.f32.mrb[0].mxu0
  %3181 = vmatprep.mubr.f32.mxu0 %v2645
  %3182 = vmatmul.mubr.f32.gmra.mrb[0].mxu0 %v2701
  %v3183 = vpop.f32.mrb[0].mxu0
  %v3184 = vadd.f32 %v3094, %v3183
  %v3185 = vpop.f32.mrb[0].mxu0
  %3186 = vmatprep.mubr.f32.mxu0 %v2646
  %3187 = vmatmul.mubr.f32.gmra.mrb[0].mxu0 %v2703
  %v3188 = vpop.f32.mrb[0].mxu0
  %v3189 = vadd.f32 %v3099, %v3188
  %v3190 = vpop.f32.mrb[0].mxu0
  %3191 = vmatprep.mubr.f32.mxu0 %v2647
  %3192 = vmatmul.mubr.f32.gmra.mrb[0].mxu0 %v2705
  %v3193 = vpop.f32.mrb[0].mxu0
  %v3194 = vadd.f32 %v3104, %v3193
  %v3195 = vpop.f32.mrb[0].mxu0
  %3196 = vmatprep.mubr.f32.mxu0 %v2648
  %3197 = vmatmul.mubr.f32.gmra.mrb[0].mxu0 %v2704
  %v3198 = vpop.f32.mrb[0].mxu0
  %v3199 = vadd.f32 %v3109, %v3198
  %v3200 = vpop.f32.mrb[0].mxu0
  %3201 = vdwg.mxu0
  %3202 = vmatprep.subr.mxu0 0.0
  %3203 = vmatpush1.msra.mxu0 %v2868
  %3204 = vmatprep.subr.mxu0 0.0
  %3205 = vmatpush1.msra.mxu0 %v2869
  %3206 = vmatprep.subr.mxu0 0.0
  %3207 = vmatpush1.msra.mxu0 %v2870
  %3208 = vmatprep.subr.mxu0 0.0
  %3209 = vmatpush1.msra.mxu0 %v2871
  %3210 = vmatprep.subr.mxu0 0.0
  %3211 = vmatpush1.msra.mxu0 %v2872
  %3212 = vmatprep.subr.mxu0 0.0
  %3213 = vmatpush1.msra.mxu0 %v2873
  %3214 = vmatprep.subr.mxu0 0.0
  %3215 = vmatpush1.msra.mxu0 %v2874
  %3216 = vmatprep.subr.mxu0 0.0
  %3217 = vmatpush1.msra.mxu0 %v2875
  %3218 = vmatprep.subr.mxu0 0.0
  %3219 = vmatpush1.msra.mxu0 %v2876
  %3220 = vmatprep.subr.mxu0 0.0
  %3221 = vmatpush1.msra.mxu0 %v2877
  %3222 = vmatprep.subr.mxu0 0.0
  %3223 = vmatpush1.msra.mxu0 %v2878
  %3224 = vmatprep.subr.mxu0 0.0
  %3225 = vmatpush1.msra.mxu0 %v2879
  %3226 = vmatprep.subr.mxu0 0.0
  %3227 = vmatpush1.msra.mxu0 %v2880
  %3228 = vmatprep.subr.mxu0 0.0
  %3229 = vmatpush1.msra.mxu0 %v2881
  %3230 = vmatprep.subr.mxu0 0.0
  %3231 = vmatpush1.msra.mxu0 %v2882
  %3232 = vmatprep.subr.mxu0 0.0
  %3233 = vmatpush1.msra.mxu0 %v2883
  %3234 = vmatprep.subr.mxu0 0.0
  %3235 = vmatpush1.msra.mxu0 %v2884
  %3236 = vmatprep.subr.mxu0 0.0
  %3237 = vmatpush1.msra.mxu0 %v2885
  %3238 = vmatprep.subr.mxu0 0.0
  %3239 = vmatpush1.msra.mxu0 %v2886
  %3240 = vmatprep.subr.mxu0 0.0
  %3241 = vmatpush1.msra.mxu0 %v2887
  %3242 = vmatprep.subr.mxu0 0.0
  %3243 = vmatpush1.msra.mxu0 %v2888
  %3244 = vmatprep.subr.mxu0 0.0
  %3245 = vmatpush1.msra.mxu0 %v2889
  %3246 = vmatprep.subr.mxu0 0.0
  %3247 = vmatpush1.msra.mxu0 %v2890
  %3248 = vmatprep.subr.mxu0 0.0
  %3249 = vmatpush1.msra.mxu0 %v2891
  %3250 = vmatprep.subr.mxu0 0.0
  %3251 = vmatpush1.msra.mxu0 %v2892
  %3252 = vmatprep.subr.mxu0 0.0
  %3253 = vmatpush1.msra.mxu0 %v2893
  %3254 = vmatprep.subr.mxu0 0.0
  %3255 = vmatpush1.msra.mxu0 %v2894
  %3256 = vmatprep.subr.mxu0 0.0
  %3257 = vmatpush1.msra.mxu0 %v2895
  %3258 = vmatprep.subr.mxu0 0.0
  %3259 = vmatpush1.msra.mxu0 %v2896
  %3260 = vmatprep.subr.mxu0 0.0
  %3261 = vmatpush1.msra.mxu0 %v2897
  %3262 = vmatprep.subr.mxu0 0.0
  %3263 = vmatpush1.msra.mxu0 %v2898
  %3264 = vmatprep.subr.mxu0 0.0
  %3265 = vmatpush1.msra.mxu0 %v2899
  %3266 = vmatprep.mubr.f32.mxu0 %v2732
  %3267 = vmatmul.mubr.f32.gmra.mrb[0].mxu0 %v2718
  %v3268 = vpop.f32.mrb[0].mxu0
  %v3269 = vadd.f32 %v3179, %v3268
  %v3270 = vpop.f32.mrb[0].mxu0
  %3271 = vmatprep.mubr.f32.mxu0 %v2734
  %3272 = vmatmul.mubr.f32.gmra.mrb[0].mxu0 %v2720
  %v3273 = vpop.f32.mrb[0].mxu0
  %v3274 = vadd.f32 %v3184, %v3273
  %v3275 = vpop.f32.mrb[0].mxu0
  %3276 = vmatprep.mubr.f32.mxu0 %v2736
  %3277 = vmatmul.mubr.f32.gmra.mrb[0].mxu0 %v2722
  %v3278 = vpop.f32.mrb[0].mxu0
  %v3279 = vadd.f32 %v3189, %v3278
  %v3280 = vpop.f32.mrb[0].mxu0
  %3281 = vmatprep.mubr.f32.mxu0 %v2738
  %3282 = vmatmul.mubr.f32.gmra.mrb[0].mxu0 %v2724
  %v3283 = vpop.f32.mrb[0].mxu0
  %v3284 = vadd.f32 %v3194, %v3283
  %v3285 = vpop.f32.mrb[0].mxu0
  %3286 = vmatprep.mubr.f32.mxu0 %v2737
  %3287 = vmatmul.mubr.f32.gmra.mrb[0].mxu0 %v2723
  %v3288 = vpop.f32.mrb[0].mxu0
  %v3289 = vadd.f32 %v3199, %v3288
  %v3290 = vpop.f32.mrb[0].mxu0
  %3291 = vdwg.mxu0
  %3292 = vmatprep.subr.mxu0 0.0
  %3293 = vmatpush1.msra.mxu0 %v2900
  %3294 = vmatprep.subr.mxu0 0.0
  %3295 = vmatpush1.msra.mxu0 %v2901
  %3296 = vmatprep.subr.mxu0 0.0
  %3297 = vmatpush1.msra.mxu0 %v2902
  %3298 = vmatprep.subr.mxu0 0.0
  %3299 = vmatpush1.msra.mxu0 %v2903
  %3300 = vmatprep.subr.mxu0 0.0
  %3301 = vmatpush1.msra.mxu0 %v2904
  %3302 = vmatprep.subr.mxu0 0.0
  %3303 = vmatpush1.msra.mxu0 %v2905
  %3304 = vmatprep.subr.mxu0 0.0
  %3305 = vmatpush1.msra.mxu0 %v2906
  %3306 = vmatprep.subr.mxu0 0.0
  %3307 = vmatpush1.msra.mxu0 %v2907
  %3308 = vmatprep.subr.mxu0 0.0
  %3309 = vmatpush1.msra.mxu0 %v2908
  %3310 = vmatprep.subr.mxu0 0.0
  %3311 = vmatpush1.msra.mxu0 %v2909
  %3312 = vmatprep.subr.mxu0 0.0
  %3313 = vmatpush1.msra.mxu0 %v2910
  %3314 = vmatprep.subr.mxu0 0.0
  %3315 = vmatpush1.msra.mxu0 %v2911
  %3316 = vmatprep.subr.mxu0 0.0
  %3317 = vmatpush1.msra.mxu0 %v2912
  %3318 = vmatprep.subr.mxu0 0.0
  %3319 = vmatpush1.msra.mxu0 %v2913
  %3320 = vmatprep.subr.mxu0 0.0
  %3321 = vmatpush1.msra.mxu0 %v2914
  %3322 = vmatprep.subr.mxu0 0.0
  %3323 = vmatpush1.msra.mxu0 %v2915
  %3324 = vmatprep.subr.mxu0 0.0
  %3325 = vmatpush1.msra.mxu0 %v2916
  %3326 = vmatprep.subr.mxu0 0.0
  %3327 = vmatpush1.msra.mxu0 %v2917
  %3328 = vmatprep.subr.mxu0 0.0
  %3329 = vmatpush1.msra.mxu0 %v2918
  %3330 = vmatprep.subr.mxu0 0.0
  %3331 = vmatpush1.msra.mxu0 %v2919
  %3332 = vmatprep.subr.mxu0 0.0
  %3333 = vmatpush1.msra.mxu0 %v2920
  %3334 = vmatprep.subr.mxu0 0.0
  %3335 = vmatpush1.msra.mxu0 %v2921
  %3336 = vmatprep.subr.mxu0 0.0
  %3337 = vmatpush1.msra.mxu0 %v2922
  %3338 = vmatprep.subr.mxu0 0.0
  %3339 = vmatpush1.msra.mxu0 %v2923
  %3340 = vmatprep.subr.mxu0 0.0
  %3341 = vmatpush1.msra.mxu0 %v2924
  %3342 = vmatprep.subr.mxu0 0.0
  %3343 = vmatpush1.msra.mxu0 %v2925
  %3344 = vmatprep.subr.mxu0 0.0
  %3345 = vmatpush1.msra.mxu0 %v2926
  %3346 = vmatprep.subr.mxu0 0.0
  %3347 = vmatpush1.msra.mxu0 %v2927
  %3348 = vmatprep.subr.mxu0 0.0
  %3349 = vmatpush1.msra.mxu0 %v2928
  %3350 = vmatprep.subr.mxu0 0.0
  %3351 = vmatpush1.msra.mxu0 %v2929
  %3352 = vmatprep.subr.mxu0 0.0
  %3353 = vmatpush1.msra.mxu0 %v2930
  %3354 = vmatprep.subr.mxu0 0.0
  %3355 = vmatpush1.msra.mxu0 %v2931
  %3356 = vmatprep.mubr.f32.mxu0 %v2760
  %3357 = vmatmul.mubr.f32.gmra.mrb[0].mxu0 %v2746
  %v3358 = vpop.f32.mrb[0].mxu0
  %v3359 = vadd.f32 %v3269, %v3358
  %v3360 = vpop.f32.mrb[0].mxu0
  %3361 = vmatprep.mubr.f32.mxu0 %v2762
  %3362 = vmatmul.mubr.f32.gmra.mrb[0].mxu0 %v2748
  %v3363 = vpop.f32.mrb[0].mxu0
  %v3364 = vadd.f32 %v3274, %v3363
  %v3365 = vpop.f32.mrb[0].mxu0
  %3366 = vmatprep.mubr.f32.mxu0 %v2764
  %3367 = vmatmul.mubr.f32.gmra.mrb[0].mxu0 %v2750
  %v3368 = vpop.f32.mrb[0].mxu0
  %v3369 = vadd.f32 %v3279, %v3368
  %v3370 = vpop.f32.mrb[0].mxu0
  %3371 = vmatprep.mubr.f32.mxu0 %v2766
  %3372 = vmatmul.mubr.f32.gmra.mrb[0].mxu0 %v2752
  %v3373 = vpop.f32.mrb[0].mxu0
  %v3374 = vadd.f32 %v3284, %v3373
  %v3375 = vpop.f32.mrb[0].mxu0
  %3376 = vmatprep.mubr.f32.mxu0 %v2765
  %3377 = vmatmul.mubr.f32.gmra.mrb[0].mxu0 %v2751
  %v3378 = vpop.f32.mrb[0].mxu0
  %v3379 = vadd.f32 %v3289, %v3378
  %v3380 = vpop.f32.mrb[0].mxu0
  %3381 = vdwg.mxu0
  %v3382 = vmax.f32 %v3359, 0.0
  %v3383 = vmax.f32 %v3364, 0.0
  %v3384 = vmax.f32 %v3369, 0.0
  %v3385 = vmax.f32 %v3374, 0.0
  %v3386 = vmax.f32 %v3379, 0.0
  %v3387 = vxor.u32 %v3382, 2147483648
  %v3388 = vxor.u32 %v3383, 2147483648
  %v3389 = vxor.u32 %v3384, 2147483648
  %v3390 = vxor.u32 %v3385, 2147483648
  %v3391 = vxor.u32 %v3386, 2147483648
  %v3392 = vmul.f32 %v3387, 1.442695
  %v3393 = vpow.pop %v3392
  %v3394 = vmul.f32 %v3388, 1.442695
  %v3395 = vpow.pop %v3394
  %v3396 = vmul.f32 %v3389, 1.442695
  %v3397 = vpow.pop %v3396
  %v3398 = vmul.f32 %v3390, 1.442695
  %v3399 = vpow.pop %v3398
  %v3400 = vmul.f32 %v3391, 1.442695
  %v3401 = vpow.pop %v3400
  %v3402 = vadd.f32 %v3393, 1.0
  %v3403 = vadd.f32 %v3395, 1.0
  %v3404 = vadd.f32 %v3397, 1.0
  %v3405 = vadd.f32 %v3399, 1.0
  %v3406 = vadd.f32 %v3401, 1.0
  %v3407 = vrcp.pop %v3402
  %v3408 = vmul.f32 1.0, %v3407
  %v3409 = vrcp.pop %v3403
  %v3410 = vmul.f32 1.0, %v3409
  %v3411 = vrcp.pop %v3404
  %v3412 = vmul.f32 1.0, %v3411
  %v3413 = vrcp.pop %v3405
  %v3414 = vmul.f32 1.0, %v3413
  %v3415 = vrcp.pop %v3406
  %v3416 = vmul.f32 1.0, %v3415
  %v3422 = vrot.slane %v3408, 6
  %v3423 = vrot.slane %v3410, 6
  %v3424 = vsel %vm35, %v3422, %v3423
  %v3425 = vrot.slane %v3412, 6
  %v3426 = vsel %vm35, %v3423, %v3425
  %v3427 = vrot.slane %v3414, 6
  %v3428 = vsel %vm35, %v3425, %v3427
  %v3429 = vrot.slane %v3416, 6
  %v3430 = vsel %vm35, %v3427, %v3429
  %v3436 = vmul.f32 %v2309, %v3422
  %v3437 = vmul.f32 %v2310, %v3424
  %v3438 = vmul.f32 %v2311, %v3426
  %v3439 = vmul.f32 %v2312, %v3428
  %v3440 = vmul.f32 %v2313, %v3430
  %v3441 = vadd.f32 %v51, %v3436
  %v3442 = vadd.f32 %v38, %v3437
  %v3443 = vadd.f32 %v55, %v3438
  %v3444 = vadd.f32 %v47, %v3439
  %v3445 = vadd.f32 %v56, %v3440
  %3446 = vst [vmem:[%s6 - $0x2] sm:$0xfc] %v3441
  %3447 = vst [vmem:[%s6 + $0x6] sm:$0xff] %v3442
  %3448 = vst [vmem:[%s6 + $0xe] sm:$0x3] %v3443
  %s3449 = scalar_lea.vmem %s6, 16
  %3450 = vst [vmem:[%s3449 - $0x6] sm:$0xc0] %v3443
  %3451 = vst [vmem:[%s3449 + $0x2] sm:$0xff] %v3444
  %3452 = vst [vmem:[%s3449 + $0xa] sm:$0x3f] %v3445
  // Predicated region
  $region26: #{rab_forward_pallas.1} parent=0 // pred_check
    _
  $region27: #{rab_forward_pallas.1} parent=0 // pred_check_branch
    %3454 = sbr.rel (0) target = $region29
  $region28: #{rab_forward_pallas.1} parent=0 // pred_region
    _
  $region29: #{rab_forward_pallas.1} parent=0 // pred_fallthru
    _
  // Predicated region
  $region30: #{rab_forward_pallas.1} parent=0 // pred_check
    _
  $region31: #{rab_forward_pallas.1} parent=0 // pred_check_branch
    %3456 = sbr.rel (0) target = $region33
  $region32: #{rab_forward_pallas.1} parent=0 // pred_region
    _
  $region33: #{rab_forward_pallas.1} parent=0 // pred_fallthru
    _

</llo_original>
